<compile_context>
chip_gen: v7x
topology: tpu7x:2x2x1
jax: 0.10.0
libtpu: 0.0.40
codegen_flags: <defaults>
</compile_context>

<pallas_src>
import jax
import jax.numpy as jnp
import numpy as np
from jax.experimental import pallas as pl
from jax.experimental.pallas import tpu as pltpu

# ----------------------------- model dims (small, synthetic) -----------------------------
BATCH     = 2
SRC_LEN   = 6
TRG_LEN   = 8          # == max_len in the train=True path
HIDDEN    = 32
EMBED     = 16         # nn.Embedding uses embed_size * 2 = 32 features
EMB_DIM   = EMBED * 2
SRC_VOCAB = 20
TGT_VOCAB = 16
N_LAYERS  = 1

H2    = 2 * HIDDEN     # packed [fwd | bwd] state width           = 64
G8    = 8 * HIDDEN     # packed gate slab width (both directions) = 256
V_PAD = 128            # lane-dense padded logits width


# ----------------------------------- Pallas kernel ----------------------------------------
def _lstm_step(xg, h, c, wh):
    """One fused bidirectional LSTM step; xg already holds x @ W_x + b  (B, 8H).

    Gate lane layout: [i_f,i_b | f_f,f_b | o_f,o_b | g_f,g_b] so sigmoid covers lanes 0:192
    and tanh only lanes 192:256, and every H2-wide slice lines up with packed [fwd|bwd] h/c.
    """
    gates = xg + jnp.dot(h, wh, preferred_element_type=jnp.float32)     # (B, 256)
    sig = jax.nn.sigmoid(gates[:, :3 * H2])
    i = sig[:, 0 * H2:1 * H2]
    f = sig[:, 1 * H2:2 * H2]
    o = sig[:, 2 * H2:3 * H2]
    g = jnp.tanh(gates[:, 3 * H2:4 * H2])
    c_new = f * c + i * g
    h_new = o * jnp.tanh(c_new)
    return h_new, c_new


def seq2seq_kernel(src_ref, trg_ref, enc_emb_ref, dec_emb_ref,
                   wx_enc_ref, wh_enc_ref, b_enc_ref,
                   wx_dec_ref, wh_dec_ref, b_dec_ref,
                   w_out_ref, b_out_ref,
                   out_ref, xe_ref, xd_ref):
    """Entire Seq2Seq forward (train=True): gathers + encoder scan + teacher-forced decoder."""
    B, T1 = BATCH, TRG_LEN - 1

    # ---- start-token row (one-hot at index 1) written straight into the output ----------
    lane = jax.lax.broadcasted_iota(jnp.int32, (B, V_PAD), 1)
    out_ref[0] = (lane == 1).astype(jnp.float32)

    # ---- in-kernel embedding gathers (token ids from SMEM, tables from VMEM) -------------
    # encoder row t*B+b = [emb[src[b, t]] | emb[src[b, S-1-t]]]  (fwd input | reversed bwd)
    for t in range(SRC_LEN):
        for b in range(B):
            r = t * B + b
            xe_ref[r:r + 1, :] = jnp.concatenate(
                [enc_emb_ref[src_ref[b, t]],
                 enc_emb_ref[src_ref[b, SRC_LEN - 1 - t]]], axis=1)
    # decoder (teacher forcing): step t consumes trg[:, t]
    for t in range(T1):
        for b in range(B):
            r = t * B + b
            xd_ref[r:r + 1, :] = dec_emb_ref[trg_ref[b, t]]

    # ---- hoisted input projections: one MXU call per phase, off the recurrent path -------
    xg_enc = (jnp.dot(xe_ref[...], wx_enc_ref[...],
                      preferred_element_type=jnp.float32) + b_enc_ref[...])   # (S*B, 256)
    xd = jnp.maximum(xd_ref[...], 0.0)                  # dropout(eval)=identity, then ReLU
    xg_dec = (jnp.dot(xd, wx_dec_ref[...],
                      preferred_element_type=jnp.float32) + b_dec_ref[...])   # (T1*B, 256)

    h = jnp.zeros((B, H2), jnp.float32)                 # packed [h_fwd | h_bwd]
    c = jnp.zeros((B, H2), jnp.float32)                 # packed [c_fwd | c_bwd]

    # ---- encoder recurrence (wh_enc live only in this phase) -----------------------------
    wh = wh_enc_ref[...]
    for t in range(SRC_LEN):
        h, c = _lstm_step(xg_enc[t * B:(t + 1) * B, :], h, c, wh)

    # ---- decoder recurrence (wh_dec live only here); h kept in vregs for batched GEMM ----
    wh = wh_dec_ref[...]
    hs = []
    for t in range(T1):
        h, c = _lstm_step(xg_dec[t * B:(t + 1) * B, :], h, c, wh)
        hs.append(h)

    # ---- single batched output projection + lane-dense stores ----------------------------
    h_all = jnp.concatenate(hs, axis=0)                                        # (T1*B, 64)
    logits = (jnp.dot(h_all, w_out_ref[...],
                      preferred_element_type=jnp.float32) + b_out_ref[...])    # (T1*B, 128)
    for t in range(T1):
        out_ref[t + 1] = logits[t * B:(t + 1) * B, :]


_SMEM = pl.BlockSpec(memory_space=pltpu.MemorySpace.SMEM)
_VMEM = pl.BlockSpec(memory_space=pltpu.MemorySpace.VMEM)


def seq2seq_pallas(src, trg, pk):
    B, T = trg.shape
    return pl.pallas_call(
        seq2seq_kernel,
        out_shape=jax.ShapeDtypeStruct((T, B, V_PAD), jnp.float32),
        in_specs=[_SMEM, _SMEM] + [_VMEM] * 10,
        out_specs=_VMEM,
        scratch_shapes=[pltpu.VMEM((SRC_LEN * B, 2 * EMB_DIM), jnp.float32),   # encoder x
                        pltpu.VMEM(((T - 1) * B, EMB_DIM), jnp.float32)],      # decoder x
    )(src, trg,
      pk["enc_emb"], pk["dec_emb"],
      pk["wx_enc"], pk["wh_enc"], pk["b_enc"],
      pk["wx_dec"], pk["wh_dec"], pk["b_dec"],
      pk["w_out"], pk["b_out"])


# --------------------------------- weight packing ------------------------------------------
def _pack_gate_cols(w_f, w_b, H):
    """PyTorch gate cols [i,f,g,o] -> packed [i_f,i_b | f_f,f_b | o_f,o_b | g_f,g_b].

    Sigmoid gates (i,f,o) land in lanes 0:6H, the tanh gate (g) in lanes 6H:8H; directions
    are interleaved inside each gate so H2-wide slices match packed [fwd|bwd] states.
    """
    cols = []
    for k in (0, 1, 3, 2):                       # i, f, o, g
        cols.append(w_f[..., k * H:(k + 1) * H])
        cols.append(w_b[..., k * H:(k + 1) * H])
    return jnp.concatenate(cols, axis=-1)


def pack_params(p):
    H, E, G = HIDDEN, EMB_DIM, 4 * HIDDEN
    zE = jnp.zeros((E, G), jnp.float32)
    zH = jnp.zeros((H, G), jnp.float32)
    # encoder: x rows are [x_fwd (E) | x_bwd (E)], h rows [h_fwd (H) | h_bwd (H)]; each
    # direction's weights only feed its own gate columns (block-diagonal).
    wx_enc = jnp.concatenate([_pack_gate_cols(p["enc_wih_f"], zE, H),
                              _pack_gate_cols(zE, p["enc_wih_b"], H)], axis=0)   # (2E, 8H)
    wh_enc = jnp.concatenate([_pack_gate_cols(p["enc_whh_f"], zH, H),
                              _pack_gate_cols(zH, p["enc_whh_b"], H)], axis=0)   # (2H, 8H)
    # decoder: the same x feeds both directions -> fold both x-blocks into one (E, 8H)
    wx_dec = _pack_gate_cols(p["dec_wih_f"], p["dec_wih_b"], H)                   # (E, 8H)
    wh_dec = jnp.concatenate([_pack_gate_cols(p["dec_whh_f"], zH, H),
                              _pack_gate_cols(zH, p["dec_whh_b"], H)], axis=0)   # (2H, 8H)
    # out_linear padded to 128 lanes for lane-dense logit math/stores
    w_out = jnp.zeros((H2, V_PAD), jnp.float32).at[:, :TGT_VOCAB].set(p["out_w_t"])
    b_out = jnp.zeros((1, V_PAD), jnp.float32).at[:, :TGT_VOCAB].set(p["out_b"])
    return {
        # (V, 1, E) so in-kernel gathers index an untiled leading dim
        "enc_emb": p["enc_emb"].reshape(SRC_VOCAB, 1, EMB_DIM),
        "dec_emb": p["dec_emb"].reshape(TGT_VOCAB, 1, EMB_DIM),
        "wx_enc": wx_enc,                                             # (64, 256)
        "wh_enc": wh_enc,                                             # (64, 256)
        "b_enc": _pack_gate_cols(p["enc_b_f"], p["enc_b_b"], H),      # (1, 256)
        "wx_dec": wx_dec,                                             # (32, 256)
        "wh_dec": wh_dec,                                             # (64, 256)
        "b_dec": _pack_gate_cols(p["dec_b_f"], p["dec_b_b"], H),      # (1, 256)
        "w_out": w_out,                                               # (64, 128)
        "b_out": b_out,                                               # (1, 128)
    }


# ------------------------------------- forward glue ----------------------------------------
@jax.jit
def seq2seq_forward(src, trg, pk):
    """Seq2Seq.forward(src, trg, train=True).  Returns (B, max_len, vocab)."""
    out_pad = seq2seq_pallas(src, trg, pk)                            # (T, B, 128)
    return jnp.transpose(out_pad, (1, 0, 2))[:, :, :TGT_VOCAB]        # (B, T, V)


# --------------------------------- parameter initialization -------------------------------
def init_params(key):
    ks = jax.random.split(key, 16)
    u = lambda k, shape, s=0.1: jax.random.uniform(k, shape, jnp.float32, -s, s)
    G = 4 * HIDDEN
    return {
        # encoder (bias = pre-summed b_ih + b_hh per direction)
        "enc_emb":   u(ks[0], (SRC_VOCAB, EMB_DIM)),
        "enc_wih_f": u(ks[1], (EMB_DIM, G)),
        "enc_whh_f": u(ks[2], (HIDDEN, G)),
        "enc_b_f":   u(ks[3], (1, G)),
        "enc_wih_b": u(ks[4], (EMB_DIM, G)),
        "enc_whh_b": u(ks[5], (HIDDEN, G)),
        "enc_b_b":   u(ks[6], (1, G)),
        # decoder (nn.Embedding(vocab, embed*2, padding_idx=0) -> row 0 zeroed)
        "dec_emb":   u(ks[7], (TGT_VOCAB, EMB_DIM)).at[0].set(0.0),
        "dec_wih_f": u(ks[8], (EMB_DIM, G)),
        "dec_whh_f": u(ks[9], (HIDDEN, G)),
        "dec_b_f":   u(ks[10], (1, G)),
        "dec_wih_b": u(ks[11], (EMB_DIM, G)),
        "dec_whh_b": u(ks[12], (HIDDEN, G)),
        "dec_b_b":   u(ks[13], (1, G)),
        # out_linear: Linear(2H, vocab), stored transposed
        "out_w_t":   u(ks[14], (2 * HIDDEN, TGT_VOCAB)),
        "out_b":     u(ks[15], (1, TGT_VOCAB)),
    }


# --------------------------------- pure-JAX reference (check) -----------------------------
def _ref_lstm_cell(x, h, c, wih, whh, b):
    g = x @ wih + h @ whh + b
    H = h.shape[-1]
    i, f = jax.nn.sigmoid(g[:, :H]), jax.nn.sigmoid(g[:, H:2 * H])
    gg, o = jnp.tanh(g[:, 2 * H:3 * H]), jax.nn.sigmoid(g[:, 3 * H:])
    c_new = f * c + i * gg
    return o * jnp.tanh(c_new), c_new


def ref_seq2seq(src, trg, p):
    B, S = src.shape
    T = trg.shape[1]
    emb = p["enc_emb"][src]
    zs = jnp.zeros((B, HIDDEN), jnp.float32)
    h_f, c_f, h_b, c_b = zs, zs, zs, zs
    for t in range(S):
        h_f, c_f = _ref_lstm_cell(emb[:, t], h_f, c_f, p["enc_wih_f"], p["enc_whh_f"], p["enc_b_f"])
    for t in reversed(range(S)):
        h_b, c_b = _ref_lstm_cell(emb[:, t], h_b, c_b, p["enc_wih_b"], p["enc_whh_b"], p["enc_b_b"])

    outs = [jnp.zeros((B, TGT_VOCAB), jnp.float32).at[:, 1].set(1.0)]
    tok = trg[:, 0]
    for t in range(1, T):
        x = jnp.maximum(p["dec_emb"][tok], 0.0)
        h_f, c_f = _ref_lstm_cell(x, h_f, c_f, p["dec_wih_f"], p["dec_whh_f"], p["dec_b_f"])
        h_b, c_b = _ref_lstm_cell(x, h_b, c_b, p["dec_wih_b"], p["dec_whh_b"], p["dec_b_b"])
        outs.append(jnp.concatenate([h_f, h_b], -1) @ p["out_w_t"] + p["out_b"])
        tok = trg[:, t]
    return jnp.stack(outs, axis=1)


# ------------------------------------------ main -------------------------------------------
if __name__ == "__main__":
    key = jax.random.PRNGKey(0)
    kp, ks, kt = jax.random.split(key, 3)
    params = init_params(kp)
    packed = pack_params(params)

    src = jax.random.randint(ks, (BATCH, SRC_LEN), 1, SRC_VOCAB, dtype=jnp.int32)
    trg = jax.random.randint(kt, (BATCH, TRG_LEN), 1, TGT_VOCAB, dtype=jnp.int32)

    out = seq2seq_forward(src, trg, packed)
    out = jax.block_until_ready(out)

    assert out.shape == (BATCH, TRG_LEN, TGT_VOCAB), out.shape
    assert bool(jnp.all(jnp.isfinite(out)))

    # check the single fused kernel against a plain-JAX (unfused, per-direction) reference
    want = ref_seq2seq(src, trg, params)
    np.testing.assert_allclose(np.asarray(out), np.asarray(want), rtol=1e-4, atol=1e-4)

    print("KERNEL_OK")
</pallas_src>

<mosaic_0001>
module attributes {stable_mosaic.version = 11 : i64} {
  func.func @seq2seq_kernel(%arg0: memref<2x6xi32, #tpu.memory_space<smem>>, %arg1: memref<2x8xi32, #tpu.memory_space<smem>>, %arg2: memref<20x1x32xf32, #tpu.memory_space<vmem>>, %arg3: memref<16x1x32xf32, #tpu.memory_space<vmem>>, %arg4: memref<64x256xf32, #tpu.memory_space<vmem>>, %arg5: memref<64x256xf32, #tpu.memory_space<vmem>>, %arg6: memref<1x256xf32, #tpu.memory_space<vmem>>, %arg7: memref<32x256xf32, #tpu.memory_space<vmem>>, %arg8: memref<64x256xf32, #tpu.memory_space<vmem>>, %arg9: memref<1x256xf32, #tpu.memory_space<vmem>>, %arg10: memref<64x128xf32, #tpu.memory_space<vmem>>, %arg11: memref<1x128xf32, #tpu.memory_space<vmem>>, %arg12: memref<8x2x128xf32, #tpu.memory_space<vmem>>, %arg13: memref<12x64xf32, #tpu.memory_space<vmem>>, %arg14: memref<14x32xf32, #tpu.memory_space<vmem>>) attributes {dimension_semantics = [], scalar_prefetch = 0 : i64, scratch_operands = 2 : i64, tpu.core_type = #tpu.core_type<tc>} {
    %0 = tpu.iota {dimensions = array<i32: 1>} : vector<2x128xi32>
    %c1_i32 = arith.constant 1 : i32
    %1 = vector.broadcast %c1_i32 : i32 to vector<2x128xi32>
    %2 = arith.cmpi eq, %0, %1 : vector<2x128xi32>
    %3 = arith.extui %2 : vector<2x128xi1> to vector<2x128xi32>
    %4 = arith.sitofp %3 : vector<2x128xi32> to vector<2x128xf32>
    %c0 = arith.constant 0 : index
    %c0_0 = arith.constant 0 : index
    %c0_1 = arith.constant 0 : index
    %5 = vector.load %arg12[%c0, %c0_0, %c0_1] : memref<8x2x128xf32, #tpu.memory_space<vmem>>, vector<1x2x128xf32>
    %6 = vector.shape_cast %5 : vector<1x2x128xf32> to vector<2x128xf32>
    %7 = vector.shape_cast %4 : vector<2x128xf32> to vector<1x2x128xf32>
    tpu.vector_store %arg12[%c0, %c0_0, %c0_1], %7 {strides = array<i32>} : memref<8x2x128xf32, #tpu.memory_space<vmem>>, vector<1x2x128xf32>,
    %c0_2 = arith.constant 0 : index
    %c0_3 = arith.constant 0 : index
    %8 = memref.load %arg0[%c0_2, %c0_3] : memref<2x6xi32, #tpu.memory_space<smem>>
    %9 = arith.index_cast %8 : i32 to index
    %c0_4 = arith.constant 0 : index
    %c0_5 = arith.constant 0 : index
    %10 = vector.load %arg2[%9, %c0_4, %c0_5] : memref<20x1x32xf32, #tpu.memory_space<vmem>>, vector<1x1x32xf32>
    %11 = vector.shape_cast %10 : vector<1x1x32xf32> to vector<1x32xf32>
    %c0_6 = arith.constant 0 : index
    %c5 = arith.constant 5 : index
    %12 = memref.load %arg0[%c0_6, %c5] : memref<2x6xi32, #tpu.memory_space<smem>>
    %13 = arith.index_cast %12 : i32 to index
    %c0_7 = arith.constant 0 : index
    %c0_8 = arith.constant 0 : index
    %14 = vector.load %arg2[%13, %c0_7, %c0_8] : memref<20x1x32xf32, #tpu.memory_space<vmem>>, vector<1x1x32xf32>
    %15 = vector.shape_cast %14 : vector<1x1x32xf32> to vector<1x32xf32>
    %16 = tpu.concatenate %11, %15 in 1 : vector<1x32xf32>, vector<1x32xf32> -> vector<1x64xf32>
    %c0_9 = arith.constant 0 : index
    %c0_10 = arith.constant 0 : index
    %17 = vector.load %arg13[%c0_9, %c0_10] : memref<12x64xf32, #tpu.memory_space<vmem>>, vector<1x64xf32>
    tpu.vector_store %arg13[%c0_9, %c0_10], %16 {strides = array<i32>} : memref<12x64xf32, #tpu.memory_space<vmem>>, vector<1x64xf32>,
    %c1 = arith.constant 1 : index
    %c0_11 = arith.constant 0 : index
    %18 = memref.load %arg0[%c1, %c0_11] : memref<2x6xi32, #tpu.memory_space<smem>>
    %19 = arith.index_cast %18 : i32 to index
    %c0_12 = arith.constant 0 : index
    %c0_13 = arith.constant 0 : index
    %20 = vector.load %arg2[%19, %c0_12, %c0_13] : memref<20x1x32xf32, #tpu.memory_space<vmem>>, vector<1x1x32xf32>
    %21 = vector.shape_cast %20 : vector<1x1x32xf32> to vector<1x32xf32>
    %c1_14 = arith.constant 1 : index
    %c5_15 = arith.constant 5 : index
    %22 = memref.load %arg0[%c1_14, %c5_15] : memref<2x6xi32, #tpu.memory_space<smem>>
    %23 = arith.index_cast %22 : i32 to index
    %c0_16 = arith.constant 0 : index
    %c0_17 = arith.constant 0 : index
    %24 = vector.load %arg2[%23, %c0_16, %c0_17] : memref<20x1x32xf32, #tpu.memory_space<vmem>>, vector<1x1x32xf32>
    %25 = vector.shape_cast %24 : vector<1x1x32xf32> to vector<1x32xf32>
    %26 = tpu.concatenate %21, %25 in 1 : vector<1x32xf32>, vector<1x32xf32> -> vector<1x64xf32>
    %c1_18 = arith.constant 1 : index
    %c0_19 = arith.constant 0 : index
    %27 = vector.load %arg13[%c1_18, %c0_19] : memref<12x64xf32, #tpu.memory_space<vmem>>, vector<1x64xf32>
    tpu.vector_store %arg13[%c1_18, %c0_19], %26 {strides = array<i32>} : memref<12x64xf32, #tpu.memory_space<vmem>>, vector<1x64xf32>,
    %c0_20 = arith.constant 0 : index
    %c1_21 = arith.constant 1 : index
    %28 = memref.load %arg0[%c0_20, %c1_21] : memref<2x6xi32, #tpu.memory_space<smem>>
    %29 = arith.index_cast %28 : i32 to index
    %c0_22 = arith.constant 0 : index
    %c0_23 = arith.constant 0 : index
    %30 = vector.load %arg2[%29, %c0_22, %c0_23] : memref<20x1x32xf32, #tpu.memory_space<vmem>>, vector<1x1x32xf32>
    %31 = vector.shape_cast %30 : vector<1x1x32xf32> to vector<1x32xf32>
    %c0_24 = arith.constant 0 : index
    %c4 = arith.constant 4 : index
    %32 = memref.load %arg0[%c0_24, %c4] : memref<2x6xi32, #tpu.memory_space<smem>>
    %33 = arith.index_cast %32 : i32 to index
    %c0_25 = arith.constant 0 : index
    %c0_26 = arith.constant 0 : index
    %34 = vector.load %arg2[%33, %c0_25, %c0_26] : memref<20x1x32xf32, #tpu.memory_space<vmem>>, vector<1x1x32xf32>
    %35 = vector.shape_cast %34 : vector<1x1x32xf32> to vector<1x32xf32>
    %36 = tpu.concatenate %31, %35 in 1 : vector<1x32xf32>, vector<1x32xf32> -> vector<1x64xf32>
    %c2 = arith.constant 2 : index
    %c0_27 = arith.constant 0 : index
    %37 = vector.load %arg13[%c2, %c0_27] : memref<12x64xf32, #tpu.memory_space<vmem>>, vector<1x64xf32>
    tpu.vector_store %arg13[%c2, %c0_27], %36 {strides = array<i32>} : memref<12x64xf32, #tpu.memory_space<vmem>>, vector<1x64xf32>,
    %c1_28 = arith.constant 1 : index
    %c1_29 = arith.constant 1 : index
    %38 = memref.load %arg0[%c1_28, %c1_29] : memref<2x6xi32, #tpu.memory_space<smem>>
    %39 = arith.index_cast %38 : i32 to index
    %c0_30 = arith.constant 0 : index
    %c0_31 = arith.constant 0 : index
    %40 = vector.load %arg2[%39, %c0_30, %c0_31] : memref<20x1x32xf32, #tpu.memory_space<vmem>>, vector<1x1x32xf32>
    %41 = vector.shape_cast %40 : vector<1x1x32xf32> to vector<1x32xf32>
    %c1_32 = arith.constant 1 : index
    %c4_33 = arith.constant 4 : index
    %42 = memref.load %arg0[%c1_32, %c4_33] : memref<2x6xi32, #tpu.memory_space<smem>>
    %43 = arith.index_cast %42 : i32 to index
    %c0_34 = arith.constant 0 : index
    %c0_35 = arith.constant 0 : index
    %44 = vector.load %arg2[%43, %c0_34, %c0_35] : memref<20x1x32xf32, #tpu.memory_space<vmem>>, vector<1x1x32xf32>
    %45 = vector.shape_cast %44 : vector<1x1x32xf32> to vector<1x32xf32>
    %46 = tpu.concatenate %41, %45 in 1 : vector<1x32xf32>, vector<1x32xf32> -> vector<1x64xf32>
    %c3 = arith.constant 3 : index
    %c0_36 = arith.constant 0 : index
    %47 = vector.load %arg13[%c3, %c0_36] : memref<12x64xf32, #tpu.memory_space<vmem>>, vector<1x64xf32>
    tpu.vector_store %arg13[%c3, %c0_36], %46 {strides = array<i32>} : memref<12x64xf32, #tpu.memory_space<vmem>>, vector<1x64xf32>,
    %c0_37 = arith.constant 0 : index
    %c2_38 = arith.constant 2 : index
    %48 = memref.load %arg0[%c0_37, %c2_38] : memref<2x6xi32, #tpu.memory_space<smem>>
    %49 = arith.index_cast %48 : i32 to index
    %c0_39 = arith.constant 0 : index
    %c0_40 = arith.constant 0 : index
    %50 = vector.load %arg2[%49, %c0_39, %c0_40] : memref<20x1x32xf32, #tpu.memory_space<vmem>>, vector<1x1x32xf32>
    %51 = vector.shape_cast %50 : vector<1x1x32xf32> to vector<1x32xf32>
    %c0_41 = arith.constant 0 : index
    %c3_42 = arith.constant 3 : index
    %52 = memref.load %arg0[%c0_41, %c3_42] : memref<2x6xi32, #tpu.memory_space<smem>>
    %53 = arith.index_cast %52 : i32 to index
    %c0_43 = arith.constant 0 : index
    %c0_44 = arith.constant 0 : index
    %54 = vector.load %arg2[%53, %c0_43, %c0_44] : memref<20x1x32xf32, #tpu.memory_space<vmem>>, vector<1x1x32xf32>
    %55 = vector.shape_cast %54 : vector<1x1x32xf32> to vector<1x32xf32>
    %56 = tpu.concatenate %51, %55 in 1 : vector<1x32xf32>, vector<1x32xf32> -> vector<1x64xf32>
    %c4_45 = arith.constant 4 : index
    %c0_46 = arith.constant 0 : index
    %57 = vector.load %arg13[%c4_45, %c0_46] : memref<12x64xf32, #tpu.memory_space<vmem>>, vector<1x64xf32>
    tpu.vector_store %arg13[%c4_45, %c0_46], %56 {strides = array<i32>} : memref<12x64xf32, #tpu.memory_space<vmem>>, vector<1x64xf32>,
    %c1_47 = arith.constant 1 : index
    %c2_48 = arith.constant 2 : index
    %58 = memref.load %arg0[%c1_47, %c2_48] : memref<2x6xi32, #tpu.memory_space<smem>>
    %59 = arith.index_cast %58 : i32 to index
    %c0_49 = arith.constant 0 : index
    %c0_50 = arith.constant 0 : index
    %60 = vector.load %arg2[%59, %c0_49, %c0_50] : memref<20x1x32xf32, #tpu.memory_space<vmem>>, vector<1x1x32xf32>
    %61 = vector.shape_cast %60 : vector<1x1x32xf32> to vector<1x32xf32>
    %c1_51 = arith.constant 1 : index
    %c3_52 = arith.constant 3 : index
    %62 = memref.load %arg0[%c1_51, %c3_52] : memref<2x6xi32, #tpu.memory_space<smem>>
    %63 = arith.index_cast %62 : i32 to index
    %c0_53 = arith.constant 0 : index
    %c0_54 = arith.constant 0 : index
    %64 = vector.load %arg2[%63, %c0_53, %c0_54] : memref<20x1x32xf32, #tpu.memory_space<vmem>>, vector<1x1x32xf32>
    %65 = vector.shape_cast %64 : vector<1x1x32xf32> to vector<1x32xf32>
    %66 = tpu.concatenate %61, %65 in 1 : vector<1x32xf32>, vector<1x32xf32> -> vector<1x64xf32>
    %c5_55 = arith.constant 5 : index
    %c0_56 = arith.constant 0 : index
    %67 = vector.load %arg13[%c5_55, %c0_56] : memref<12x64xf32, #tpu.memory_space<vmem>>, vector<1x64xf32>
    tpu.vector_store %arg13[%c5_55, %c0_56], %66 {strides = array<i32>} : memref<12x64xf32, #tpu.memory_space<vmem>>, vector<1x64xf32>,
    %c0_57 = arith.constant 0 : index
    %c3_58 = arith.constant 3 : index
    %68 = memref.load %arg0[%c0_57, %c3_58] : memref<2x6xi32, #tpu.memory_space<smem>>
    %69 = arith.index_cast %68 : i32 to index
    %c0_59 = arith.constant 0 : index
    %c0_60 = arith.constant 0 : index
    %70 = vector.load %arg2[%69, %c0_59, %c0_60] : memref<20x1x32xf32, #tpu.memory_space<vmem>>, vector<1x1x32xf32>
    %71 = vector.shape_cast %70 : vector<1x1x32xf32> to vector<1x32xf32>
    %c0_61 = arith.constant 0 : index
    %c2_62 = arith.constant 2 : index
    %72 = memref.load %arg0[%c0_61, %c2_62] : memref<2x6xi32, #tpu.memory_space<smem>>
    %73 = arith.index_cast %72 : i32 to index
    %c0_63 = arith.constant 0 : index
    %c0_64 = arith.constant 0 : index
    %74 = vector.load %arg2[%73, %c0_63, %c0_64] : memref<20x1x32xf32, #tpu.memory_space<vmem>>, vector<1x1x32xf32>
    %75 = vector.shape_cast %74 : vector<1x1x32xf32> to vector<1x32xf32>
    %76 = tpu.concatenate %71, %75 in 1 : vector<1x32xf32>, vector<1x32xf32> -> vector<1x64xf32>
    %c6 = arith.constant 6 : index
    %c0_65 = arith.constant 0 : index
    %77 = vector.load %arg13[%c6, %c0_65] : memref<12x64xf32, #tpu.memory_space<vmem>>, vector<1x64xf32>
    tpu.vector_store %arg13[%c6, %c0_65], %76 {strides = array<i32>} : memref<12x64xf32, #tpu.memory_space<vmem>>, vector<1x64xf32>,
    %c1_66 = arith.constant 1 : index
    %c3_67 = arith.constant 3 : index
    %78 = memref.load %arg0[%c1_66, %c3_67] : memref<2x6xi32, #tpu.memory_space<smem>>
    %79 = arith.index_cast %78 : i32 to index
    %c0_68 = arith.constant 0 : index
    %c0_69 = arith.constant 0 : index
    %80 = vector.load %arg2[%79, %c0_68, %c0_69] : memref<20x1x32xf32, #tpu.memory_space<vmem>>, vector<1x1x32xf32>
    %81 = vector.shape_cast %80 : vector<1x1x32xf32> to vector<1x32xf32>
    %c1_70 = arith.constant 1 : index
    %c2_71 = arith.constant 2 : index
    %82 = memref.load %arg0[%c1_70, %c2_71] : memref<2x6xi32, #tpu.memory_space<smem>>
    %83 = arith.index_cast %82 : i32 to index
    %c0_72 = arith.constant 0 : index
    %c0_73 = arith.constant 0 : index
    %84 = vector.load %arg2[%83, %c0_72, %c0_73] : memref<20x1x32xf32, #tpu.memory_space<vmem>>, vector<1x1x32xf32>
    %85 = vector.shape_cast %84 : vector<1x1x32xf32> to vector<1x32xf32>
    %86 = tpu.concatenate %81, %85 in 1 : vector<1x32xf32>, vector<1x32xf32> -> vector<1x64xf32>
    %c7 = arith.constant 7 : index
    %c0_74 = arith.constant 0 : index
    %87 = vector.load %arg13[%c7, %c0_74] : memref<12x64xf32, #tpu.memory_space<vmem>>, vector<1x64xf32>
    tpu.vector_store %arg13[%c7, %c0_74], %86 {strides = array<i32>} : memref<12x64xf32, #tpu.memory_space<vmem>>, vector<1x64xf32>,
    %c0_75 = arith.constant 0 : index
    %c4_76 = arith.constant 4 : index
    %88 = memref.load %arg0[%c0_75, %c4_76] : memref<2x6xi32, #tpu.memory_space<smem>>
    %89 = arith.index_cast %88 : i32 to index
    %c0_77 = arith.constant 0 : index
    %c0_78 = arith.constant 0 : index
    %90 = vector.load %arg2[%89, %c0_77, %c0_78] : memref<20x1x32xf32, #tpu.memory_space<vmem>>, vector<1x1x32xf32>
    %91 = vector.shape_cast %90 : vector<1x1x32xf32> to vector<1x32xf32>
    %c0_79 = arith.constant 0 : index
    %c1_80 = arith.constant 1 : index
    %92 = memref.load %arg0[%c0_79, %c1_80] : memref<2x6xi32, #tpu.memory_space<smem>>
    %93 = arith.index_cast %92 : i32 to index
    %c0_81 = arith.constant 0 : index
    %c0_82 = arith.constant 0 : index
    %94 = vector.load %arg2[%93, %c0_81, %c0_82] : memref<20x1x32xf32, #tpu.memory_space<vmem>>, vector<1x1x32xf32>
    %95 = vector.shape_cast %94 : vector<1x1x32xf32> to vector<1x32xf32>
    %96 = tpu.concatenate %91, %95 in 1 : vector<1x32xf32>, vector<1x32xf32> -> vector<1x64xf32>
    %c8 = arith.constant 8 : index
    %c0_83 = arith.constant 0 : index
    %97 = vector.load %arg13[%c8, %c0_83] : memref<12x64xf32, #tpu.memory_space<vmem>>, vector<1x64xf32>
    tpu.vector_store %arg13[%c8, %c0_83], %96 {strides = array<i32>} : memref<12x64xf32, #tpu.memory_space<vmem>>, vector<1x64xf32>,
    %c1_84 = arith.constant 1 : index
    %c4_85 = arith.constant 4 : index
    %98 = memref.load %arg0[%c1_84, %c4_85] : memref<2x6xi32, #tpu.memory_space<smem>>
    %99 = arith.index_cast %98 : i32 to index
    %c0_86 = arith.constant 0 : index
    %c0_87 = arith.constant 0 : index
    %100 = vector.load %arg2[%99, %c0_86, %c0_87] : memref<20x1x32xf32, #tpu.memory_space<vmem>>, vector<1x1x32xf32>
    %101 = vector.shape_cast %100 : vector<1x1x32xf32> to vector<1x32xf32>
    %c1_88 = arith.constant 1 : index
    %c1_89 = arith.constant 1 : index
    %102 = memref.load %arg0[%c1_88, %c1_89] : memref<2x6xi32, #tpu.memory_space<smem>>
    %103 = arith.index_cast %102 : i32 to index
    %c0_90 = arith.constant 0 : index
    %c0_91 = arith.constant 0 : index
    %104 = vector.load %arg2[%103, %c0_90, %c0_91] : memref<20x1x32xf32, #tpu.memory_space<vmem>>, vector<1x1x32xf32>
    %105 = vector.shape_cast %104 : vector<1x1x32xf32> to vector<1x32xf32>
    %106 = tpu.concatenate %101, %105 in 1 : vector<1x32xf32>, vector<1x32xf32> -> vector<1x64xf32>
    %c9 = arith.constant 9 : index
    %c0_92 = arith.constant 0 : index
    %107 = vector.load %arg13[%c9, %c0_92] : memref<12x64xf32, #tpu.memory_space<vmem>>, vector<1x64xf32>
    tpu.vector_store %arg13[%c9, %c0_92], %106 {strides = array<i32>} : memref<12x64xf32, #tpu.memory_space<vmem>>, vector<1x64xf32>,
    %c0_93 = arith.constant 0 : index
    %c5_94 = arith.constant 5 : index
    %108 = memref.load %arg0[%c0_93, %c5_94] : memref<2x6xi32, #tpu.memory_space<smem>>
    %109 = arith.index_cast %108 : i32 to index
    %c0_95 = arith.constant 0 : index
    %c0_96 = arith.constant 0 : index
    %110 = vector.load %arg2[%109, %c0_95, %c0_96] : memref<20x1x32xf32, #tpu.memory_space<vmem>>, vector<1x1x32xf32>
    %111 = vector.shape_cast %110 : vector<1x1x32xf32> to vector<1x32xf32>
    %c0_97 = arith.constant 0 : index
    %c0_98 = arith.constant 0 : index
    %112 = memref.load %arg0[%c0_97, %c0_98] : memref<2x6xi32, #tpu.memory_space<smem>>
    %113 = arith.index_cast %112 : i32 to index
    %c0_99 = arith.constant 0 : index
    %c0_100 = arith.constant 0 : index
    %114 = vector.load %arg2[%113, %c0_99, %c0_100] : memref<20x1x32xf32, #tpu.memory_space<vmem>>, vector<1x1x32xf32>
    %115 = vector.shape_cast %114 : vector<1x1x32xf32> to vector<1x32xf32>
    %116 = tpu.concatenate %111, %115 in 1 : vector<1x32xf32>, vector<1x32xf32> -> vector<1x64xf32>
    %c10 = arith.constant 10 : index
    %c0_101 = arith.constant 0 : index
    %117 = vector.load %arg13[%c10, %c0_101] : memref<12x64xf32, #tpu.memory_space<vmem>>, vector<1x64xf32>
    tpu.vector_store %arg13[%c10, %c0_101], %116 {strides = array<i32>} : memref<12x64xf32, #tpu.memory_space<vmem>>, vector<1x64xf32>,
    %c1_102 = arith.constant 1 : index
    %c5_103 = arith.constant 5 : index
    %118 = memref.load %arg0[%c1_102, %c5_103] : memref<2x6xi32, #tpu.memory_space<smem>>
    %119 = arith.index_cast %118 : i32 to index
    %c0_104 = arith.constant 0 : index
    %c0_105 = arith.constant 0 : index
    %120 = vector.load %arg2[%119, %c0_104, %c0_105] : memref<20x1x32xf32, #tpu.memory_space<vmem>>, vector<1x1x32xf32>
    %121 = vector.shape_cast %120 : vector<1x1x32xf32> to vector<1x32xf32>
    %c1_106 = arith.constant 1 : index
    %c0_107 = arith.constant 0 : index
    %122 = memref.load %arg0[%c1_106, %c0_107] : memref<2x6xi32, #tpu.memory_space<smem>>
    %123 = arith.index_cast %122 : i32 to index
    %c0_108 = arith.constant 0 : index
    %c0_109 = arith.constant 0 : index
    %124 = vector.load %arg2[%123, %c0_108, %c0_109] : memref<20x1x32xf32, #tpu.memory_space<vmem>>, vector<1x1x32xf32>
    %125 = vector.shape_cast %124 : vector<1x1x32xf32> to vector<1x32xf32>
    %126 = tpu.concatenate %121, %125 in 1 : vector<1x32xf32>, vector<1x32xf32> -> vector<1x64xf32>
    %c11 = arith.constant 11 : index
    %c0_110 = arith.constant 0 : index
    %127 = vector.load %arg13[%c11, %c0_110] : memref<12x64xf32, #tpu.memory_space<vmem>>, vector<1x64xf32>
    tpu.vector_store %arg13[%c11, %c0_110], %126 {strides = array<i32>} : memref<12x64xf32, #tpu.memory_space<vmem>>, vector<1x64xf32>,
    %c0_111 = arith.constant 0 : index
    %c0_112 = arith.constant 0 : index
    %128 = memref.load %arg1[%c0_111, %c0_112] : memref<2x8xi32, #tpu.memory_space<smem>>
    %129 = arith.index_cast %128 : i32 to index
    %c0_113 = arith.constant 0 : index
    %c0_114 = arith.constant 0 : index
    %130 = vector.load %arg3[%129, %c0_113, %c0_114] : memref<16x1x32xf32, #tpu.memory_space<vmem>>, vector<1x1x32xf32>
    %131 = vector.shape_cast %130 : vector<1x1x32xf32> to vector<1x32xf32>
    %c0_115 = arith.constant 0 : index
    %c0_116 = arith.constant 0 : index
    %132 = vector.load %arg14[%c0_115, %c0_116] : memref<14x32xf32, #tpu.memory_space<vmem>>, vector<1x32xf32>
    tpu.vector_store %arg14[%c0_115, %c0_116], %131 {strides = array<i32>} : memref<14x32xf32, #tpu.memory_space<vmem>>, vector<1x32xf32>,
    %c1_117 = arith.constant 1 : index
    %c0_118 = arith.constant 0 : index
    %133 = memref.load %arg1[%c1_117, %c0_118] : memref<2x8xi32, #tpu.memory_space<smem>>
    %134 = arith.index_cast %133 : i32 to index
    %c0_119 = arith.constant 0 : index
    %c0_120 = arith.constant 0 : index
    %135 = vector.load %arg3[%134, %c0_119, %c0_120] : memref<16x1x32xf32, #tpu.memory_space<vmem>>, vector<1x1x32xf32>
    %136 = vector.shape_cast %135 : vector<1x1x32xf32> to vector<1x32xf32>
    %c1_121 = arith.constant 1 : index
    %c0_122 = arith.constant 0 : index
    %137 = vector.load %arg14[%c1_121, %c0_122] : memref<14x32xf32, #tpu.memory_space<vmem>>, vector<1x32xf32>
    tpu.vector_store %arg14[%c1_121, %c0_122], %136 {strides = array<i32>} : memref<14x32xf32, #tpu.memory_space<vmem>>, vector<1x32xf32>,
    %c0_123 = arith.constant 0 : index
    %c1_124 = arith.constant 1 : index
    %138 = memref.load %arg1[%c0_123, %c1_124] : memref<2x8xi32, #tpu.memory_space<smem>>
    %139 = arith.index_cast %138 : i32 to index
    %c0_125 = arith.constant 0 : index
    %c0_126 = arith.constant 0 : index
    %140 = vector.load %arg3[%139, %c0_125, %c0_126] : memref<16x1x32xf32, #tpu.memory_space<vmem>>, vector<1x1x32xf32>
    %141 = vector.shape_cast %140 : vector<1x1x32xf32> to vector<1x32xf32>
    %c2_127 = arith.constant 2 : index
    %c0_128 = arith.constant 0 : index
    %142 = vector.load %arg14[%c2_127, %c0_128] : memref<14x32xf32, #tpu.memory_space<vmem>>, vector<1x32xf32>
    tpu.vector_store %arg14[%c2_127, %c0_128], %141 {strides = array<i32>} : memref<14x32xf32, #tpu.memory_space<vmem>>, vector<1x32xf32>,
    %c1_129 = arith.constant 1 : index
    %c1_130 = arith.constant 1 : index
    %143 = memref.load %arg1[%c1_129, %c1_130] : memref<2x8xi32, #tpu.memory_space<smem>>
    %144 = arith.index_cast %143 : i32 to index
    %c0_131 = arith.constant 0 : index
    %c0_132 = arith.constant 0 : index
    %145 = vector.load %arg3[%144, %c0_131, %c0_132] : memref<16x1x32xf32, #tpu.memory_space<vmem>>, vector<1x1x32xf32>
    %146 = vector.shape_cast %145 : vector<1x1x32xf32> to vector<1x32xf32>
    %c3_133 = arith.constant 3 : index
    %c0_134 = arith.constant 0 : index
    %147 = vector.load %arg14[%c3_133, %c0_134] : memref<14x32xf32, #tpu.memory_space<vmem>>, vector<1x32xf32>
    tpu.vector_store %arg14[%c3_133, %c0_134], %146 {strides = array<i32>} : memref<14x32xf32, #tpu.memory_space<vmem>>, vector<1x32xf32>,
    %c0_135 = arith.constant 0 : index
    %c2_136 = arith.constant 2 : index
    %148 = memref.load %arg1[%c0_135, %c2_136] : memref<2x8xi32, #tpu.memory_space<smem>>
    %149 = arith.index_cast %148 : i32 to index
    %c0_137 = arith.constant 0 : index
    %c0_138 = arith.constant 0 : index
    %150 = vector.load %arg3[%149, %c0_137, %c0_138] : memref<16x1x32xf32, #tpu.memory_space<vmem>>, vector<1x1x32xf32>
    %151 = vector.shape_cast %150 : vector<1x1x32xf32> to vector<1x32xf32>
    %c4_139 = arith.constant 4 : index
    %c0_140 = arith.constant 0 : index
    %152 = vector.load %arg14[%c4_139, %c0_140] : memref<14x32xf32, #tpu.memory_space<vmem>>, vector<1x32xf32>
    tpu.vector_store %arg14[%c4_139, %c0_140], %151 {strides = array<i32>} : memref<14x32xf32, #tpu.memory_space<vmem>>, vector<1x32xf32>,
    %c1_141 = arith.constant 1 : index
    %c2_142 = arith.constant 2 : index
    %153 = memref.load %arg1[%c1_141, %c2_142] : memref<2x8xi32, #tpu.memory_space<smem>>
    %154 = arith.index_cast %153 : i32 to index
    %c0_143 = arith.constant 0 : index
    %c0_144 = arith.constant 0 : index
    %155 = vector.load %arg3[%154, %c0_143, %c0_144] : memref<16x1x32xf32, #tpu.memory_space<vmem>>, vector<1x1x32xf32>
    %156 = vector.shape_cast %155 : vector<1x1x32xf32> to vector<1x32xf32>
    %c5_145 = arith.constant 5 : index
    %c0_146 = arith.constant 0 : index
    %157 = vector.load %arg14[%c5_145, %c0_146] : memref<14x32xf32, #tpu.memory_space<vmem>>, vector<1x32xf32>
    tpu.vector_store %arg14[%c5_145, %c0_146], %156 {strides = array<i32>} : memref<14x32xf32, #tpu.memory_space<vmem>>, vector<1x32xf32>,
    %c0_147 = arith.constant 0 : index
    %c3_148 = arith.constant 3 : index
    %158 = memref.load %arg1[%c0_147, %c3_148] : memref<2x8xi32, #tpu.memory_space<smem>>
    %159 = arith.index_cast %158 : i32 to index
    %c0_149 = arith.constant 0 : index
    %c0_150 = arith.constant 0 : index
    %160 = vector.load %arg3[%159, %c0_149, %c0_150] : memref<16x1x32xf32, #tpu.memory_space<vmem>>, vector<1x1x32xf32>
    %161 = vector.shape_cast %160 : vector<1x1x32xf32> to vector<1x32xf32>
    %c6_151 = arith.constant 6 : index
    %c0_152 = arith.constant 0 : index
    %162 = vector.load %arg14[%c6_151, %c0_152] : memref<14x32xf32, #tpu.memory_space<vmem>>, vector<1x32xf32>
    tpu.vector_store %arg14[%c6_151, %c0_152], %161 {strides = array<i32>} : memref<14x32xf32, #tpu.memory_space<vmem>>, vector<1x32xf32>,
    %c1_153 = arith.constant 1 : index
    %c3_154 = arith.constant 3 : index
    %163 = memref.load %arg1[%c1_153, %c3_154] : memref<2x8xi32, #tpu.memory_space<smem>>
    %164 = arith.index_cast %163 : i32 to index
    %c0_155 = arith.constant 0 : index
    %c0_156 = arith.constant 0 : index
    %165 = vector.load %arg3[%164, %c0_155, %c0_156] : memref<16x1x32xf32, #tpu.memory_space<vmem>>, vector<1x1x32xf32>
    %166 = vector.shape_cast %165 : vector<1x1x32xf32> to vector<1x32xf32>
    %c7_157 = arith.constant 7 : index
    %c0_158 = arith.constant 0 : index
    %167 = vector.load %arg14[%c7_157, %c0_158] : memref<14x32xf32, #tpu.memory_space<vmem>>, vector<1x32xf32>
    tpu.vector_store %arg14[%c7_157, %c0_158], %166 {strides = array<i32>} : memref<14x32xf32, #tpu.memory_space<vmem>>, vector<1x32xf32>,
    %c0_159 = arith.constant 0 : index
    %c4_160 = arith.constant 4 : index
    %168 = memref.load %arg1[%c0_159, %c4_160] : memref<2x8xi32, #tpu.memory_space<smem>>
    %169 = arith.index_cast %168 : i32 to index
    %c0_161 = arith.constant 0 : index
    %c0_162 = arith.constant 0 : index
    %170 = vector.load %arg3[%169, %c0_161, %c0_162] : memref<16x1x32xf32, #tpu.memory_space<vmem>>, vector<1x1x32xf32>
    %171 = vector.shape_cast %170 : vector<1x1x32xf32> to vector<1x32xf32>
    %c8_163 = arith.constant 8 : index
    %c0_164 = arith.constant 0 : index
    %172 = vector.load %arg14[%c8_163, %c0_164] : memref<14x32xf32, #tpu.memory_space<vmem>>, vector<1x32xf32>
    tpu.vector_store %arg14[%c8_163, %c0_164], %171 {strides = array<i32>} : memref<14x32xf32, #tpu.memory_space<vmem>>, vector<1x32xf32>,
    %c1_165 = arith.constant 1 : index
    %c4_166 = arith.constant 4 : index
    %173 = memref.load %arg1[%c1_165, %c4_166] : memref<2x8xi32, #tpu.memory_space<smem>>
    %174 = arith.index_cast %173 : i32 to index
    %c0_167 = arith.constant 0 : index
    %c0_168 = arith.constant 0 : index
    %175 = vector.load %arg3[%174, %c0_167, %c0_168] : memref<16x1x32xf32, #tpu.memory_space<vmem>>, vector<1x1x32xf32>
    %176 = vector.shape_cast %175 : vector<1x1x32xf32> to vector<1x32xf32>
    %c9_169 = arith.constant 9 : index
    %c0_170 = arith.constant 0 : index
    %177 = vector.load %arg14[%c9_169, %c0_170] : memref<14x32xf32, #tpu.memory_space<vmem>>, vector<1x32xf32>
    tpu.vector_store %arg14[%c9_169, %c0_170], %176 {strides = array<i32>} : memref<14x32xf32, #tpu.memory_space<vmem>>, vector<1x32xf32>,
    %c0_171 = arith.constant 0 : index
    %c5_172 = arith.constant 5 : index
    %178 = memref.load %arg1[%c0_171, %c5_172] : memref<2x8xi32, #tpu.memory_space<smem>>
    %179 = arith.index_cast %178 : i32 to index
    %c0_173 = arith.constant 0 : index
    %c0_174 = arith.constant 0 : index
    %180 = vector.load %arg3[%179, %c0_173, %c0_174] : memref<16x1x32xf32, #tpu.memory_space<vmem>>, vector<1x1x32xf32>
    %181 = vector.shape_cast %180 : vector<1x1x32xf32> to vector<1x32xf32>
    %c10_175 = arith.constant 10 : index
    %c0_176 = arith.constant 0 : index
    %182 = vector.load %arg14[%c10_175, %c0_176] : memref<14x32xf32, #tpu.memory_space<vmem>>, vector<1x32xf32>
    tpu.vector_store %arg14[%c10_175, %c0_176], %181 {strides = array<i32>} : memref<14x32xf32, #tpu.memory_space<vmem>>, vector<1x32xf32>,
    %c1_177 = arith.constant 1 : index
    %c5_178 = arith.constant 5 : index
    %183 = memref.load %arg1[%c1_177, %c5_178] : memref<2x8xi32, #tpu.memory_space<smem>>
    %184 = arith.index_cast %183 : i32 to index
    %c0_179 = arith.constant 0 : index
    %c0_180 = arith.constant 0 : index
    %185 = vector.load %arg3[%184, %c0_179, %c0_180] : memref<16x1x32xf32, #tpu.memory_space<vmem>>, vector<1x1x32xf32>
    %186 = vector.shape_cast %185 : vector<1x1x32xf32> to vector<1x32xf32>
    %c11_181 = arith.constant 11 : index
    %c0_182 = arith.constant 0 : index
    %187 = vector.load %arg14[%c11_181, %c0_182] : memref<14x32xf32, #tpu.memory_space<vmem>>, vector<1x32xf32>
    tpu.vector_store %arg14[%c11_181, %c0_182], %186 {strides = array<i32>} : memref<14x32xf32, #tpu.memory_space<vmem>>, vector<1x32xf32>,
    %c0_183 = arith.constant 0 : index
    %c6_184 = arith.constant 6 : index
    %188 = memref.load %arg1[%c0_183, %c6_184] : memref<2x8xi32, #tpu.memory_space<smem>>
    %189 = arith.index_cast %188 : i32 to index
    %c0_185 = arith.constant 0 : index
    %c0_186 = arith.constant 0 : index
    %190 = vector.load %arg3[%189, %c0_185, %c0_186] : memref<16x1x32xf32, #tpu.memory_space<vmem>>, vector<1x1x32xf32>
    %191 = vector.shape_cast %190 : vector<1x1x32xf32> to vector<1x32xf32>
    %c12 = arith.constant 12 : index
    %c0_187 = arith.constant 0 : index
    %192 = vector.load %arg14[%c12, %c0_187] : memref<14x32xf32, #tpu.memory_space<vmem>>, vector<1x32xf32>
    tpu.vector_store %arg14[%c12, %c0_187], %191 {strides = array<i32>} : memref<14x32xf32, #tpu.memory_space<vmem>>, vector<1x32xf32>,
    %c1_188 = arith.constant 1 : index
    %c6_189 = arith.constant 6 : index
    %193 = memref.load %arg1[%c1_188, %c6_189] : memref<2x8xi32, #tpu.memory_space<smem>>
    %194 = arith.index_cast %193 : i32 to index
    %c0_190 = arith.constant 0 : index
    %c0_191 = arith.constant 0 : index
    %195 = vector.load %arg3[%194, %c0_190, %c0_191] : memref<16x1x32xf32, #tpu.memory_space<vmem>>, vector<1x1x32xf32>
    %196 = vector.shape_cast %195 : vector<1x1x32xf32> to vector<1x32xf32>
    %c13 = arith.constant 13 : index
    %c0_192 = arith.constant 0 : index
    %197 = vector.load %arg14[%c13, %c0_192] : memref<14x32xf32, #tpu.memory_space<vmem>>, vector<1x32xf32>
    tpu.vector_store %arg14[%c13, %c0_192], %196 {strides = array<i32>} : memref<14x32xf32, #tpu.memory_space<vmem>>, vector<1x32xf32>,
    %c0_193 = arith.constant 0 : index
    %c0_194 = arith.constant 0 : index
    %198 = vector.load %arg13[%c0_193, %c0_194] : memref<12x64xf32, #tpu.memory_space<vmem>>, vector<12x64xf32>
    %c0_195 = arith.constant 0 : index
    %c0_196 = arith.constant 0 : index
    %199 = vector.load %arg4[%c0_195, %c0_196] : memref<64x256xf32, #tpu.memory_space<vmem>>, vector<64x256xf32>
    %cst = arith.constant dense<0.000000e+00> : vector<12x256xf32>
    %200 = tpu.matmul %198, %199, %cst {dimension_numbers = #tpu.dot_dimension_numbers<[1], [0], [0], [1], [0, 0, 1, 1], [], []>} : vector<12x64xf32>, vector<64x256xf32>, vector<12x256xf32> -> vector<12x256xf32>
    %c0_197 = arith.constant 0 : index
    %c0_198 = arith.constant 0 : index
    %201 = vector.load %arg6[%c0_197, %c0_198] : memref<1x256xf32, #tpu.memory_space<vmem>>, vector<1x256xf32>
    %202 = vector.broadcast %201 : vector<1x256xf32> to vector<12x256xf32>
    %203 = arith.addf %200, %202 : vector<12x256xf32>
    %c0_199 = arith.constant 0 : index
    %c0_200 = arith.constant 0 : index
    %204 = vector.load %arg14[%c0_199, %c0_200] : memref<14x32xf32, #tpu.memory_space<vmem>>, vector<14x32xf32>
    %cst_201 = arith.constant 0.000000e+00 : f32
    %205 = vector.broadcast %cst_201 : f32 to vector<14x32xf32>
    %206 = arith.maximumf %204, %205 : vector<14x32xf32>
    %c0_202 = arith.constant 0 : index
    %c0_203 = arith.constant 0 : index
    %207 = vector.load %arg7[%c0_202, %c0_203] : memref<32x256xf32, #tpu.memory_space<vmem>>, vector<32x256xf32>
    %cst_204 = arith.constant dense<0.000000e+00> : vector<14x256xf32>
    %208 = tpu.matmul %206, %207, %cst_204 {dimension_numbers = #tpu.dot_dimension_numbers<[1], [0], [0], [1], [0, 0, 1, 1], [], []>} : vector<14x32xf32>, vector<32x256xf32>, vector<14x256xf32> -> vector<14x256xf32>
    %c0_205 = arith.constant 0 : index
    %c0_206 = arith.constant 0 : index
    %209 = vector.load %arg9[%c0_205, %c0_206] : memref<1x256xf32, #tpu.memory_space<vmem>>, vector<1x256xf32>
    %210 = vector.broadcast %209 : vector<1x256xf32> to vector<14x256xf32>
    %211 = arith.addf %208, %210 : vector<14x256xf32>
    %cst_207 = arith.constant 0.000000e+00 : f32
    %212 = vector.broadcast %cst_207 : f32 to vector<2x64xf32>
    %cst_208 = arith.constant 0.000000e+00 : f32
    %213 = vector.broadcast %cst_208 : f32 to vector<2x64xf32>
    %c0_209 = arith.constant 0 : index
    %c0_210 = arith.constant 0 : index
    %214 = vector.load %arg5[%c0_209, %c0_210] : memref<64x256xf32, #tpu.memory_space<vmem>>, vector<64x256xf32>
    %215 = vector.extract_strided_slice %203 {offsets = [0, 0], sizes = [2, 256], strides = [1, 1]} : vector<12x256xf32> to vector<2x256xf32>
    %cst_211 = arith.constant dense<0.000000e+00> : vector<2x256xf32>
    %216 = tpu.matmul %212, %214, %cst_211 {dimension_numbers = #tpu.dot_dimension_numbers<[1], [0], [0], [1], [0, 0, 1, 1], [], []>} : vector<2x64xf32>, vector<64x256xf32>, vector<2x256xf32> -> vector<2x256xf32>
    %217 = arith.addf %215, %216 : vector<2x256xf32>
    %218 = vector.extract_strided_slice %217 {offsets = [0, 0], sizes = [2, 192], strides = [1, 1]} : vector<2x256xf32> to vector<2x192xf32>
    %219 = arith.negf %218 : vector<2x192xf32>
    %220 = math.exp %219 : vector<2x192xf32>
    %cst_212 = arith.constant 1.000000e+00 : f32
    %221 = vector.broadcast %cst_212 : f32 to vector<2x192xf32>
    %222 = arith.addf %221, %220 : vector<2x192xf32>
    %223 = arith.divf %221, %222 : vector<2x192xf32>
    %224 = vector.extract_strided_slice %223 {offsets = [0, 0], sizes = [2, 64], strides = [1, 1]} : vector<2x192xf32> to vector<2x64xf32>
    %225 = vector.extract_strided_slice %223 {offsets = [0, 64], sizes = [2, 64], strides = [1, 1]} : vector<2x192xf32> to vector<2x64xf32>
    %226 = vector.extract_strided_slice %223 {offsets = [0, 128], sizes = [2, 64], strides = [1, 1]} : vector<2x192xf32> to vector<2x64xf32>
    %227 = vector.extract_strided_slice %217 {offsets = [0, 192], sizes = [2, 64], strides = [1, 1]} : vector<2x256xf32> to vector<2x64xf32>
    %228 = math.tanh %227 : vector<2x64xf32>
    %229 = arith.mulf %225, %213 : vector<2x64xf32>
    %230 = arith.mulf %224, %228 : vector<2x64xf32>
    %231 = arith.addf %229, %230 : vector<2x64xf32>
    %232 = math.tanh %231 : vector<2x64xf32>
    %233 = arith.mulf %226, %232 : vector<2x64xf32>
    %234 = vector.extract_strided_slice %203 {offsets = [2, 0], sizes = [2, 256], strides = [1, 1]} : vector<12x256xf32> to vector<2x256xf32>
    %cst_213 = arith.constant dense<0.000000e+00> : vector<2x256xf32>
    %235 = tpu.matmul %233, %214, %cst_213 {dimension_numbers = #tpu.dot_dimension_numbers<[1], [0], [0], [1], [0, 0, 1, 1], [], []>} : vector<2x64xf32>, vector<64x256xf32>, vector<2x256xf32> -> vector<2x256xf32>
    %236 = arith.addf %234, %235 : vector<2x256xf32>
    %237 = vector.extract_strided_slice %236 {offsets = [0, 0], sizes = [2, 192], strides = [1, 1]} : vector<2x256xf32> to vector<2x192xf32>
    %238 = arith.negf %237 : vector<2x192xf32>
    %239 = math.exp %238 : vector<2x192xf32>
    %cst_214 = arith.constant 1.000000e+00 : f32
    %240 = vector.broadcast %cst_214 : f32 to vector<2x192xf32>
    %241 = arith.addf %240, %239 : vector<2x192xf32>
    %242 = arith.divf %240, %241 : vector<2x192xf32>
    %243 = vector.extract_strided_slice %242 {offsets = [0, 0], sizes = [2, 64], strides = [1, 1]} : vector<2x192xf32> to vector<2x64xf32>
    %244 = vector.extract_strided_slice %242 {offsets = [0, 64], sizes = [2, 64], strides = [1, 1]} : vector<2x192xf32> to vector<2x64xf32>
    %245 = vector.extract_strided_slice %242 {offsets = [0, 128], sizes = [2, 64], strides = [1, 1]} : vector<2x192xf32> to vector<2x64xf32>
    %246 = vector.extract_strided_slice %236 {offsets = [0, 192], sizes = [2, 64], strides = [1, 1]} : vector<2x256xf32> to vector<2x64xf32>
    %247 = math.tanh %246 : vector<2x64xf32>
    %248 = arith.mulf %244, %231 : vector<2x64xf32>
    %249 = arith.mulf %243, %247 : vector<2x64xf32>
    %250 = arith.addf %248, %249 : vector<2x64xf32>
    %251 = math.tanh %250 : vector<2x64xf32>
    %252 = arith.mulf %245, %251 : vector<2x64xf32>
    %253 = vector.extract_strided_slice %203 {offsets = [4, 0], sizes = [2, 256], strides = [1, 1]} : vector<12x256xf32> to vector<2x256xf32>
    %cst_215 = arith.constant dense<0.000000e+00> : vector<2x256xf32>
    %254 = tpu.matmul %252, %214, %cst_215 {dimension_numbers = #tpu.dot_dimension_numbers<[1], [0], [0], [1], [0, 0, 1, 1], [], []>} : vector<2x64xf32>, vector<64x256xf32>, vector<2x256xf32> -> vector<2x256xf32>
    %255 = arith.addf %253, %254 : vector<2x256xf32>
    %256 = vector.extract_strided_slice %255 {offsets = [0, 0], sizes = [2, 192], strides = [1, 1]} : vector<2x256xf32> to vector<2x192xf32>
    %257 = arith.negf %256 : vector<2x192xf32>
    %258 = math.exp %257 : vector<2x192xf32>
    %cst_216 = arith.constant 1.000000e+00 : f32
    %259 = vector.broadcast %cst_216 : f32 to vector<2x192xf32>
    %260 = arith.addf %259, %258 : vector<2x192xf32>
    %261 = arith.divf %259, %260 : vector<2x192xf32>
    %262 = vector.extract_strided_slice %261 {offsets = [0, 0], sizes = [2, 64], strides = [1, 1]} : vector<2x192xf32> to vector<2x64xf32>
    %263 = vector.extract_strided_slice %261 {offsets = [0, 64], sizes = [2, 64], strides = [1, 1]} : vector<2x192xf32> to vector<2x64xf32>
    %264 = vector.extract_strided_slice %261 {offsets = [0, 128], sizes = [2, 64], strides = [1, 1]} : vector<2x192xf32> to vector<2x64xf32>
    %265 = vector.extract_strided_slice %255 {offsets = [0, 192], sizes = [2, 64], strides = [1, 1]} : vector<2x256xf32> to vector<2x64xf32>
    %266 = math.tanh %265 : vector<2x64xf32>
    %267 = arith.mulf %263, %250 : vector<2x64xf32>
    %268 = arith.mulf %262, %266 : vector<2x64xf32>
    %269 = arith.addf %267, %268 : vector<2x64xf32>
    %270 = math.tanh %269 : vector<2x64xf32>
    %271 = arith.mulf %264, %270 : vector<2x64xf32>
    %272 = vector.extract_strided_slice %203 {offsets = [6, 0], sizes = [2, 256], strides = [1, 1]} : vector<12x256xf32> to vector<2x256xf32>
    %cst_217 = arith.constant dense<0.000000e+00> : vector<2x256xf32>
    %273 = tpu.matmul %271, %214, %cst_217 {dimension_numbers = #tpu.dot_dimension_numbers<[1], [0], [0], [1], [0, 0, 1, 1], [], []>} : vector<2x64xf32>, vector<64x256xf32>, vector<2x256xf32> -> vector<2x256xf32>
    %274 = arith.addf %272, %273 : vector<2x256xf32>
    %275 = vector.extract_strided_slice %274 {offsets = [0, 0], sizes = [2, 192], strides = [1, 1]} : vector<2x256xf32> to vector<2x192xf32>
    %276 = arith.negf %275 : vector<2x192xf32>
    %277 = math.exp %276 : vector<2x192xf32>
    %cst_218 = arith.constant 1.000000e+00 : f32
    %278 = vector.broadcast %cst_218 : f32 to vector<2x192xf32>
    %279 = arith.addf %278, %277 : vector<2x192xf32>
    %280 = arith.divf %278, %279 : vector<2x192xf32>
    %281 = vector.extract_strided_slice %280 {offsets = [0, 0], sizes = [2, 64], strides = [1, 1]} : vector<2x192xf32> to vector<2x64xf32>
    %282 = vector.extract_strided_slice %280 {offsets = [0, 64], sizes = [2, 64], strides = [1, 1]} : vector<2x192xf32> to vector<2x64xf32>
    %283 = vector.extract_strided_slice %280 {offsets = [0, 128], sizes = [2, 64], strides = [1, 1]} : vector<2x192xf32> to vector<2x64xf32>
    %284 = vector.extract_strided_slice %274 {offsets = [0, 192], sizes = [2, 64], strides = [1, 1]} : vector<2x256xf32> to vector<2x64xf32>
    %285 = math.tanh %284 : vector<2x64xf32>
    %286 = arith.mulf %282, %269 : vector<2x64xf32>
    %287 = arith.mulf %281, %285 : vector<2x64xf32>
    %288 = arith.addf %286, %287 : vector<2x64xf32>
    %289 = math.tanh %288 : vector<2x64xf32>
    %290 = arith.mulf %283, %289 : vector<2x64xf32>
    %291 = vector.extract_strided_slice %203 {offsets = [8, 0], sizes = [2, 256], strides = [1, 1]} : vector<12x256xf32> to vector<2x256xf32>
    %cst_219 = arith.constant dense<0.000000e+00> : vector<2x256xf32>
    %292 = tpu.matmul %290, %214, %cst_219 {dimension_numbers = #tpu.dot_dimension_numbers<[1], [0], [0], [1], [0, 0, 1, 1], [], []>} : vector<2x64xf32>, vector<64x256xf32>, vector<2x256xf32> -> vector<2x256xf32>
    %293 = arith.addf %291, %292 : vector<2x256xf32>
    %294 = vector.extract_strided_slice %293 {offsets = [0, 0], sizes = [2, 192], strides = [1, 1]} : vector<2x256xf32> to vector<2x192xf32>
    %295 = arith.negf %294 : vector<2x192xf32>
    %296 = math.exp %295 : vector<2x192xf32>
    %cst_220 = arith.constant 1.000000e+00 : f32
    %297 = vector.broadcast %cst_220 : f32 to vector<2x192xf32>
    %298 = arith.addf %297, %296 : vector<2x192xf32>
    %299 = arith.divf %297, %298 : vector<2x192xf32>
    %300 = vector.extract_strided_slice %299 {offsets = [0, 0], sizes = [2, 64], strides = [1, 1]} : vector<2x192xf32> to vector<2x64xf32>
    %301 = vector.extract_strided_slice %299 {offsets = [0, 64], sizes = [2, 64], strides = [1, 1]} : vector<2x192xf32> to vector<2x64xf32>
    %302 = vector.extract_strided_slice %299 {offsets = [0, 128], sizes = [2, 64], strides = [1, 1]} : vector<2x192xf32> to vector<2x64xf32>
    %303 = vector.extract_strided_slice %293 {offsets = [0, 192], sizes = [2, 64], strides = [1, 1]} : vector<2x256xf32> to vector<2x64xf32>
    %304 = math.tanh %303 : vector<2x64xf32>
    %305 = arith.mulf %301, %288 : vector<2x64xf32>
    %306 = arith.mulf %300, %304 : vector<2x64xf32>
    %307 = arith.addf %305, %306 : vector<2x64xf32>
    %308 = math.tanh %307 : vector<2x64xf32>
    %309 = arith.mulf %302, %308 : vector<2x64xf32>
    %310 = vector.extract_strided_slice %203 {offsets = [10, 0], sizes = [2, 256], strides = [1, 1]} : vector<12x256xf32> to vector<2x256xf32>
    %cst_221 = arith.constant dense<0.000000e+00> : vector<2x256xf32>
    %311 = tpu.matmul %309, %214, %cst_221 {dimension_numbers = #tpu.dot_dimension_numbers<[1], [0], [0], [1], [0, 0, 1, 1], [], []>} : vector<2x64xf32>, vector<64x256xf32>, vector<2x256xf32> -> vector<2x256xf32>
    %312 = arith.addf %310, %311 : vector<2x256xf32>
    %313 = vector.extract_strided_slice %312 {offsets = [0, 0], sizes = [2, 192], strides = [1, 1]} : vector<2x256xf32> to vector<2x192xf32>
    %314 = arith.negf %313 : vector<2x192xf32>
    %315 = math.exp %314 : vector<2x192xf32>
    %cst_222 = arith.constant 1.000000e+00 : f32
    %316 = vector.broadcast %cst_222 : f32 to vector<2x192xf32>
    %317 = arith.addf %316, %315 : vector<2x192xf32>
    %318 = arith.divf %316, %317 : vector<2x192xf32>
    %319 = vector.extract_strided_slice %318 {offsets = [0, 0], sizes = [2, 64], strides = [1, 1]} : vector<2x192xf32> to vector<2x64xf32>
    %320 = vector.extract_strided_slice %318 {offsets = [0, 64], sizes = [2, 64], strides = [1, 1]} : vector<2x192xf32> to vector<2x64xf32>
    %321 = vector.extract_strided_slice %318 {offsets = [0, 128], sizes = [2, 64], strides = [1, 1]} : vector<2x192xf32> to vector<2x64xf32>
    %322 = vector.extract_strided_slice %312 {offsets = [0, 192], sizes = [2, 64], strides = [1, 1]} : vector<2x256xf32> to vector<2x64xf32>
    %323 = math.tanh %322 : vector<2x64xf32>
    %324 = arith.mulf %320, %307 : vector<2x64xf32>
    %325 = arith.mulf %319, %323 : vector<2x64xf32>
    %326 = arith.addf %324, %325 : vector<2x64xf32>
    %327 = math.tanh %326 : vector<2x64xf32>
    %328 = arith.mulf %321, %327 : vector<2x64xf32>
    %c0_223 = arith.constant 0 : index
    %c0_224 = arith.constant 0 : index
    %329 = vector.load %arg8[%c0_223, %c0_224] : memref<64x256xf32, #tpu.memory_space<vmem>>, vector<64x256xf32>
    %330 = vector.extract_strided_slice %211 {offsets = [0, 0], sizes = [2, 256], strides = [1, 1]} : vector<14x256xf32> to vector<2x256xf32>
    %cst_225 = arith.constant dense<0.000000e+00> : vector<2x256xf32>
    %331 = tpu.matmul %328, %329, %cst_225 {dimension_numbers = #tpu.dot_dimension_numbers<[1], [0], [0], [1], [0, 0, 1, 1], [], []>} : vector<2x64xf32>, vector<64x256xf32>, vector<2x256xf32> -> vector<2x256xf32>
    %332 = arith.addf %330, %331 : vector<2x256xf32>
    %333 = vector.extract_strided_slice %332 {offsets = [0, 0], sizes = [2, 192], strides = [1, 1]} : vector<2x256xf32> to vector<2x192xf32>
    %334 = arith.negf %333 : vector<2x192xf32>
    %335 = math.exp %334 : vector<2x192xf32>
    %cst_226 = arith.constant 1.000000e+00 : f32
    %336 = vector.broadcast %cst_226 : f32 to vector<2x192xf32>
    %337 = arith.addf %336, %335 : vector<2x192xf32>
    %338 = arith.divf %336, %337 : vector<2x192xf32>
    %339 = vector.extract_strided_slice %338 {offsets = [0, 0], sizes = [2, 64], strides = [1, 1]} : vector<2x192xf32> to vector<2x64xf32>
    %340 = vector.extract_strided_slice %338 {offsets = [0, 64], sizes = [2, 64], strides = [1, 1]} : vector<2x192xf32> to vector<2x64xf32>
    %341 = vector.extract_strided_slice %338 {offsets = [0, 128], sizes = [2, 64], strides = [1, 1]} : vector<2x192xf32> to vector<2x64xf32>
    %342 = vector.extract_strided_slice %332 {offsets = [0, 192], sizes = [2, 64], strides = [1, 1]} : vector<2x256xf32> to vector<2x64xf32>
    %343 = math.tanh %342 : vector<2x64xf32>
    %344 = arith.mulf %340, %326 : vector<2x64xf32>
    %345 = arith.mulf %339, %343 : vector<2x64xf32>
    %346 = arith.addf %344, %345 : vector<2x64xf32>
    %347 = math.tanh %346 : vector<2x64xf32>
    %348 = arith.mulf %341, %347 : vector<2x64xf32>
    %349 = vector.extract_strided_slice %211 {offsets = [2, 0], sizes = [2, 256], strides = [1, 1]} : vector<14x256xf32> to vector<2x256xf32>
    %cst_227 = arith.constant dense<0.000000e+00> : vector<2x256xf32>
    %350 = tpu.matmul %348, %329, %cst_227 {dimension_numbers = #tpu.dot_dimension_numbers<[1], [0], [0], [1], [0, 0, 1, 1], [], []>} : vector<2x64xf32>, vector<64x256xf32>, vector<2x256xf32> -> vector<2x256xf32>
    %351 = arith.addf %349, %350 : vector<2x256xf32>
    %352 = vector.extract_strided_slice %351 {offsets = [0, 0], sizes = [2, 192], strides = [1, 1]} : vector<2x256xf32> to vector<2x192xf32>
    %353 = arith.negf %352 : vector<2x192xf32>
    %354 = math.exp %353 : vector<2x192xf32>
    %cst_228 = arith.constant 1.000000e+00 : f32
    %355 = vector.broadcast %cst_228 : f32 to vector<2x192xf32>
    %356 = arith.addf %355, %354 : vector<2x192xf32>
    %357 = arith.divf %355, %356 : vector<2x192xf32>
    %358 = vector.extract_strided_slice %357 {offsets = [0, 0], sizes = [2, 64], strides = [1, 1]} : vector<2x192xf32> to vector<2x64xf32>
    %359 = vector.extract_strided_slice %357 {offsets = [0, 64], sizes = [2, 64], strides = [1, 1]} : vector<2x192xf32> to vector<2x64xf32>
    %360 = vector.extract_strided_slice %357 {offsets = [0, 128], sizes = [2, 64], strides = [1, 1]} : vector<2x192xf32> to vector<2x64xf32>
    %361 = vector.extract_strided_slice %351 {offsets = [0, 192], sizes = [2, 64], strides = [1, 1]} : vector<2x256xf32> to vector<2x64xf32>
    %362 = math.tanh %361 : vector<2x64xf32>
    %363 = arith.mulf %359, %346 : vector<2x64xf32>
    %364 = arith.mulf %358, %362 : vector<2x64xf32>
    %365 = arith.addf %363, %364 : vector<2x64xf32>
    %366 = math.tanh %365 : vector<2x64xf32>
    %367 = arith.mulf %360, %366 : vector<2x64xf32>
    %368 = vector.extract_strided_slice %211 {offsets = [4, 0], sizes = [2, 256], strides = [1, 1]} : vector<14x256xf32> to vector<2x256xf32>
    %cst_229 = arith.constant dense<0.000000e+00> : vector<2x256xf32>
    %369 = tpu.matmul %367, %329, %cst_229 {dimension_numbers = #tpu.dot_dimension_numbers<[1], [0], [0], [1], [0, 0, 1, 1], [], []>} : vector<2x64xf32>, vector<64x256xf32>, vector<2x256xf32> -> vector<2x256xf32>
    %370 = arith.addf %368, %369 : vector<2x256xf32>
    %371 = vector.extract_strided_slice %370 {offsets = [0, 0], sizes = [2, 192], strides = [1, 1]} : vector<2x256xf32> to vector<2x192xf32>
    %372 = arith.negf %371 : vector<2x192xf32>
    %373 = math.exp %372 : vector<2x192xf32>
    %cst_230 = arith.constant 1.000000e+00 : f32
    %374 = vector.broadcast %cst_230 : f32 to vector<2x192xf32>
    %375 = arith.addf %374, %373 : vector<2x192xf32>
    %376 = arith.divf %374, %375 : vector<2x192xf32>
    %377 = vector.extract_strided_slice %376 {offsets = [0, 0], sizes = [2, 64], strides = [1, 1]} : vector<2x192xf32> to vector<2x64xf32>
    %378 = vector.extract_strided_slice %376 {offsets = [0, 64], sizes = [2, 64], strides = [1, 1]} : vector<2x192xf32> to vector<2x64xf32>
    %379 = vector.extract_strided_slice %376 {offsets = [0, 128], sizes = [2, 64], strides = [1, 1]} : vector<2x192xf32> to vector<2x64xf32>
    %380 = vector.extract_strided_slice %370 {offsets = [0, 192], sizes = [2, 64], strides = [1, 1]} : vector<2x256xf32> to vector<2x64xf32>
    %381 = math.tanh %380 : vector<2x64xf32>
    %382 = arith.mulf %378, %365 : vector<2x64xf32>
    %383 = arith.mulf %377, %381 : vector<2x64xf32>
    %384 = arith.addf %382, %383 : vector<2x64xf32>
    %385 = math.tanh %384 : vector<2x64xf32>
    %386 = arith.mulf %379, %385 : vector<2x64xf32>
    %387 = vector.extract_strided_slice %211 {offsets = [6, 0], sizes = [2, 256], strides = [1, 1]} : vector<14x256xf32> to vector<2x256xf32>
    %cst_231 = arith.constant dense<0.000000e+00> : vector<2x256xf32>
    %388 = tpu.matmul %386, %329, %cst_231 {dimension_numbers = #tpu.dot_dimension_numbers<[1], [0], [0], [1], [0, 0, 1, 1], [], []>} : vector<2x64xf32>, vector<64x256xf32>, vector<2x256xf32> -> vector<2x256xf32>
    %389 = arith.addf %387, %388 : vector<2x256xf32>
    %390 = vector.extract_strided_slice %389 {offsets = [0, 0], sizes = [2, 192], strides = [1, 1]} : vector<2x256xf32> to vector<2x192xf32>
    %391 = arith.negf %390 : vector<2x192xf32>
    %392 = math.exp %391 : vector<2x192xf32>
    %cst_232 = arith.constant 1.000000e+00 : f32
    %393 = vector.broadcast %cst_232 : f32 to vector<2x192xf32>
    %394 = arith.addf %393, %392 : vector<2x192xf32>
    %395 = arith.divf %393, %394 : vector<2x192xf32>
    %396 = vector.extract_strided_slice %395 {offsets = [0, 0], sizes = [2, 64], strides = [1, 1]} : vector<2x192xf32> to vector<2x64xf32>
    %397 = vector.extract_strided_slice %395 {offsets = [0, 64], sizes = [2, 64], strides = [1, 1]} : vector<2x192xf32> to vector<2x64xf32>
    %398 = vector.extract_strided_slice %395 {offsets = [0, 128], sizes = [2, 64], strides = [1, 1]} : vector<2x192xf32> to vector<2x64xf32>
    %399 = vector.extract_strided_slice %389 {offsets = [0, 192], sizes = [2, 64], strides = [1, 1]} : vector<2x256xf32> to vector<2x64xf32>
    %400 = math.tanh %399 : vector<2x64xf32>
    %401 = arith.mulf %397, %384 : vector<2x64xf32>
    %402 = arith.mulf %396, %400 : vector<2x64xf32>
    %403 = arith.addf %401, %402 : vector<2x64xf32>
    %404 = math.tanh %403 : vector<2x64xf32>
    %405 = arith.mulf %398, %404 : vector<2x64xf32>
    %406 = vector.extract_strided_slice %211 {offsets = [8, 0], sizes = [2, 256], strides = [1, 1]} : vector<14x256xf32> to vector<2x256xf32>
    %cst_233 = arith.constant dense<0.000000e+00> : vector<2x256xf32>
    %407 = tpu.matmul %405, %329, %cst_233 {dimension_numbers = #tpu.dot_dimension_numbers<[1], [0], [0], [1], [0, 0, 1, 1], [], []>} : vector<2x64xf32>, vector<64x256xf32>, vector<2x256xf32> -> vector<2x256xf32>
    %408 = arith.addf %406, %407 : vector<2x256xf32>
    %409 = vector.extract_strided_slice %408 {offsets = [0, 0], sizes = [2, 192], strides = [1, 1]} : vector<2x256xf32> to vector<2x192xf32>
    %410 = arith.negf %409 : vector<2x192xf32>
    %411 = math.exp %410 : vector<2x192xf32>
    %cst_234 = arith.constant 1.000000e+00 : f32
    %412 = vector.broadcast %cst_234 : f32 to vector<2x192xf32>
    %413 = arith.addf %412, %411 : vector<2x192xf32>
    %414 = arith.divf %412, %413 : vector<2x192xf32>
    %415 = vector.extract_strided_slice %414 {offsets = [0, 0], sizes = [2, 64], strides = [1, 1]} : vector<2x192xf32> to vector<2x64xf32>
    %416 = vector.extract_strided_slice %414 {offsets = [0, 64], sizes = [2, 64], strides = [1, 1]} : vector<2x192xf32> to vector<2x64xf32>
    %417 = vector.extract_strided_slice %414 {offsets = [0, 128], sizes = [2, 64], strides = [1, 1]} : vector<2x192xf32> to vector<2x64xf32>
    %418 = vector.extract_strided_slice %408 {offsets = [0, 192], sizes = [2, 64], strides = [1, 1]} : vector<2x256xf32> to vector<2x64xf32>
    %419 = math.tanh %418 : vector<2x64xf32>
    %420 = arith.mulf %416, %403 : vector<2x64xf32>
    %421 = arith.mulf %415, %419 : vector<2x64xf32>
    %422 = arith.addf %420, %421 : vector<2x64xf32>
    %423 = math.tanh %422 : vector<2x64xf32>
    %424 = arith.mulf %417, %423 : vector<2x64xf32>
    %425 = vector.extract_strided_slice %211 {offsets = [10, 0], sizes = [2, 256], strides = [1, 1]} : vector<14x256xf32> to vector<2x256xf32>
    %cst_235 = arith.constant dense<0.000000e+00> : vector<2x256xf32>
    %426 = tpu.matmul %424, %329, %cst_235 {dimension_numbers = #tpu.dot_dimension_numbers<[1], [0], [0], [1], [0, 0, 1, 1], [], []>} : vector<2x64xf32>, vector<64x256xf32>, vector<2x256xf32> -> vector<2x256xf32>
    %427 = arith.addf %425, %426 : vector<2x256xf32>
    %428 = vector.extract_strided_slice %427 {offsets = [0, 0], sizes = [2, 192], strides = [1, 1]} : vector<2x256xf32> to vector<2x192xf32>
    %429 = arith.negf %428 : vector<2x192xf32>
    %430 = math.exp %429 : vector<2x192xf32>
    %cst_236 = arith.constant 1.000000e+00 : f32
    %431 = vector.broadcast %cst_236 : f32 to vector<2x192xf32>
    %432 = arith.addf %431, %430 : vector<2x192xf32>
    %433 = arith.divf %431, %432 : vector<2x192xf32>
    %434 = vector.extract_strided_slice %433 {offsets = [0, 0], sizes = [2, 64], strides = [1, 1]} : vector<2x192xf32> to vector<2x64xf32>
    %435 = vector.extract_strided_slice %433 {offsets = [0, 64], sizes = [2, 64], strides = [1, 1]} : vector<2x192xf32> to vector<2x64xf32>
    %436 = vector.extract_strided_slice %433 {offsets = [0, 128], sizes = [2, 64], strides = [1, 1]} : vector<2x192xf32> to vector<2x64xf32>
    %437 = vector.extract_strided_slice %427 {offsets = [0, 192], sizes = [2, 64], strides = [1, 1]} : vector<2x256xf32> to vector<2x64xf32>
    %438 = math.tanh %437 : vector<2x64xf32>
    %439 = arith.mulf %435, %422 : vector<2x64xf32>
    %440 = arith.mulf %434, %438 : vector<2x64xf32>
    %441 = arith.addf %439, %440 : vector<2x64xf32>
    %442 = math.tanh %441 : vector<2x64xf32>
    %443 = arith.mulf %436, %442 : vector<2x64xf32>
    %444 = vector.extract_strided_slice %211 {offsets = [12, 0], sizes = [2, 256], strides = [1, 1]} : vector<14x256xf32> to vector<2x256xf32>
    %cst_237 = arith.constant dense<0.000000e+00> : vector<2x256xf32>
    %445 = tpu.matmul %443, %329, %cst_237 {dimension_numbers = #tpu.dot_dimension_numbers<[1], [0], [0], [1], [0, 0, 1, 1], [], []>} : vector<2x64xf32>, vector<64x256xf32>, vector<2x256xf32> -> vector<2x256xf32>
    %446 = arith.addf %444, %445 : vector<2x256xf32>
    %447 = vector.extract_strided_slice %446 {offsets = [0, 0], sizes = [2, 192], strides = [1, 1]} : vector<2x256xf32> to vector<2x192xf32>
    %448 = arith.negf %447 : vector<2x192xf32>
    %449 = math.exp %448 : vector<2x192xf32>
    %cst_238 = arith.constant 1.000000e+00 : f32
    %450 = vector.broadcast %cst_238 : f32 to vector<2x192xf32>
    %451 = arith.addf %450, %449 : vector<2x192xf32>
    %452 = arith.divf %450, %451 : vector<2x192xf32>
    %453 = vector.extract_strided_slice %452 {offsets = [0, 0], sizes = [2, 64], strides = [1, 1]} : vector<2x192xf32> to vector<2x64xf32>
    %454 = vector.extract_strided_slice %452 {offsets = [0, 64], sizes = [2, 64], strides = [1, 1]} : vector<2x192xf32> to vector<2x64xf32>
    %455 = vector.extract_strided_slice %452 {offsets = [0, 128], sizes = [2, 64], strides = [1, 1]} : vector<2x192xf32> to vector<2x64xf32>
    %456 = vector.extract_strided_slice %446 {offsets = [0, 192], sizes = [2, 64], strides = [1, 1]} : vector<2x256xf32> to vector<2x64xf32>
    %457 = math.tanh %456 : vector<2x64xf32>
    %458 = arith.mulf %454, %441 : vector<2x64xf32>
    %459 = arith.mulf %453, %457 : vector<2x64xf32>
    %460 = arith.addf %458, %459 : vector<2x64xf32>
    %461 = math.tanh %460 : vector<2x64xf32>
    %462 = arith.mulf %455, %461 : vector<2x64xf32>
    %463 = tpu.concatenate %348, %367, %386, %405, %424, %443, %462 in 0 : vector<2x64xf32>, vector<2x64xf32>, vector<2x64xf32>, vector<2x64xf32>, vector<2x64xf32>, vector<2x64xf32>, vector<2x64xf32> -> vector<14x64xf32>
    %c0_239 = arith.constant 0 : index
    %c0_240 = arith.constant 0 : index
    %464 = vector.load %arg10[%c0_239, %c0_240] : memref<64x128xf32, #tpu.memory_space<vmem>>, vector<64x128xf32>
    %cst_241 = arith.constant dense<0.000000e+00> : vector<14x128xf32>
    %465 = tpu.matmul %463, %464, %cst_241 {dimension_numbers = #tpu.dot_dimension_numbers<[1], [0], [0], [1], [0, 0, 1, 1], [], []>} : vector<14x64xf32>, vector<64x128xf32>, vector<14x128xf32> -> vector<14x128xf32>
    %c0_242 = arith.constant 0 : index
    %c0_243 = arith.constant 0 : index
    %466 = vector.load %arg11[%c0_242, %c0_243] : memref<1x128xf32, #tpu.memory_space<vmem>>, vector<1x128xf32>
    %467 = vector.broadcast %466 : vector<1x128xf32> to vector<14x128xf32>
    %468 = arith.addf %465, %467 : vector<14x128xf32>
    %469 = vector.extract_strided_slice %468 {offsets = [0, 0], sizes = [2, 128], strides = [1, 1]} : vector<14x128xf32> to vector<2x128xf32>
    %c1_244 = arith.constant 1 : index
    %c0_245 = arith.constant 0 : index
    %c0_246 = arith.constant 0 : index
    %470 = vector.load %arg12[%c1_244, %c0_245, %c0_246] : memref<8x2x128xf32, #tpu.memory_space<vmem>>, vector<1x2x128xf32>
    %471 = vector.shape_cast %470 : vector<1x2x128xf32> to vector<2x128xf32>
    %472 = vector.shape_cast %469 : vector<2x128xf32> to vector<1x2x128xf32>
    tpu.vector_store %arg12[%c1_244, %c0_245, %c0_246], %472 {strides = array<i32>} : memref<8x2x128xf32, #tpu.memory_space<vmem>>, vector<1x2x128xf32>,
    %473 = vector.extract_strided_slice %468 {offsets = [2, 0], sizes = [2, 128], strides = [1, 1]} : vector<14x128xf32> to vector<2x128xf32>
    %c2_247 = arith.constant 2 : index
    %c0_248 = arith.constant 0 : index
    %c0_249 = arith.constant 0 : index
    %474 = vector.load %arg12[%c2_247, %c0_248, %c0_249] : memref<8x2x128xf32, #tpu.memory_space<vmem>>, vector<1x2x128xf32>
    %475 = vector.shape_cast %474 : vector<1x2x128xf32> to vector<2x128xf32>
    %476 = vector.shape_cast %473 : vector<2x128xf32> to vector<1x2x128xf32>
    tpu.vector_store %arg12[%c2_247, %c0_248, %c0_249], %476 {strides = array<i32>} : memref<8x2x128xf32, #tpu.memory_space<vmem>>, vector<1x2x128xf32>,
    %477 = vector.extract_strided_slice %468 {offsets = [4, 0], sizes = [2, 128], strides = [1, 1]} : vector<14x128xf32> to vector<2x128xf32>
    %c3_250 = arith.constant 3 : index
    %c0_251 = arith.constant 0 : index
    %c0_252 = arith.constant 0 : index
    %478 = vector.load %arg12[%c3_250, %c0_251, %c0_252] : memref<8x2x128xf32, #tpu.memory_space<vmem>>, vector<1x2x128xf32>
    %479 = vector.shape_cast %478 : vector<1x2x128xf32> to vector<2x128xf32>
    %480 = vector.shape_cast %477 : vector<2x128xf32> to vector<1x2x128xf32>
    tpu.vector_store %arg12[%c3_250, %c0_251, %c0_252], %480 {strides = array<i32>} : memref<8x2x128xf32, #tpu.memory_space<vmem>>, vector<1x2x128xf32>,
    %481 = vector.extract_strided_slice %468 {offsets = [6, 0], sizes = [2, 128], strides = [1, 1]} : vector<14x128xf32> to vector<2x128xf32>
    %c4_253 = arith.constant 4 : index
    %c0_254 = arith.constant 0 : index
    %c0_255 = arith.constant 0 : index
    %482 = vector.load %arg12[%c4_253, %c0_254, %c0_255] : memref<8x2x128xf32, #tpu.memory_space<vmem>>, vector<1x2x128xf32>
    %483 = vector.shape_cast %482 : vector<1x2x128xf32> to vector<2x128xf32>
    %484 = vector.shape_cast %481 : vector<2x128xf32> to vector<1x2x128xf32>
    tpu.vector_store %arg12[%c4_253, %c0_254, %c0_255], %484 {strides = array<i32>} : memref<8x2x128xf32, #tpu.memory_space<vmem>>, vector<1x2x128xf32>,
    %485 = vector.extract_strided_slice %468 {offsets = [8, 0], sizes = [2, 128], strides = [1, 1]} : vector<14x128xf32> to vector<2x128xf32>
    %c5_256 = arith.constant 5 : index
    %c0_257 = arith.constant 0 : index
    %c0_258 = arith.constant 0 : index
    %486 = vector.load %arg12[%c5_256, %c0_257, %c0_258] : memref<8x2x128xf32, #tpu.memory_space<vmem>>, vector<1x2x128xf32>
    %487 = vector.shape_cast %486 : vector<1x2x128xf32> to vector<2x128xf32>
    %488 = vector.shape_cast %485 : vector<2x128xf32> to vector<1x2x128xf32>
    tpu.vector_store %arg12[%c5_256, %c0_257, %c0_258], %488 {strides = array<i32>} : memref<8x2x128xf32, #tpu.memory_space<vmem>>, vector<1x2x128xf32>,
    %489 = vector.extract_strided_slice %468 {offsets = [10, 0], sizes = [2, 128], strides = [1, 1]} : vector<14x128xf32> to vector<2x128xf32>
    %c6_259 = arith.constant 6 : index
    %c0_260 = arith.constant 0 : index
    %c0_261 = arith.constant 0 : index
    %490 = vector.load %arg12[%c6_259, %c0_260, %c0_261] : memref<8x2x128xf32, #tpu.memory_space<vmem>>, vector<1x2x128xf32>
    %491 = vector.shape_cast %490 : vector<1x2x128xf32> to vector<2x128xf32>
    %492 = vector.shape_cast %489 : vector<2x128xf32> to vector<1x2x128xf32>
    tpu.vector_store %arg12[%c6_259, %c0_260, %c0_261], %492 {strides = array<i32>} : memref<8x2x128xf32, #tpu.memory_space<vmem>>, vector<1x2x128xf32>,
    %493 = vector.extract_strided_slice %468 {offsets = [12, 0], sizes = [2, 128], strides = [1, 1]} : vector<14x128xf32> to vector<2x128xf32>
    %c7_262 = arith.constant 7 : index
    %c0_263 = arith.constant 0 : index
    %c0_264 = arith.constant 0 : index
    %494 = vector.load %arg12[%c7_262, %c0_263, %c0_264] : memref<8x2x128xf32, #tpu.memory_space<vmem>>, vector<1x2x128xf32>
    %495 = vector.shape_cast %494 : vector<1x2x128xf32> to vector<2x128xf32>
    %496 = vector.shape_cast %493 : vector<2x128xf32> to vector<1x2x128xf32>
    tpu.vector_store %arg12[%c7_262, %c0_263, %c0_264], %496 {strides = array<i32>} : memref<8x2x128xf32, #tpu.memory_space<vmem>>, vector<1x2x128xf32>,
    return
  }
}

</mosaic_0001>

<llo_original>
// kernel: seq2seq_forward.1
$region0: #{seq2seq_forward.1}
  #allocation0 [shape = 'u32[]', space=smem, size = 0x4, offset = 0x4, fixed_abs, tag = 'smem constant byte address 0x4 - core index']
  #allocation1 [shape = 'u32[144,128]{1,0:T(1,128)}', space=vmem, size = 0x12000, scoped, tag = 'internal scratch']
  #allocation2 [shape = 'f32[12,64]{1,0:T(8,128)}', space=vmem, size = 0x2000, scoped, tag = 'scratch operand']
  #allocation3 [shape = 'f32[14,32]{1,0:T(8,128)}', space=vmem, size = 0x2000, scoped, tag = 'scratch operand']
  %s0 = inlined_call_operand.hbm [shape: s32[2,6], index: 0, kind: input, shape index: {}]
  %s1 = inlined_call_operand.vmem [shape: s32[2,8], index: 1, kind: input, shape index: {}]
  %s2 = inlined_call_operand.vmem [shape: f32[20,1,32], index: 2, kind: input, shape index: {}]
  %s3 = inlined_call_operand.hbm [shape: f32[16,1,32], index: 3, kind: input, shape index: {}]
  %s4 = inlined_call_operand.hbm [shape: f32[64,256], index: 4, kind: input, shape index: {}]
  %s5 = inlined_call_operand.hbm [shape: f32[64,256], index: 5, kind: input, shape index: {}]
  %s6 = inlined_call_operand.hbm [shape: f32[1,256], index: 6, kind: input, shape index: {}]
  %s7 = inlined_call_operand.hbm [shape: f32[32,256], index: 7, kind: input, shape index: {}]
  %s8 = inlined_call_operand.hbm [shape: f32[64,256], index: 8, kind: input, shape index: {}]
  %s9 = inlined_call_operand.hbm [shape: f32[1,256], index: 9, kind: input, shape index: {}]
  %s10 = inlined_call_operand.hbm [shape: f32[64,128], index: 10, kind: input, shape index: {}]
  %s11 = inlined_call_operand.hbm [shape: f32[1,128], index: 11, kind: input, shape index: {}]
  %s12 = inlined_call_operand.vmem [shape: f32[8,2,128], index: 12, kind: output, shape index: {}]
  %s13 = sld [smem:[#allocation0]]
  $region102: #{seq2seq_forward.1} parent=0
    _
  %s15 = ssub.s32 1, %s13
  %s16 = scalar_select 0, %s15, %s13
  $region1: #{seq2seq_forward.1} parent=0
    #allocation4 [shape = 'u8[1024]{0}', space=smem, size = 0x400, scoped, tag = 'input window, operand 0, single buffered']
    #allocation5 [shape = 's32[1]{0}', space=sflag, size = 0x4, scoped, tag = 'scoped memory for seq2seq_forward.1']
    #allocation6 [shape = 's32[1]{0}', space=sflag, size = 0x4, scoped, tag = 'scoped memory for seq2seq_forward.1']
    #allocation7 [shape = 's32[1]{0}', space=sflag, size = 0x4, scoped, tag = 'scoped memory for seq2seq_forward.1']
    #allocation8 [shape = 'u8[1024]{0}', space=smem, size = 0x400, scoped, tag = 'input window, operand 1, single buffered']
    #allocation9 [shape = 'u8[8192]{0}', space=vmem, size = 0x2000, scoped, tag = 'input window, operand 3, single buffered']
    #allocation10 [shape = 'u8[65536]{0}', space=vmem, size = 0x10000, scoped, tag = 'input window, operand 4, single buffered']
    #allocation11 [shape = 's32[1]{0}', space=sflag, size = 0x4, scoped, tag = 'scoped memory for seq2seq_forward.1']
    #allocation12 [shape = 'u8[65536]{0}', space=vmem, size = 0x10000, scoped, tag = 'input window, operand 5, single buffered']
    #allocation13 [shape = 'u8[1024]{0}', space=vmem, size = 0x400, scoped, tag = 'input window, operand 6, single buffered']
    #allocation14 [shape = 's32[1]{0}', space=sflag, size = 0x4, scoped, tag = 'scoped memory for seq2seq_forward.1']
    #allocation15 [shape = 'u8[32768]{0}', space=vmem, size = 0x8000, scoped, tag = 'input window, operand 7, single buffered']
    #allocation16 [shape = 'u8[65536]{0}', space=vmem, size = 0x10000, scoped, tag = 'input window, operand 8, single buffered']
    #allocation17 [shape = 's32[1]{0}', space=sflag, size = 0x4, scoped, tag = 'scoped memory for seq2seq_forward.1']
    #allocation18 [shape = 'u8[1024]{0}', space=vmem, size = 0x400, scoped, tag = 'input window, operand 9, single buffered']
    #allocation19 [shape = 'u8[32768]{0}', space=vmem, size = 0x8000, scoped, tag = 'input window, operand 10, single buffered']
    #allocation20 [shape = 's32[1]{0}', space=sflag, size = 0x4, scoped, tag = 'scoped memory for seq2seq_forward.1']
    #allocation21 [shape = 'u8[512]{0}', space=vmem, size = 0x400, scoped, tag = 'input window, operand 11, single buffered']
    %17 = vsyncpa [#allocation6], 0
    %18 = vsyncpa [#allocation7], 0
    %19 = vsyncpa [#allocation5], 0
    %20 = vsyncpa [#allocation11], 0
    %21 = vsyncpa [#allocation14], 0
    %22 = vsyncpa [#allocation17], 0
    %23 = vsyncpa [#allocation20], 0
    // Predicated region
    $region2: #{seq2seq_forward.1} parent=1 // pred_check
      _
    $region3: #{seq2seq_forward.1} parent=1 // pred_check_branch
      %25 = sbr.rel (0) target = $region5
    $region4: #{seq2seq_forward.1} parent=1 // pred_region
      %s27 = ssub.s32 32, 32
      %28 = vsyncadd [#allocation6], %s27
      %31 = dma.hbm_to_smem %s0, 32, [#allocation4], [#allocation6]
    $region5: #{seq2seq_forward.1} parent=1 // pred_fallthru
      _
    // Predicated region
    $region6: #{seq2seq_forward.1} parent=1 // pred_check
      _
    $region7: #{seq2seq_forward.1} parent=1 // pred_check_branch
      %33 = sbr.rel (0) target = $region9
    $region8: #{seq2seq_forward.1} parent=1 // pred_region
      %s35 = ssub.s32 32, 32
      %36 = vsyncadd [#allocation7], %s35
      %s38 = sshll.u32 %s1, 4
      %s39 = int_to_ptr.vmem [resolvable:$true] %s38
      %41 = dma.vmem_to_smem %s39, 32, [#allocation8], [#allocation7]
    $region9: #{seq2seq_forward.1} parent=1 // pred_fallthru
      _
    // Predicated region
    $region10: #{seq2seq_forward.1} parent=1 // pred_check
      _
    $region11: #{seq2seq_forward.1} parent=1 // pred_check_branch
      %43 = sbr.rel (0) target = $region13
    $region12: #{seq2seq_forward.1} parent=1 // pred_region
      _
    $region13: #{seq2seq_forward.1} parent=1 // pred_fallthru
      _
    // Predicated region
    $region14: #{seq2seq_forward.1} parent=1 // pred_check
      _
    $region15: #{seq2seq_forward.1} parent=1 // pred_check_branch
      %45 = sbr.rel (0) target = $region17
    $region16: #{seq2seq_forward.1} parent=1 // pred_region
      %s47 = ssub.s32 256, 256
      %48 = vsyncadd [#allocation5], %s47
      %s49 = sshll.u32 [#allocation9], 4
      %s50 = int_to_ptr.vmem [resolvable:$true] %s49
      %55 = dma.hbm_to_vmem [thread:$0]  %s3, 256, %s50, [#allocation5], 16, 16, 1
    $region17: #{seq2seq_forward.1} parent=1 // pred_fallthru
      _
    // Predicated region
    $region18: #{seq2seq_forward.1} parent=1 // pred_check
      _
    $region19: #{seq2seq_forward.1} parent=1 // pred_check_branch
      %57 = sbr.rel (0) target = $region21
    $region20: #{seq2seq_forward.1} parent=1 // pred_region
      %s59 = ssub.s32 2048, 2048
      %60 = vsyncadd [#allocation11], %s59
      %s61 = sshll.u32 [#allocation10], 4
      %s62 = int_to_ptr.vmem [resolvable:$true] %s61
      %67 = dma.hbm_to_vmem [thread:$0]  %s4, 2048, %s62, [#allocation11], 256, 256, 16
    $region21: #{seq2seq_forward.1} parent=1 // pred_fallthru
      _
    // Predicated region
    $region22: #{seq2seq_forward.1} parent=1 // pred_check
      _
    $region23: #{seq2seq_forward.1} parent=1 // pred_check_branch
      %69 = sbr.rel (0) target = $region25
    $region24: #{seq2seq_forward.1} parent=1 // pred_region
      %s71 = ssub.s32 2048, 2048
      %72 = vsyncadd [#allocation11], %s71
      %s73 = sshll.u32 [#allocation12], 4
      %s74 = int_to_ptr.vmem [resolvable:$true] %s73
      %79 = dma.hbm_to_vmem [thread:$0]  %s5, 2048, %s74, [#allocation11], 256, 256, 16
    $region25: #{seq2seq_forward.1} parent=1 // pred_fallthru
      _
    // Predicated region
    $region26: #{seq2seq_forward.1} parent=1 // pred_check
      _
    $region27: #{seq2seq_forward.1} parent=1 // pred_check_branch
      %81 = sbr.rel (0) target = $region29
    $region28: #{seq2seq_forward.1} parent=1 // pred_region
      %s83 = ssub.s32 32, 32
      %84 = vsyncadd [#allocation14], %s83
      %s86 = sshll.u32 [#allocation13], 4
      %s87 = int_to_ptr.vmem [resolvable:$true] %s86
      %89 = dma.hbm_to_vmem [thread:$0]  %s6, 32, %s87, [#allocation14]
    $region29: #{seq2seq_forward.1} parent=1 // pred_fallthru
      _
    // Predicated region
    $region30: #{seq2seq_forward.1} parent=1 // pred_check
      _
    $region31: #{seq2seq_forward.1} parent=1 // pred_check_branch
      %91 = sbr.rel (0) target = $region33
    $region32: #{seq2seq_forward.1} parent=1 // pred_region
      %s93 = ssub.s32 1024, 1024
      %94 = vsyncadd [#allocation14], %s93
      %s95 = sshll.u32 [#allocation15], 4
      %s96 = int_to_ptr.vmem [resolvable:$true] %s95
      %101 = dma.hbm_to_vmem [thread:$0]  %s7, 1024, %s96, [#allocation14], 256, 256, 16
    $region33: #{seq2seq_forward.1} parent=1 // pred_fallthru
      _
    // Predicated region
    $region34: #{seq2seq_forward.1} parent=1 // pred_check
      _
    $region35: #{seq2seq_forward.1} parent=1 // pred_check_branch
      %103 = sbr.rel (0) target = $region37
    $region36: #{seq2seq_forward.1} parent=1 // pred_region
      %s105 = ssub.s32 2048, 2048
      %106 = vsyncadd [#allocation17], %s105
      %s107 = sshll.u32 [#allocation16], 4
      %s108 = int_to_ptr.vmem [resolvable:$true] %s107
      %113 = dma.hbm_to_vmem [thread:$0]  %s8, 2048, %s108, [#allocation17], 256, 256, 16
    $region37: #{seq2seq_forward.1} parent=1 // pred_fallthru
      _
    // Predicated region
    $region38: #{seq2seq_forward.1} parent=1 // pred_check
      _
    $region39: #{seq2seq_forward.1} parent=1 // pred_check_branch
      %115 = sbr.rel (0) target = $region41
    $region40: #{seq2seq_forward.1} parent=1 // pred_region
      %s117 = ssub.s32 32, 32
      %118 = vsyncadd [#allocation17], %s117
      %s120 = sshll.u32 [#allocation18], 4
      %s121 = int_to_ptr.vmem [resolvable:$true] %s120
      %123 = dma.hbm_to_vmem [thread:$0]  %s9, 32, %s121, [#allocation17]
    $region41: #{seq2seq_forward.1} parent=1 // pred_fallthru
      _
    // Predicated region
    $region42: #{seq2seq_forward.1} parent=1 // pred_check
      _
    $region43: #{seq2seq_forward.1} parent=1 // pred_check_branch
      %125 = sbr.rel (0) target = $region45
    $region44: #{seq2seq_forward.1} parent=1 // pred_region
      %s127 = ssub.s32 1024, 1024
      %128 = vsyncadd [#allocation20], %s127
      %s129 = sshll.u32 [#allocation19], 4
      %s130 = int_to_ptr.vmem [resolvable:$true] %s129
      %135 = dma.hbm_to_vmem [thread:$0]  %s10, 1024, %s130, [#allocation20], 128, 128, 8
    $region45: #{seq2seq_forward.1} parent=1 // pred_fallthru
      _
    // Predicated region
    $region46: #{seq2seq_forward.1} parent=1 // pred_check
      _
    $region47: #{seq2seq_forward.1} parent=1 // pred_check_branch
      %137 = sbr.rel (0) target = $region49
    $region48: #{seq2seq_forward.1} parent=1 // pred_region
      %s139 = ssub.s32 16, 16
      %140 = vsyncadd [#allocation20], %s139
      %s142 = sshll.u32 [#allocation21], 4
      %s143 = int_to_ptr.vmem [resolvable:$true] %s142
      %145 = dma.hbm_to_vmem [thread:$0]  %s11, 16, %s143, [#allocation20]
    $region49: #{seq2seq_forward.1} parent=1 // pred_fallthru
      _
    // Predicated region
    $region50: #{seq2seq_forward.1} parent=1 // pred_check
      _
    $region51: #{seq2seq_forward.1} parent=1 // pred_check_branch
      %147 = sbr.rel (0) target = $region53
    $region52: #{seq2seq_forward.1} parent=1 // pred_region
      %148 = dma.done [#allocation6], 32
    $region53: #{seq2seq_forward.1} parent=1 // pred_fallthru
      _
    // Predicated region
    $region54: #{seq2seq_forward.1} parent=1 // pred_check
      _
    $region55: #{seq2seq_forward.1} parent=1 // pred_check_branch
      %150 = sbr.rel (0) target = $region57
    $region56: #{seq2seq_forward.1} parent=1 // pred_region
      %151 = dma.done [#allocation7], 32
    $region57: #{seq2seq_forward.1} parent=1 // pred_fallthru
      _
    // Predicated region
    $region58: #{seq2seq_forward.1} parent=1 // pred_check
      _
    $region59: #{seq2seq_forward.1} parent=1 // pred_check_branch
      %153 = sbr.rel (0) target = $region61
    $region60: #{seq2seq_forward.1} parent=1 // pred_region
      %154 = dma.done [#allocation5], 256
    $region61: #{seq2seq_forward.1} parent=1 // pred_fallthru
      _
    // Predicated region
    $region62: #{seq2seq_forward.1} parent=1 // pred_check
      _
    $region63: #{seq2seq_forward.1} parent=1 // pred_check_branch
      %156 = sbr.rel (0) target = $region65
    $region64: #{seq2seq_forward.1} parent=1 // pred_region
      %157 = dma.done [#allocation11], 2048
    $region65: #{seq2seq_forward.1} parent=1 // pred_fallthru
      _
    // Predicated region
    $region66: #{seq2seq_forward.1} parent=1 // pred_check
      _
    $region67: #{seq2seq_forward.1} parent=1 // pred_check_branch
      %159 = sbr.rel (0) target = $region69
    $region68: #{seq2seq_forward.1} parent=1 // pred_region
      %160 = dma.done [#allocation11], 2048
    $region69: #{seq2seq_forward.1} parent=1 // pred_fallthru
      _
    // Predicated region
    $region70: #{seq2seq_forward.1} parent=1 // pred_check
      _
    $region71: #{seq2seq_forward.1} parent=1 // pred_check_branch
      %162 = sbr.rel (0) target = $region73
    $region72: #{seq2seq_forward.1} parent=1 // pred_region
      %163 = dma.done [#allocation14], 32
    $region73: #{seq2seq_forward.1} parent=1 // pred_fallthru
      _
    // Predicated region
    $region74: #{seq2seq_forward.1} parent=1 // pred_check
      _
    $region75: #{seq2seq_forward.1} parent=1 // pred_check_branch
      %165 = sbr.rel (0) target = $region77
    $region76: #{seq2seq_forward.1} parent=1 // pred_region
      %166 = dma.done [#allocation14], 1024
    $region77: #{seq2seq_forward.1} parent=1 // pred_fallthru
      _
    // Predicated region
    $region78: #{seq2seq_forward.1} parent=1 // pred_check
      _
    $region79: #{seq2seq_forward.1} parent=1 // pred_check_branch
      %168 = sbr.rel (0) target = $region81
    $region80: #{seq2seq_forward.1} parent=1 // pred_region
      %169 = dma.done [#allocation17], 2048
    $region81: #{seq2seq_forward.1} parent=1 // pred_fallthru
      _
    // Predicated region
    $region82: #{seq2seq_forward.1} parent=1 // pred_check
      _
    $region83: #{seq2seq_forward.1} parent=1 // pred_check_branch
      %171 = sbr.rel (0) target = $region85
    $region84: #{seq2seq_forward.1} parent=1 // pred_region
      %172 = dma.done [#allocation17], 32
    $region85: #{seq2seq_forward.1} parent=1 // pred_fallthru
      _
    // Predicated region
    $region86: #{seq2seq_forward.1} parent=1 // pred_check
      _
    $region87: #{seq2seq_forward.1} parent=1 // pred_check_branch
      %174 = sbr.rel (0) target = $region89
    $region88: #{seq2seq_forward.1} parent=1 // pred_region
      %175 = dma.done [#allocation20], 1024
    $region89: #{seq2seq_forward.1} parent=1 // pred_fallthru
      _
    // Predicated region
    $region90: #{seq2seq_forward.1} parent=1 // pred_check
      _
    $region91: #{seq2seq_forward.1} parent=1 // pred_check_branch
      %177 = sbr.rel (0) target = $region93
    $region92: #{seq2seq_forward.1} parent=1 // pred_region
      %178 = dma.done [#allocation20], 16
    $region93: #{seq2seq_forward.1} parent=1 // pred_fallthru
      _
    %179 = sfence
    %v180 = vlaneseq
    %v181 = vand.u32 %v180, 127
    %vm182 = vcmp.eq.s32.totalorder %v181, 1
    %v183 = vsel %vm182, 1, 0
    %v184 = vcvt.s32.f32 %v183
    %185 = vst [vmem:[%s12] sm:$0x3] %v184
    %s186 = sld [smem:[#allocation4]]
    %s187 = scalar_lea.vmem %s2, %s186
    %v188 = vld [vmem:[%s187] sm:$0x1]
    %s189 = sld [smem:[#allocation4 + $0x5]]
    %s190 = scalar_lea.vmem %s2, %s189
    %v191 = vld [vmem:[%s190] sm:$0x1]
    %v193 = vlaneseq
    %v194 = vshrl.u32 %v193, 7
    %v195 = vsub.s32 0, %v194
    %v196 = vrot.slane %v191, %v195
    %197 = vrot.lane.b32.xlu0 %v196, 32
    %v198 = vpop.permute.xlu0 %197
    %vm200 = vcmask 261120
    %v201 = vsel %vm200, %v188, %v198
    %vm202 = vcmask 516096
    %203 = vst.msk [vmem:[#allocation2] sm:$0x1] %vm202, %v201
    %s204 = sld [smem:[#allocation4 + $0x80]]
    %s205 = scalar_lea.vmem %s2, %s204
    %v206 = vld [vmem:[%s205] sm:$0x1]
    %s207 = sld [smem:[#allocation4 + $0x85]]
    %s208 = scalar_lea.vmem %s2, %s207
    %v209 = vld [vmem:[%s208] sm:$0x1]
    %v211 = vlaneseq
    %v212 = vshrl.u32 %v211, 7
    %v213 = vsub.s32 0, %v212
    %v214 = vrot.slane %v209, %v213
    %215 = vrot.lane.b32.xlu0 %v214, 32
    %v216 = vpop.permute.xlu0 %215
    %v218 = vsel %vm200, %v206, %v216
    %219 = vst.msk [vmem:[#allocation2 + $0x1] sm:$0x1] %vm202, %v218
    %s220 = sld [smem:[#allocation4 + $0x1]]
    %s221 = scalar_lea.vmem %s2, %s220
    %v222 = vld [vmem:[%s221] sm:$0x1]
    %s223 = sld [smem:[#allocation4 + $0x4]]
    %s224 = scalar_lea.vmem %s2, %s223
    %v225 = vld [vmem:[%s224] sm:$0x1]
    %v227 = vlaneseq
    %v228 = vshrl.u32 %v227, 7
    %v229 = vsub.s32 0, %v228
    %v230 = vrot.slane %v225, %v229
    %231 = vrot.lane.b32.xlu0 %v230, 32
    %v232 = vpop.permute.xlu0 %231
    %v234 = vsel %vm200, %v222, %v232
    %235 = vst.msk [vmem:[#allocation2 + $0x2] sm:$0x1] %vm202, %v234
    %s236 = sld [smem:[#allocation4 + $0x81]]
    %s237 = scalar_lea.vmem %s2, %s236
    %v238 = vld [vmem:[%s237] sm:$0x1]
    %s239 = sld [smem:[#allocation4 + $0x84]]
    %s240 = scalar_lea.vmem %s2, %s239
    %v241 = vld [vmem:[%s240] sm:$0x1]
    %v243 = vlaneseq
    %v244 = vshrl.u32 %v243, 7
    %v245 = vsub.s32 0, %v244
    %v246 = vrot.slane %v241, %v245
    %247 = vrot.lane.b32.xlu0 %v246, 32
    %v248 = vpop.permute.xlu0 %247
    %v250 = vsel %vm200, %v238, %v248
    %251 = vst.msk [vmem:[#allocation2 + $0x3] sm:$0x1] %vm202, %v250
    %s252 = sld [smem:[#allocation4 + $0x2]]
    %s253 = scalar_lea.vmem %s2, %s252
    %v254 = vld [vmem:[%s253] sm:$0x1]
    %s255 = sld [smem:[#allocation4 + $0x3]]
    %s256 = scalar_lea.vmem %s2, %s255
    %v257 = vld [vmem:[%s256] sm:$0x1]
    %v259 = vlaneseq
    %v260 = vshrl.u32 %v259, 7
    %v261 = vsub.s32 0, %v260
    %v262 = vrot.slane %v257, %v261
    %263 = vrot.lane.b32.xlu0 %v262, 32
    %v264 = vpop.permute.xlu0 %263
    %v266 = vsel %vm200, %v254, %v264
    %267 = vst.msk [vmem:[#allocation2 + $0x4] sm:$0x1] %vm202, %v266
    %s268 = sld [smem:[#allocation4 + $0x82]]
    %s269 = scalar_lea.vmem %s2, %s268
    %v270 = vld [vmem:[%s269] sm:$0x1]
    %s271 = sld [smem:[#allocation4 + $0x83]]
    %s272 = scalar_lea.vmem %s2, %s271
    %v273 = vld [vmem:[%s272] sm:$0x1]
    %v275 = vlaneseq
    %v276 = vshrl.u32 %v275, 7
    %v277 = vsub.s32 0, %v276
    %v278 = vrot.slane %v273, %v277
    %279 = vrot.lane.b32.xlu0 %v278, 32
    %v280 = vpop.permute.xlu0 %279
    %v282 = vsel %vm200, %v270, %v280
    %283 = vst.msk [vmem:[#allocation2 + $0x5] sm:$0x1] %vm202, %v282
    %s284 = sld [smem:[#allocation4 + $0x3]]
    %s285 = scalar_lea.vmem %s2, %s284
    %v286 = vld [vmem:[%s285] sm:$0x1]
    %s287 = sld [smem:[#allocation4 + $0x2]]
    %s288 = scalar_lea.vmem %s2, %s287
    %v289 = vld [vmem:[%s288] sm:$0x1]
    %v291 = vlaneseq
    %v292 = vshrl.u32 %v291, 7
    %v293 = vsub.s32 0, %v292
    %v294 = vrot.slane %v289, %v293
    %295 = vrot.lane.b32.xlu0 %v294, 32
    %v296 = vpop.permute.xlu0 %295
    %v298 = vsel %vm200, %v286, %v296
    %299 = vst.msk [vmem:[#allocation2 + $0x6] sm:$0x1] %vm202, %v298
    %s300 = sld [smem:[#allocation4 + $0x83]]
    %s301 = scalar_lea.vmem %s2, %s300
    %v302 = vld [vmem:[%s301] sm:$0x1]
    %s303 = sld [smem:[#allocation4 + $0x82]]
    %s304 = scalar_lea.vmem %s2, %s303
    %v305 = vld [vmem:[%s304] sm:$0x1]
    %v307 = vlaneseq
    %v308 = vshrl.u32 %v307, 7
    %v309 = vsub.s32 0, %v308
    %v310 = vrot.slane %v305, %v309
    %311 = vrot.lane.b32.xlu0 %v310, 32
    %v312 = vpop.permute.xlu0 %311
    %v314 = vsel %vm200, %v302, %v312
    %315 = vst.msk [vmem:[#allocation2 + $0x7] sm:$0x1] %vm202, %v314
    %s316 = sld [smem:[#allocation4 + $0x4]]
    %s317 = scalar_lea.vmem %s2, %s316
    %v318 = vld [vmem:[%s317] sm:$0x1]
    %s319 = sld [smem:[#allocation4 + $0x1]]
    %s320 = scalar_lea.vmem %s2, %s319
    %v321 = vld [vmem:[%s320] sm:$0x1]
    %v323 = vlaneseq
    %v324 = vshrl.u32 %v323, 7
    %v325 = vsub.s32 0, %v324
    %v326 = vrot.slane %v321, %v325
    %327 = vrot.lane.b32.xlu0 %v326, 32
    %v328 = vpop.permute.xlu0 %327
    %v330 = vsel %vm200, %v318, %v328
    %331 = vst.msk [vmem:[#allocation2 + $0x8] sm:$0x1] %vm202, %v330
    %s332 = sld [smem:[#allocation4 + $0x84]]
    %s333 = scalar_lea.vmem %s2, %s332
    %v334 = vld [vmem:[%s333] sm:$0x1]
    %s335 = sld [smem:[#allocation4 + $0x81]]
    %s336 = scalar_lea.vmem %s2, %s335
    %v337 = vld [vmem:[%s336] sm:$0x1]
    %v339 = vlaneseq
    %v340 = vshrl.u32 %v339, 7
    %v341 = vsub.s32 0, %v340
    %v342 = vrot.slane %v337, %v341
    %343 = vrot.lane.b32.xlu0 %v342, 32
    %v344 = vpop.permute.xlu0 %343
    %v346 = vsel %vm200, %v334, %v344
    %347 = vst.msk [vmem:[#allocation2 + $0x9] sm:$0x1] %vm202, %v346
    %s348 = sld [smem:[#allocation4 + $0x5]]
    %s349 = scalar_lea.vmem %s2, %s348
    %v350 = vld [vmem:[%s349] sm:$0x1]
    %s351 = sld [smem:[#allocation4]]
    %s352 = scalar_lea.vmem %s2, %s351
    %v353 = vld [vmem:[%s352] sm:$0x1]
    %v355 = vlaneseq
    %v356 = vshrl.u32 %v355, 7
    %v357 = vsub.s32 0, %v356
    %v358 = vrot.slane %v353, %v357
    %359 = vrot.lane.b32.xlu0 %v358, 32
    %v360 = vpop.permute.xlu0 %359
    %v362 = vsel %vm200, %v350, %v360
    %363 = vst.msk [vmem:[#allocation2 + $0xa] sm:$0x1] %vm202, %v362
    %s364 = sld [smem:[#allocation4 + $0x85]]
    %s365 = scalar_lea.vmem %s2, %s364
    %v366 = vld [vmem:[%s365] sm:$0x1]
    %s367 = sld [smem:[#allocation4 + $0x80]]
    %s368 = scalar_lea.vmem %s2, %s367
    %v369 = vld [vmem:[%s368] sm:$0x1]
    %v371 = vlaneseq
    %v372 = vshrl.u32 %v371, 7
    %v373 = vsub.s32 0, %v372
    %v374 = vrot.slane %v369, %v373
    %375 = vrot.lane.b32.xlu0 %v374, 32
    %v376 = vpop.permute.xlu0 %375
    %v378 = vsel %vm200, %v366, %v376
    %379 = vst.msk [vmem:[#allocation2 + $0xb] sm:$0x1] %vm202, %v378
    %s380 = sld [smem:[#allocation8]]
    %s381 = scalar_lea.vmem [#allocation9], %s380
    %v382 = vld [vmem:[%s381] sm:$0x1]
    %vm383 = vcmask 253952
    %384 = vst.msk [vmem:[#allocation3] sm:$0x1] %vm383, %v382
    %s385 = sld [smem:[#allocation8 + $0x80]]
    %s386 = scalar_lea.vmem [#allocation9], %s385
    %v387 = vld [vmem:[%s386] sm:$0x1]
    %388 = vst.msk [vmem:[#allocation3 + $0x1] sm:$0x1] %vm383, %v387
    %s389 = sld [smem:[#allocation8 + $0x1]]
    %s390 = scalar_lea.vmem [#allocation9], %s389
    %v391 = vld [vmem:[%s390] sm:$0x1]
    %392 = vst.msk [vmem:[#allocation3 + $0x2] sm:$0x1] %vm383, %v391
    %s393 = sld [smem:[#allocation8 + $0x81]]
    %s394 = scalar_lea.vmem [#allocation9], %s393
    %v395 = vld [vmem:[%s394] sm:$0x1]
    %396 = vst.msk [vmem:[#allocation3 + $0x3] sm:$0x1] %vm383, %v395
    %s397 = sld [smem:[#allocation8 + $0x2]]
    %s398 = scalar_lea.vmem [#allocation9], %s397
    %v399 = vld [vmem:[%s398] sm:$0x1]
    %400 = vst.msk [vmem:[#allocation3 + $0x4] sm:$0x1] %vm383, %v399
    %s401 = sld [smem:[#allocation8 + $0x82]]
    %s402 = scalar_lea.vmem [#allocation9], %s401
    %v403 = vld [vmem:[%s402] sm:$0x1]
    %404 = vst.msk [vmem:[#allocation3 + $0x5] sm:$0x1] %vm383, %v403
    %s405 = sld [smem:[#allocation8 + $0x3]]
    %s406 = scalar_lea.vmem [#allocation9], %s405
    %v407 = vld [vmem:[%s406] sm:$0x1]
    %408 = vst.msk [vmem:[#allocation3 + $0x6] sm:$0x1] %vm383, %v407
    %s409 = sld [smem:[#allocation8 + $0x83]]
    %s410 = scalar_lea.vmem [#allocation9], %s409
    %v411 = vld [vmem:[%s410] sm:$0x1]
    %412 = vst.msk [vmem:[#allocation3 + $0x7] sm:$0x1] %vm383, %v411
    %s413 = sld [smem:[#allocation8 + $0x4]]
    %s414 = scalar_lea.vmem [#allocation9], %s413
    %v415 = vld [vmem:[%s414] sm:$0x1]
    %416 = vst.msk [vmem:[#allocation3 + $0x8] sm:$0x1] %vm383, %v415
    %s417 = sld [smem:[#allocation8 + $0x84]]
    %s418 = scalar_lea.vmem [#allocation9], %s417
    %v419 = vld [vmem:[%s418] sm:$0x1]
    %420 = vst.msk [vmem:[#allocation3 + $0x9] sm:$0x1] %vm383, %v419
    %s421 = sld [smem:[#allocation8 + $0x5]]
    %s422 = scalar_lea.vmem [#allocation9], %s421
    %v423 = vld [vmem:[%s422] sm:$0x1]
    %424 = vst.msk [vmem:[#allocation3 + $0xa] sm:$0x1] %vm383, %v423
    %s425 = sld [smem:[#allocation8 + $0x85]]
    %s426 = scalar_lea.vmem [#allocation9], %s425
    %v427 = vld [vmem:[%s426] sm:$0x1]
    %428 = vst.msk [vmem:[#allocation3 + $0xb] sm:$0x1] %vm383, %v427
    %s429 = sld [smem:[#allocation8 + $0x6]]
    %s430 = scalar_lea.vmem [#allocation9], %s429
    %v431 = vld [vmem:[%s430] sm:$0x1]
    %432 = vst.msk [vmem:[#allocation3 + $0xc] sm:$0x1] %vm383, %v431
    %s433 = sld [smem:[#allocation8 + $0x86]]
    %s434 = scalar_lea.vmem [#allocation9], %s433
    %v435 = vld [vmem:[%s434] sm:$0x1]
    %436 = vst.msk [vmem:[#allocation3 + $0xd] sm:$0x1] %vm383, %v435
    %v437 = vld [vmem:[#allocation2] sm:$0xff]
    %v438 = vld [vmem:[#allocation2 + $0x8] sm:$0xf]
    %v439 = vld [vmem:[#allocation10] sm:$0xff]
    %v440 = vld [vmem:[#allocation10 + $0x8] sm:$0xff]
    %v441 = vld [vmem:[#allocation10 + $0x10] sm:$0xff]
    %v442 = vld [vmem:[#allocation10 + $0x18] sm:$0xff]
    %v443 = vld [vmem:[#allocation10 + $0x20] sm:$0xff]
    %v444 = vld [vmem:[#allocation10 + $0x28] sm:$0xff]
    %v445 = vld [vmem:[#allocation10 + $0x30] sm:$0xff]
    %v446 = vld [vmem:[#allocation10 + $0x38] sm:$0xff]
    %v447 = vld [vmem:[#allocation10 + $0x40] sm:$0xff]
    %v448 = vld [vmem:[#allocation10 + $0x48] sm:$0xff]
    %v449 = vld [vmem:[#allocation10 + $0x50] sm:$0xff]
    %v450 = vld [vmem:[#allocation10 + $0x58] sm:$0xff]
    %v451 = vld [vmem:[#allocation10 + $0x60] sm:$0xff]
    %v452 = vld [vmem:[#allocation10 + $0x68] sm:$0xff]
    %v453 = vld [vmem:[#allocation10 + $0x70] sm:$0xff]
    %v454 = vld [vmem:[#allocation10 + $0x78] sm:$0xff]
    %v455 = vld [vmem:[#allocation13] sm:$0x3]
    %v457 = vlaneseq
    %v458 = vshrl.u32 %v457, 7
    %v459 = vsub.s32 0, %v458
    %v460 = vrot.slane %v455, %v459
    %v461 = vlaneseq
    %v462 = vshrl.u32 %v461, 7
    %v463 = vsub.s32 1, %v462
    %v464 = vrot.slane %v455, %v463
    %vm467 = vcmask 523264
    %v469 = vsel %vm467, %v437, 0
    %v472 = vsel %vm467, %v438, 0
    %474 = vmatprep.subr.mxu0 %v440
    %475 = vmatpush1.msra.mxu0 %v439
    %476 = vmatprep.subr.mxu0 %v442
    %477 = vmatpush1.msra.mxu0 %v441
    %478 = vmatprep.subr.mxu0 %v444
    %479 = vmatpush1.msra.mxu0 %v443
    %480 = vmatprep.subr.mxu0 %v446
    %481 = vmatpush1.msra.mxu0 %v445
    %482 = vmatprep.subr.mxu0 %v448
    %483 = vmatpush1.msra.mxu0 %v447
    %484 = vmatprep.subr.mxu0 %v450
    %485 = vmatpush1.msra.mxu0 %v449
    %486 = vmatprep.subr.mxu0 %v452
    %487 = vmatpush1.msra.mxu0 %v451
    %488 = vmatprep.subr.mxu0 %v454
    %489 = vmatpush1.msra.mxu0 %v453
    %490 = vmatprep.subr.mxu0 0.0
    %491 = vmatpush1.msra.mxu0 0.0
    %492 = vmatprep.subr.mxu0 0.0
    %493 = vmatpush1.msra.mxu0 0.0
    %494 = vmatprep.subr.mxu0 0.0
    %495 = vmatpush1.msra.mxu0 0.0
    %496 = vmatprep.subr.mxu0 0.0
    %497 = vmatpush1.msra.mxu0 0.0
    %498 = vmatprep.subr.mxu0 0.0
    %499 = vmatpush1.msra.mxu0 0.0
    %500 = vmatprep.subr.mxu0 0.0
    %501 = vmatpush1.msra.mxu0 0.0
    %502 = vmatprep.subr.mxu0 0.0
    %503 = vmatpush1.msra.mxu0 0.0
    %504 = vmatprep.subr.mxu0 0.0
    %505 = vmatpush1.msra.mxu0 0.0
    %506 = vmatprep.subr.mxu0 0.0
    %507 = vmatpush1.msra.mxu0 0.0
    %508 = vmatprep.subr.mxu0 0.0
    %509 = vmatpush1.msra.mxu0 0.0
    %510 = vmatprep.subr.mxu0 0.0
    %511 = vmatpush1.msra.mxu0 0.0
    %512 = vmatprep.subr.mxu0 0.0
    %513 = vmatpush1.msra.mxu0 0.0
    %514 = vmatprep.subr.mxu0 0.0
    %515 = vmatpush1.msra.mxu0 0.0
    %516 = vmatprep.subr.mxu0 0.0
    %517 = vmatpush1.msra.mxu0 0.0
    %518 = vmatprep.subr.mxu0 0.0
    %519 = vmatpush1.msra.mxu0 0.0
    %520 = vmatprep.subr.mxu0 0.0
    %521 = vmatpush1.msra.mxu0 0.0
    %522 = vmatprep.subr.mxu0 0.0
    %523 = vmatpush1.msra.mxu0 0.0
    %524 = vmatprep.subr.mxu0 0.0
    %525 = vmatpush1.msra.mxu0 0.0
    %526 = vmatprep.subr.mxu0 0.0
    %527 = vmatpush1.msra.mxu0 0.0
    %528 = vmatprep.subr.mxu0 0.0
    %529 = vmatpush1.msra.mxu0 0.0
    %530 = vmatprep.subr.mxu0 0.0
    %531 = vmatpush1.msra.mxu0 0.0
    %532 = vmatprep.subr.mxu0 0.0
    %533 = vmatpush1.msra.mxu0 0.0
    %534 = vmatprep.subr.mxu0 0.0
    %535 = vmatpush1.msra.mxu0 0.0
    %536 = vmatprep.subr.mxu0 0.0
    %537 = vmatpush1.msra.mxu0 0.0
    %538 = vmatprep.mubr.f32.mxu0 0.0
    %539 = vmatmul.mubr.f32.gmra.mrb[0].mxu0 %v469
    %v540 = vpop.f32.mrb[0].mxu0
    %v541 = vadd.f32 %v460, %v540
    %v542 = vpop.f32.mrb[0].mxu0
    %v543 = vadd.f32 %v464, %v542
    %544 = vmatprep.mubr.f32.mxu0 0.0
    %545 = vmatmul.mubr.f32.gmra.mrb[0].mxu0 %v472
    %v546 = vpop.f32.mrb[0].mxu0
    %v547 = vadd.f32 %v460, %v546
    %v548 = vpop.f32.mrb[0].mxu0
    %v549 = vadd.f32 %v464, %v548
    %550 = vdwg.mxu0
    %v551 = vld [vmem:[#allocation3] sm:$0xff]
    %v552 = vld [vmem:[#allocation3 + $0x8] sm:$0x3f]
    %v553 = vmax.f32 %v551, 0.0
    %v554 = vmax.f32 %v552, 0.0
    %v555 = vld [vmem:[#allocation15] sm:$0xff]
    %v556 = vld [vmem:[#allocation15 + $0x8] sm:$0xff]
    %v557 = vld [vmem:[#allocation15 + $0x10] sm:$0xff]
    %v558 = vld [vmem:[#allocation15 + $0x18] sm:$0xff]
    %v559 = vld [vmem:[#allocation15 + $0x20] sm:$0xff]
    %v560 = vld [vmem:[#allocation15 + $0x28] sm:$0xff]
    %v561 = vld [vmem:[#allocation15 + $0x30] sm:$0xff]
    %v562 = vld [vmem:[#allocation15 + $0x38] sm:$0xff]
    %v563 = vld [vmem:[#allocation18] sm:$0x3]
    %v565 = vlaneseq
    %v566 = vshrl.u32 %v565, 7
    %v567 = vsub.s32 0, %v566
    %v568 = vrot.slane %v563, %v567
    %v569 = vlaneseq
    %v570 = vshrl.u32 %v569, 7
    %v571 = vsub.s32 1, %v570
    %v572 = vrot.slane %v563, %v571
    %v576 = vsel %vm200, %v553, 0
    %v579 = vsel %vm200, %v554, 0
    %581 = vmatprep.subr.mxu0 %v556
    %582 = vmatpush1.msra.mxu0 %v555
    %583 = vmatprep.subr.mxu0 %v558
    %584 = vmatpush1.msra.mxu0 %v557
    %585 = vmatprep.subr.mxu0 %v560
    %586 = vmatpush1.msra.mxu0 %v559
    %587 = vmatprep.subr.mxu0 %v562
    %588 = vmatpush1.msra.mxu0 %v561
    %589 = vmatprep.subr.mxu0 0.0
    %590 = vmatpush1.msra.mxu0 0.0
    %591 = vmatprep.subr.mxu0 0.0
    %592 = vmatpush1.msra.mxu0 0.0
    %593 = vmatprep.subr.mxu0 0.0
    %594 = vmatpush1.msra.mxu0 0.0
    %595 = vmatprep.subr.mxu0 0.0
    %596 = vmatpush1.msra.mxu0 0.0
    %597 = vmatprep.subr.mxu0 0.0
    %598 = vmatpush1.msra.mxu0 0.0
    %599 = vmatprep.subr.mxu0 0.0
    %600 = vmatpush1.msra.mxu0 0.0
    %601 = vmatprep.subr.mxu0 0.0
    %602 = vmatpush1.msra.mxu0 0.0
    %603 = vmatprep.subr.mxu0 0.0
    %604 = vmatpush1.msra.mxu0 0.0
    %605 = vmatprep.subr.mxu0 0.0
    %606 = vmatpush1.msra.mxu0 0.0
    %607 = vmatprep.subr.mxu0 0.0
    %608 = vmatpush1.msra.mxu0 0.0
    %609 = vmatprep.subr.mxu0 0.0
    %610 = vmatpush1.msra.mxu0 0.0
    %611 = vmatprep.subr.mxu0 0.0
    %612 = vmatpush1.msra.mxu0 0.0
    %613 = vmatprep.subr.mxu0 0.0
    %614 = vmatpush1.msra.mxu0 0.0
    %615 = vmatprep.subr.mxu0 0.0
    %616 = vmatpush1.msra.mxu0 0.0
    %617 = vmatprep.subr.mxu0 0.0
    %618 = vmatpush1.msra.mxu0 0.0
    %619 = vmatprep.subr.mxu0 0.0
    %620 = vmatpush1.msra.mxu0 0.0
    %621 = vmatprep.subr.mxu0 0.0
    %622 = vmatpush1.msra.mxu0 0.0
    %623 = vmatprep.subr.mxu0 0.0
    %624 = vmatpush1.msra.mxu0 0.0
    %625 = vmatprep.subr.mxu0 0.0
    %626 = vmatpush1.msra.mxu0 0.0
    %627 = vmatprep.subr.mxu0 0.0
    %628 = vmatpush1.msra.mxu0 0.0
    %629 = vmatprep.subr.mxu0 0.0
    %630 = vmatpush1.msra.mxu0 0.0
    %631 = vmatprep.subr.mxu0 0.0
    %632 = vmatpush1.msra.mxu0 0.0
    %633 = vmatprep.subr.mxu0 0.0
    %634 = vmatpush1.msra.mxu0 0.0
    %635 = vmatprep.subr.mxu0 0.0
    %636 = vmatpush1.msra.mxu0 0.0
    %637 = vmatprep.subr.mxu0 0.0
    %638 = vmatpush1.msra.mxu0 0.0
    %639 = vmatprep.subr.mxu0 0.0
    %640 = vmatpush1.msra.mxu0 0.0
    %641 = vmatprep.subr.mxu0 0.0
    %642 = vmatpush1.msra.mxu0 0.0
    %643 = vmatprep.subr.mxu0 0.0
    %644 = vmatpush1.msra.mxu0 0.0
    %645 = vmatprep.mubr.f32.mxu0 0.0
    %646 = vmatmul.mubr.f32.gmra.mrb[0].mxu0 %v576
    %v647 = vpop.f32.mrb[0].mxu0
    %v648 = vadd.f32 %v568, %v647
    %v649 = vpop.f32.mrb[0].mxu0
    %v650 = vadd.f32 %v572, %v649
    %651 = vmatprep.mubr.f32.mxu0 0.0
    %652 = vmatmul.mubr.f32.gmra.mrb[0].mxu0 %v579
    %v653 = vpop.f32.mrb[0].mxu0
    %v654 = vadd.f32 %v568, %v653
    %v655 = vpop.f32.mrb[0].mxu0
    %v656 = vadd.f32 %v572, %v655
    %657 = vdwg.mxu0
    %v658 = vld [vmem:[#allocation12] sm:$0xff]
    %v659 = vld [vmem:[#allocation12 + $0x8] sm:$0xff]
    %v660 = vld [vmem:[#allocation12 + $0x10] sm:$0xff]
    %v661 = vld [vmem:[#allocation12 + $0x18] sm:$0xff]
    %v662 = vld [vmem:[#allocation12 + $0x20] sm:$0xff]
    %v663 = vld [vmem:[#allocation12 + $0x28] sm:$0xff]
    %v664 = vld [vmem:[#allocation12 + $0x30] sm:$0xff]
    %v665 = vld [vmem:[#allocation12 + $0x38] sm:$0xff]
    %v666 = vld [vmem:[#allocation12 + $0x40] sm:$0xff]
    %v667 = vld [vmem:[#allocation12 + $0x48] sm:$0xff]
    %v668 = vld [vmem:[#allocation12 + $0x50] sm:$0xff]
    %v669 = vld [vmem:[#allocation12 + $0x58] sm:$0xff]
    %v670 = vld [vmem:[#allocation12 + $0x60] sm:$0xff]
    %v671 = vld [vmem:[#allocation12 + $0x68] sm:$0xff]
    %v672 = vld [vmem:[#allocation12 + $0x70] sm:$0xff]
    %v673 = vld [vmem:[#allocation12 + $0x78] sm:$0xff]
    %v675 = vsel %vm467, 0.0, 0
    %677 = vmatprep.subr.mxu0 %v659
    %678 = vmatpush1.msra.mxu0 %v658
    %679 = vmatprep.subr.mxu0 %v661
    %680 = vmatpush1.msra.mxu0 %v660
    %681 = vmatprep.subr.mxu0 %v663
    %682 = vmatpush1.msra.mxu0 %v662
    %683 = vmatprep.subr.mxu0 %v665
    %684 = vmatpush1.msra.mxu0 %v664
    %685 = vmatprep.subr.mxu0 %v667
    %686 = vmatpush1.msra.mxu0 %v666
    %687 = vmatprep.subr.mxu0 %v669
    %688 = vmatpush1.msra.mxu0 %v668
    %689 = vmatprep.subr.mxu0 %v671
    %690 = vmatpush1.msra.mxu0 %v670
    %691 = vmatprep.subr.mxu0 %v673
    %692 = vmatpush1.msra.mxu0 %v672
    %693 = vmatprep.subr.mxu0 0.0
    %694 = vmatpush1.msra.mxu0 0.0
    %695 = vmatprep.subr.mxu0 0.0
    %696 = vmatpush1.msra.mxu0 0.0
    %697 = vmatprep.subr.mxu0 0.0
    %698 = vmatpush1.msra.mxu0 0.0
    %699 = vmatprep.subr.mxu0 0.0
    %700 = vmatpush1.msra.mxu0 0.0
    %701 = vmatprep.subr.mxu0 0.0
    %702 = vmatpush1.msra.mxu0 0.0
    %703 = vmatprep.subr.mxu0 0.0
    %704 = vmatpush1.msra.mxu0 0.0
    %705 = vmatprep.subr.mxu0 0.0
    %706 = vmatpush1.msra.mxu0 0.0
    %707 = vmatprep.subr.mxu0 0.0
    %708 = vmatpush1.msra.mxu0 0.0
    %709 = vmatprep.subr.mxu0 0.0
    %710 = vmatpush1.msra.mxu0 0.0
    %711 = vmatprep.subr.mxu0 0.0
    %712 = vmatpush1.msra.mxu0 0.0
    %713 = vmatprep.subr.mxu0 0.0
    %714 = vmatpush1.msra.mxu0 0.0
    %715 = vmatprep.subr.mxu0 0.0
    %716 = vmatpush1.msra.mxu0 0.0
    %717 = vmatprep.subr.mxu0 0.0
    %718 = vmatpush1.msra.mxu0 0.0
    %719 = vmatprep.subr.mxu0 0.0
    %720 = vmatpush1.msra.mxu0 0.0
    %721 = vmatprep.subr.mxu0 0.0
    %722 = vmatpush1.msra.mxu0 0.0
    %723 = vmatprep.subr.mxu0 0.0
    %724 = vmatpush1.msra.mxu0 0.0
    %725 = vmatprep.subr.mxu0 0.0
    %726 = vmatpush1.msra.mxu0 0.0
    %727 = vmatprep.subr.mxu0 0.0
    %728 = vmatpush1.msra.mxu0 0.0
    %729 = vmatprep.subr.mxu0 0.0
    %730 = vmatpush1.msra.mxu0 0.0
    %731 = vmatprep.subr.mxu0 0.0
    %732 = vmatpush1.msra.mxu0 0.0
    %733 = vmatprep.subr.mxu0 0.0
    %734 = vmatpush1.msra.mxu0 0.0
    %735 = vmatprep.subr.mxu0 0.0
    %736 = vmatpush1.msra.mxu0 0.0
    %737 = vmatprep.subr.mxu0 0.0
    %738 = vmatpush1.msra.mxu0 0.0
    %739 = vmatprep.subr.mxu0 0.0
    %740 = vmatpush1.msra.mxu0 0.0
    %741 = vmatprep.mubr.f32.mxu0 0.0
    %742 = vmatmul.mubr.f32.gmra.mrb[0].mxu0 %v675
    %v743 = vpop.f32.mrb[0].mxu0
    %v744 = vadd.f32 0.0, %v743
    %v745 = vpop.f32.mrb[0].mxu0
    %v746 = vadd.f32 0.0, %v745
    %747 = vdwg.mxu0
    %v748 = vadd.f32 %v541, %v744
    %v749 = vadd.f32 %v543, %v746
    %v750 = vxor.u32 %v748, 2147483648
    %v751 = vxor.u32 %v749, 2147483648
    %v752 = vmul.f32 %v750, 1.442695
    %v753 = vpow.pop %v752
    %v754 = vmul.f32 %v751, 1.442695
    %v755 = vpow.pop %v754
    %v756 = vadd.f32 %v753, 1.0
    %v757 = vadd.f32 %v755, 1.0
    %v758 = vrcp.pop %v756
    %v759 = vmul.f32 1.0, %v758
    %v760 = vrcp.pop %v757
    %v761 = vmul.f32 1.0, %v760
    %v762 = vtanh.pop %v749
    %v763 = vmul.f32 %v759, 0.0
    %765 = vrot.lane.b32.xlu0 %v762, 64
    %v766 = vpop.permute.xlu0 %765
    %v768 = vmul.f32 %v759, %v766
    %770 = vrot.lane.b32.xlu0 %v768, 64
    %v771 = vpop.permute.xlu0 %770
    %v773 = vadd.f32 %v763, %v771
    %v774 = vtanh.pop %v773
    %776 = vrot.lane.b32.xlu0 %v774, 64
    %v777 = vpop.permute.xlu0 %776
    %v779 = vmul.f32 %v761, %v777
    %v781 = vsel %vm467, %v779, 0
    %783 = vmatprep.subr.mxu0 %v659
    %784 = vmatpush1.msra.mxu0 %v658
    %785 = vmatprep.subr.mxu0 %v661
    %786 = vmatpush1.msra.mxu0 %v660
    %787 = vmatprep.subr.mxu0 %v663
    %788 = vmatpush1.msra.mxu0 %v662
    %789 = vmatprep.subr.mxu0 %v665
    %790 = vmatpush1.msra.mxu0 %v664
    %791 = vmatprep.subr.mxu0 %v667
    %792 = vmatpush1.msra.mxu0 %v666
    %793 = vmatprep.subr.mxu0 %v669
    %794 = vmatpush1.msra.mxu0 %v668
    %795 = vmatprep.subr.mxu0 %v671
    %796 = vmatpush1.msra.mxu0 %v670
    %797 = vmatprep.subr.mxu0 %v673
    %798 = vmatpush1.msra.mxu0 %v672
    %799 = vmatprep.subr.mxu0 0.0
    %800 = vmatpush1.msra.mxu0 0.0
    %801 = vmatprep.subr.mxu0 0.0
    %802 = vmatpush1.msra.mxu0 0.0
    %803 = vmatprep.subr.mxu0 0.0
    %804 = vmatpush1.msra.mxu0 0.0
    %805 = vmatprep.subr.mxu0 0.0
    %806 = vmatpush1.msra.mxu0 0.0
    %807 = vmatprep.subr.mxu0 0.0
    %808 = vmatpush1.msra.mxu0 0.0
    %809 = vmatprep.subr.mxu0 0.0
    %810 = vmatpush1.msra.mxu0 0.0
    %811 = vmatprep.subr.mxu0 0.0
    %812 = vmatpush1.msra.mxu0 0.0
    %813 = vmatprep.subr.mxu0 0.0
    %814 = vmatpush1.msra.mxu0 0.0
    %815 = vmatprep.subr.mxu0 0.0
    %816 = vmatpush1.msra.mxu0 0.0
    %817 = vmatprep.subr.mxu0 0.0
    %818 = vmatpush1.msra.mxu0 0.0
    %819 = vmatprep.subr.mxu0 0.0
    %820 = vmatpush1.msra.mxu0 0.0
    %821 = vmatprep.subr.mxu0 0.0
    %822 = vmatpush1.msra.mxu0 0.0
    %823 = vmatprep.subr.mxu0 0.0
    %824 = vmatpush1.msra.mxu0 0.0
    %825 = vmatprep.subr.mxu0 0.0
    %826 = vmatpush1.msra.mxu0 0.0
    %827 = vmatprep.subr.mxu0 0.0
    %828 = vmatpush1.msra.mxu0 0.0
    %829 = vmatprep.subr.mxu0 0.0
    %830 = vmatpush1.msra.mxu0 0.0
    %831 = vmatprep.subr.mxu0 0.0
    %832 = vmatpush1.msra.mxu0 0.0
    %833 = vmatprep.subr.mxu0 0.0
    %834 = vmatpush1.msra.mxu0 0.0
    %835 = vmatprep.subr.mxu0 0.0
    %836 = vmatpush1.msra.mxu0 0.0
    %837 = vmatprep.subr.mxu0 0.0
    %838 = vmatpush1.msra.mxu0 0.0
    %839 = vmatprep.subr.mxu0 0.0
    %840 = vmatpush1.msra.mxu0 0.0
    %841 = vmatprep.subr.mxu0 0.0
    %842 = vmatpush1.msra.mxu0 0.0
    %843 = vmatprep.subr.mxu0 0.0
    %844 = vmatpush1.msra.mxu0 0.0
    %845 = vmatprep.subr.mxu0 0.0
    %846 = vmatpush1.msra.mxu0 0.0
    %847 = vmatprep.mubr.f32.mxu0 0.0
    %848 = vmatmul.mubr.f32.gmra.mrb[0].mxu0 %v781
    %v849 = vpop.f32.mrb[0].mxu0
    %v850 = vadd.f32 0.0, %v849
    %v851 = vpop.f32.mrb[0].mxu0
    %v852 = vadd.f32 0.0, %v851
    %853 = vdwg.mxu0
    %v856 = vrot.slane %v850, 6
    %v857 = vrot.slane %v852, 6
    %v860 = vadd.f32 %v541, %v856
    %v861 = vadd.f32 %v543, %v857
    %v862 = vxor.u32 %v860, 2147483648
    %v863 = vxor.u32 %v861, 2147483648
    %v864 = vmul.f32 %v862, 1.442695
    %v865 = vpow.pop %v864
    %v866 = vmul.f32 %v863, 1.442695
    %v867 = vpow.pop %v866
    %v868 = vadd.f32 %v865, 1.0
    %v869 = vadd.f32 %v867, 1.0
    %v870 = vrcp.pop %v868
    %v871 = vmul.f32 1.0, %v870
    %v872 = vrcp.pop %v869
    %v873 = vmul.f32 1.0, %v872
    %v874 = vtanh.pop %v861
    %v876 = vrot.slane %v773, 6
    %v878 = vmul.f32 %v871, %v876
    %880 = vrot.lane.b32.xlu0 %v874, 64
    %v881 = vpop.permute.xlu0 %880
    %v883 = vmul.f32 %v871, %v881
    %885 = vrot.lane.b32.xlu0 %v883, 64
    %v886 = vpop.permute.xlu0 %885
    %v888 = vadd.f32 %v878, %v886
    %v889 = vtanh.pop %v888
    %891 = vrot.lane.b32.xlu0 %v889, 64
    %v892 = vpop.permute.xlu0 %891
    %v894 = vmul.f32 %v873, %v892
    %v896 = vrot.slane %v894, 2
    %v897 = vsel %vm467, %v896, 0
    %899 = vmatprep.subr.mxu0 %v659
    %900 = vmatpush1.msra.mxu0 %v658
    %901 = vmatprep.subr.mxu0 %v661
    %902 = vmatpush1.msra.mxu0 %v660
    %903 = vmatprep.subr.mxu0 %v663
    %904 = vmatpush1.msra.mxu0 %v662
    %905 = vmatprep.subr.mxu0 %v665
    %906 = vmatpush1.msra.mxu0 %v664
    %907 = vmatprep.subr.mxu0 %v667
    %908 = vmatpush1.msra.mxu0 %v666
    %909 = vmatprep.subr.mxu0 %v669
    %910 = vmatpush1.msra.mxu0 %v668
    %911 = vmatprep.subr.mxu0 %v671
    %912 = vmatpush1.msra.mxu0 %v670
    %913 = vmatprep.subr.mxu0 %v673
    %914 = vmatpush1.msra.mxu0 %v672
    %915 = vmatprep.subr.mxu0 0.0
    %916 = vmatpush1.msra.mxu0 0.0
    %917 = vmatprep.subr.mxu0 0.0
    %918 = vmatpush1.msra.mxu0 0.0
    %919 = vmatprep.subr.mxu0 0.0
    %920 = vmatpush1.msra.mxu0 0.0
    %921 = vmatprep.subr.mxu0 0.0
    %922 = vmatpush1.msra.mxu0 0.0
    %923 = vmatprep.subr.mxu0 0.0
    %924 = vmatpush1.msra.mxu0 0.0
    %925 = vmatprep.subr.mxu0 0.0
    %926 = vmatpush1.msra.mxu0 0.0
    %927 = vmatprep.subr.mxu0 0.0
    %928 = vmatpush1.msra.mxu0 0.0
    %929 = vmatprep.subr.mxu0 0.0
    %930 = vmatpush1.msra.mxu0 0.0
    %931 = vmatprep.subr.mxu0 0.0
    %932 = vmatpush1.msra.mxu0 0.0
    %933 = vmatprep.subr.mxu0 0.0
    %934 = vmatpush1.msra.mxu0 0.0
    %935 = vmatprep.subr.mxu0 0.0
    %936 = vmatpush1.msra.mxu0 0.0
    %937 = vmatprep.subr.mxu0 0.0
    %938 = vmatpush1.msra.mxu0 0.0
    %939 = vmatprep.subr.mxu0 0.0
    %940 = vmatpush1.msra.mxu0 0.0
    %941 = vmatprep.subr.mxu0 0.0
    %942 = vmatpush1.msra.mxu0 0.0
    %943 = vmatprep.subr.mxu0 0.0
    %944 = vmatpush1.msra.mxu0 0.0
    %945 = vmatprep.subr.mxu0 0.0
    %946 = vmatpush1.msra.mxu0 0.0
    %947 = vmatprep.subr.mxu0 0.0
    %948 = vmatpush1.msra.mxu0 0.0
    %949 = vmatprep.subr.mxu0 0.0
    %950 = vmatpush1.msra.mxu0 0.0
    %951 = vmatprep.subr.mxu0 0.0
    %952 = vmatpush1.msra.mxu0 0.0
    %953 = vmatprep.subr.mxu0 0.0
    %954 = vmatpush1.msra.mxu0 0.0
    %955 = vmatprep.subr.mxu0 0.0
    %956 = vmatpush1.msra.mxu0 0.0
    %957 = vmatprep.subr.mxu0 0.0
    %958 = vmatpush1.msra.mxu0 0.0
    %959 = vmatprep.subr.mxu0 0.0
    %960 = vmatpush1.msra.mxu0 0.0
    %961 = vmatprep.subr.mxu0 0.0
    %962 = vmatpush1.msra.mxu0 0.0
    %963 = vmatprep.mubr.f32.mxu0 0.0
    %964 = vmatmul.mubr.f32.gmra.mrb[0].mxu0 %v897
    %v965 = vpop.f32.mrb[0].mxu0
    %v966 = vadd.f32 0.0, %v965
    %v967 = vpop.f32.mrb[0].mxu0
    %v968 = vadd.f32 0.0, %v967
    %969 = vdwg.mxu0
    %v972 = vrot.slane %v966, 4
    %v973 = vrot.slane %v968, 4
    %v976 = vadd.f32 %v541, %v972
    %v977 = vadd.f32 %v543, %v973
    %v978 = vxor.u32 %v976, 2147483648
    %v979 = vxor.u32 %v977, 2147483648
    %v980 = vmul.f32 %v978, 1.442695
    %v981 = vpow.pop %v980
    %v982 = vmul.f32 %v979, 1.442695
    %v983 = vpow.pop %v982
    %v984 = vadd.f32 %v981, 1.0
    %v985 = vadd.f32 %v983, 1.0
    %v986 = vrcp.pop %v984
    %v987 = vmul.f32 1.0, %v986
    %v988 = vrcp.pop %v985
    %v989 = vmul.f32 1.0, %v988
    %v990 = vtanh.pop %v977
    %v992 = vrot.slane %v888, 6
    %v994 = vmul.f32 %v987, %v992
    %996 = vrot.lane.b32.xlu0 %v990, 64
    %v997 = vpop.permute.xlu0 %996
    %v999 = vmul.f32 %v987, %v997
    %1001 = vrot.lane.b32.xlu0 %v999, 64
    %v1002 = vpop.permute.xlu0 %1001
    %v1004 = vadd.f32 %v994, %v1002
    %v1005 = vtanh.pop %v1004
    %1007 = vrot.lane.b32.xlu0 %v1005, 64
    %v1008 = vpop.permute.xlu0 %1007
    %v1010 = vmul.f32 %v989, %v1008
    %v1012 = vrot.slane %v1010, 4
    %v1013 = vsel %vm467, %v1012, 0
    %1015 = vmatprep.subr.mxu0 %v659
    %1016 = vmatpush1.msra.mxu0 %v658
    %1017 = vmatprep.subr.mxu0 %v661
    %1018 = vmatpush1.msra.mxu0 %v660
    %1019 = vmatprep.subr.mxu0 %v663
    %1020 = vmatpush1.msra.mxu0 %v662
    %1021 = vmatprep.subr.mxu0 %v665
    %1022 = vmatpush1.msra.mxu0 %v664
    %1023 = vmatprep.subr.mxu0 %v667
    %1024 = vmatpush1.msra.mxu0 %v666
    %1025 = vmatprep.subr.mxu0 %v669
    %1026 = vmatpush1.msra.mxu0 %v668
    %1027 = vmatprep.subr.mxu0 %v671
    %1028 = vmatpush1.msra.mxu0 %v670
    %1029 = vmatprep.subr.mxu0 %v673
    %1030 = vmatpush1.msra.mxu0 %v672
    %1031 = vmatprep.subr.mxu0 0.0
    %1032 = vmatpush1.msra.mxu0 0.0
    %1033 = vmatprep.subr.mxu0 0.0
    %1034 = vmatpush1.msra.mxu0 0.0
    %1035 = vmatprep.subr.mxu0 0.0
    %1036 = vmatpush1.msra.mxu0 0.0
    %1037 = vmatprep.subr.mxu0 0.0
    %1038 = vmatpush1.msra.mxu0 0.0
    %1039 = vmatprep.subr.mxu0 0.0
    %1040 = vmatpush1.msra.mxu0 0.0
    %1041 = vmatprep.subr.mxu0 0.0
    %1042 = vmatpush1.msra.mxu0 0.0
    %1043 = vmatprep.subr.mxu0 0.0
    %1044 = vmatpush1.msra.mxu0 0.0
    %1045 = vmatprep.subr.mxu0 0.0
    %1046 = vmatpush1.msra.mxu0 0.0
    %1047 = vmatprep.subr.mxu0 0.0
    %1048 = vmatpush1.msra.mxu0 0.0
    %1049 = vmatprep.subr.mxu0 0.0
    %1050 = vmatpush1.msra.mxu0 0.0
    %1051 = vmatprep.subr.mxu0 0.0
    %1052 = vmatpush1.msra.mxu0 0.0
    %1053 = vmatprep.subr.mxu0 0.0
    %1054 = vmatpush1.msra.mxu0 0.0
    %1055 = vmatprep.subr.mxu0 0.0
    %1056 = vmatpush1.msra.mxu0 0.0
    %1057 = vmatprep.subr.mxu0 0.0
    %1058 = vmatpush1.msra.mxu0 0.0
    %1059 = vmatprep.subr.mxu0 0.0
    %1060 = vmatpush1.msra.mxu0 0.0
    %1061 = vmatprep.subr.mxu0 0.0
    %1062 = vmatpush1.msra.mxu0 0.0
    %1063 = vmatprep.subr.mxu0 0.0
    %1064 = vmatpush1.msra.mxu0 0.0
    %1065 = vmatprep.subr.mxu0 0.0
    %1066 = vmatpush1.msra.mxu0 0.0
    %1067 = vmatprep.subr.mxu0 0.0
    %1068 = vmatpush1.msra.mxu0 0.0
    %1069 = vmatprep.subr.mxu0 0.0
    %1070 = vmatpush1.msra.mxu0 0.0
    %1071 = vmatprep.subr.mxu0 0.0
    %1072 = vmatpush1.msra.mxu0 0.0
    %1073 = vmatprep.subr.mxu0 0.0
    %1074 = vmatpush1.msra.mxu0 0.0
    %1075 = vmatprep.subr.mxu0 0.0
    %1076 = vmatpush1.msra.mxu0 0.0
    %1077 = vmatprep.subr.mxu0 0.0
    %1078 = vmatpush1.msra.mxu0 0.0
    %1079 = vmatprep.mubr.f32.mxu0 0.0
    %1080 = vmatmul.mubr.f32.gmra.mrb[0].mxu0 %v1013
    %v1081 = vpop.f32.mrb[0].mxu0
    %v1082 = vadd.f32 0.0, %v1081
    %v1083 = vpop.f32.mrb[0].mxu0
    %v1084 = vadd.f32 0.0, %v1083
    %1085 = vdwg.mxu0
    %v1088 = vrot.slane %v1082, 2
    %v1089 = vrot.slane %v1084, 2
    %v1092 = vadd.f32 %v541, %v1088
    %v1093 = vadd.f32 %v543, %v1089
    %v1094 = vxor.u32 %v1092, 2147483648
    %v1095 = vxor.u32 %v1093, 2147483648
    %v1096 = vmul.f32 %v1094, 1.442695
    %v1097 = vpow.pop %v1096
    %v1098 = vmul.f32 %v1095, 1.442695
    %v1099 = vpow.pop %v1098
    %v1100 = vadd.f32 %v1097, 1.0
    %v1101 = vadd.f32 %v1099, 1.0
    %v1102 = vrcp.pop %v1100
    %v1103 = vmul.f32 1.0, %v1102
    %v1104 = vrcp.pop %v1101
    %v1105 = vmul.f32 1.0, %v1104
    %v1106 = vtanh.pop %v1093
    %v1108 = vrot.slane %v1004, 6
    %v1110 = vmul.f32 %v1103, %v1108
    %1112 = vrot.lane.b32.xlu0 %v1106, 64
    %v1113 = vpop.permute.xlu0 %1112
    %v1115 = vmul.f32 %v1103, %v1113
    %1117 = vrot.lane.b32.xlu0 %v1115, 64
    %v1118 = vpop.permute.xlu0 %1117
    %v1120 = vadd.f32 %v1110, %v1118
    %v1121 = vtanh.pop %v1120
    %1123 = vrot.lane.b32.xlu0 %v1121, 64
    %v1124 = vpop.permute.xlu0 %1123
    %v1126 = vmul.f32 %v1105, %v1124
    %v1128 = vrot.slane %v1126, 6
    %v1129 = vsel %vm467, %v1128, 0
    %1131 = vmatprep.subr.mxu0 %v659
    %1132 = vmatpush1.msra.mxu0 %v658
    %1133 = vmatprep.subr.mxu0 %v661
    %1134 = vmatpush1.msra.mxu0 %v660
    %1135 = vmatprep.subr.mxu0 %v663
    %1136 = vmatpush1.msra.mxu0 %v662
    %1137 = vmatprep.subr.mxu0 %v665
    %1138 = vmatpush1.msra.mxu0 %v664
    %1139 = vmatprep.subr.mxu0 %v667
    %1140 = vmatpush1.msra.mxu0 %v666
    %1141 = vmatprep.subr.mxu0 %v669
    %1142 = vmatpush1.msra.mxu0 %v668
    %1143 = vmatprep.subr.mxu0 %v671
    %1144 = vmatpush1.msra.mxu0 %v670
    %1145 = vmatprep.subr.mxu0 %v673
    %1146 = vmatpush1.msra.mxu0 %v672
    %1147 = vmatprep.subr.mxu0 0.0
    %1148 = vmatpush1.msra.mxu0 0.0
    %1149 = vmatprep.subr.mxu0 0.0
    %1150 = vmatpush1.msra.mxu0 0.0
    %1151 = vmatprep.subr.mxu0 0.0
    %1152 = vmatpush1.msra.mxu0 0.0
    %1153 = vmatprep.subr.mxu0 0.0
    %1154 = vmatpush1.msra.mxu0 0.0
    %1155 = vmatprep.subr.mxu0 0.0
    %1156 = vmatpush1.msra.mxu0 0.0
    %1157 = vmatprep.subr.mxu0 0.0
    %1158 = vmatpush1.msra.mxu0 0.0
    %1159 = vmatprep.subr.mxu0 0.0
    %1160 = vmatpush1.msra.mxu0 0.0
    %1161 = vmatprep.subr.mxu0 0.0
    %1162 = vmatpush1.msra.mxu0 0.0
    %1163 = vmatprep.subr.mxu0 0.0
    %1164 = vmatpush1.msra.mxu0 0.0
    %1165 = vmatprep.subr.mxu0 0.0
    %1166 = vmatpush1.msra.mxu0 0.0
    %1167 = vmatprep.subr.mxu0 0.0
    %1168 = vmatpush1.msra.mxu0 0.0
    %1169 = vmatprep.subr.mxu0 0.0
    %1170 = vmatpush1.msra.mxu0 0.0
    %1171 = vmatprep.subr.mxu0 0.0
    %1172 = vmatpush1.msra.mxu0 0.0
    %1173 = vmatprep.subr.mxu0 0.0
    %1174 = vmatpush1.msra.mxu0 0.0
    %1175 = vmatprep.subr.mxu0 0.0
    %1176 = vmatpush1.msra.mxu0 0.0
    %1177 = vmatprep.subr.mxu0 0.0
    %1178 = vmatpush1.msra.mxu0 0.0
    %1179 = vmatprep.subr.mxu0 0.0
    %1180 = vmatpush1.msra.mxu0 0.0
    %1181 = vmatprep.subr.mxu0 0.0
    %1182 = vmatpush1.msra.mxu0 0.0
    %1183 = vmatprep.subr.mxu0 0.0
    %1184 = vmatpush1.msra.mxu0 0.0
    %1185 = vmatprep.subr.mxu0 0.0
    %1186 = vmatpush1.msra.mxu0 0.0
    %1187 = vmatprep.subr.mxu0 0.0
    %1188 = vmatpush1.msra.mxu0 0.0
    %1189 = vmatprep.subr.mxu0 0.0
    %1190 = vmatpush1.msra.mxu0 0.0
    %1191 = vmatprep.subr.mxu0 0.0
    %1192 = vmatpush1.msra.mxu0 0.0
    %1193 = vmatprep.subr.mxu0 0.0
    %1194 = vmatpush1.msra.mxu0 0.0
    %1195 = vmatprep.mubr.f32.mxu0 0.0
    %1196 = vmatmul.mubr.f32.gmra.mrb[0].mxu0 %v1129
    %v1197 = vpop.f32.mrb[0].mxu0
    %v1198 = vadd.f32 0.0, %v1197
    %v1199 = vpop.f32.mrb[0].mxu0
    %v1200 = vadd.f32 0.0, %v1199
    %1201 = vdwg.mxu0
    %v1202 = vadd.f32 %v547, %v1198
    %v1203 = vadd.f32 %v549, %v1200
    %v1204 = vxor.u32 %v1202, 2147483648
    %v1205 = vxor.u32 %v1203, 2147483648
    %v1206 = vmul.f32 %v1204, 1.442695
    %v1207 = vpow.pop %v1206
    %v1208 = vmul.f32 %v1205, 1.442695
    %v1209 = vpow.pop %v1208
    %v1210 = vadd.f32 %v1207, 1.0
    %v1211 = vadd.f32 %v1209, 1.0
    %v1212 = vrcp.pop %v1210
    %v1213 = vmul.f32 1.0, %v1212
    %v1214 = vrcp.pop %v1211
    %v1215 = vmul.f32 1.0, %v1214
    %v1216 = vtanh.pop %v1203
    %v1218 = vrot.slane %v1120, 6
    %v1220 = vmul.f32 %v1213, %v1218
    %1222 = vrot.lane.b32.xlu0 %v1216, 64
    %v1223 = vpop.permute.xlu0 %1222
    %v1225 = vmul.f32 %v1213, %v1223
    %1227 = vrot.lane.b32.xlu0 %v1225, 64
    %v1228 = vpop.permute.xlu0 %1227
    %v1230 = vadd.f32 %v1220, %v1228
    %v1231 = vtanh.pop %v1230
    %1233 = vrot.lane.b32.xlu0 %v1231, 64
    %v1234 = vpop.permute.xlu0 %1233
    %v1236 = vmul.f32 %v1215, %v1234
    %v1238 = vsel %vm467, %v1236, 0
    %1240 = vmatprep.subr.mxu0 %v659
    %1241 = vmatpush1.msra.mxu0 %v658
    %1242 = vmatprep.subr.mxu0 %v661
    %1243 = vmatpush1.msra.mxu0 %v660
    %1244 = vmatprep.subr.mxu0 %v663
    %1245 = vmatpush1.msra.mxu0 %v662
    %1246 = vmatprep.subr.mxu0 %v665
    %1247 = vmatpush1.msra.mxu0 %v664
    %1248 = vmatprep.subr.mxu0 %v667
    %1249 = vmatpush1.msra.mxu0 %v666
    %1250 = vmatprep.subr.mxu0 %v669
    %1251 = vmatpush1.msra.mxu0 %v668
    %1252 = vmatprep.subr.mxu0 %v671
    %1253 = vmatpush1.msra.mxu0 %v670
    %1254 = vmatprep.subr.mxu0 %v673
    %1255 = vmatpush1.msra.mxu0 %v672
    %1256 = vmatprep.subr.mxu0 0.0
    %1257 = vmatpush1.msra.mxu0 0.0
    %1258 = vmatprep.subr.mxu0 0.0
    %1259 = vmatpush1.msra.mxu0 0.0
    %1260 = vmatprep.subr.mxu0 0.0
    %1261 = vmatpush1.msra.mxu0 0.0
    %1262 = vmatprep.subr.mxu0 0.0
    %1263 = vmatpush1.msra.mxu0 0.0
    %1264 = vmatprep.subr.mxu0 0.0
    %1265 = vmatpush1.msra.mxu0 0.0
    %1266 = vmatprep.subr.mxu0 0.0
    %1267 = vmatpush1.msra.mxu0 0.0
    %1268 = vmatprep.subr.mxu0 0.0
    %1269 = vmatpush1.msra.mxu0 0.0
    %1270 = vmatprep.subr.mxu0 0.0
    %1271 = vmatpush1.msra.mxu0 0.0
    %1272 = vmatprep.subr.mxu0 0.0
    %1273 = vmatpush1.msra.mxu0 0.0
    %1274 = vmatprep.subr.mxu0 0.0
    %1275 = vmatpush1.msra.mxu0 0.0
    %1276 = vmatprep.subr.mxu0 0.0
    %1277 = vmatpush1.msra.mxu0 0.0
    %1278 = vmatprep.subr.mxu0 0.0
    %1279 = vmatpush1.msra.mxu0 0.0
    %1280 = vmatprep.subr.mxu0 0.0
    %1281 = vmatpush1.msra.mxu0 0.0
    %1282 = vmatprep.subr.mxu0 0.0
    %1283 = vmatpush1.msra.mxu0 0.0
    %1284 = vmatprep.subr.mxu0 0.0
    %1285 = vmatpush1.msra.mxu0 0.0
    %1286 = vmatprep.subr.mxu0 0.0
    %1287 = vmatpush1.msra.mxu0 0.0
    %1288 = vmatprep.subr.mxu0 0.0
    %1289 = vmatpush1.msra.mxu0 0.0
    %1290 = vmatprep.subr.mxu0 0.0
    %1291 = vmatpush1.msra.mxu0 0.0
    %1292 = vmatprep.subr.mxu0 0.0
    %1293 = vmatpush1.msra.mxu0 0.0
    %1294 = vmatprep.subr.mxu0 0.0
    %1295 = vmatpush1.msra.mxu0 0.0
    %1296 = vmatprep.subr.mxu0 0.0
    %1297 = vmatpush1.msra.mxu0 0.0
    %1298 = vmatprep.subr.mxu0 0.0
    %1299 = vmatpush1.msra.mxu0 0.0
    %1300 = vmatprep.subr.mxu0 0.0
    %1301 = vmatpush1.msra.mxu0 0.0
    %1302 = vmatprep.subr.mxu0 0.0
    %1303 = vmatpush1.msra.mxu0 0.0
    %1304 = vmatprep.mubr.f32.mxu0 0.0
    %1305 = vmatmul.mubr.f32.gmra.mrb[0].mxu0 %v1238
    %v1306 = vpop.f32.mrb[0].mxu0
    %v1307 = vadd.f32 0.0, %v1306
    %v1308 = vpop.f32.mrb[0].mxu0
    %v1309 = vadd.f32 0.0, %v1308
    %1310 = vdwg.mxu0
    %v1313 = vrot.slane %v1307, 6
    %v1314 = vrot.slane %v1309, 6
    %v1317 = vadd.f32 %v547, %v1313
    %v1318 = vadd.f32 %v549, %v1314
    %v1319 = vxor.u32 %v1317, 2147483648
    %v1320 = vxor.u32 %v1318, 2147483648
    %v1321 = vmul.f32 %v1319, 1.442695
    %v1322 = vpow.pop %v1321
    %v1323 = vmul.f32 %v1320, 1.442695
    %v1324 = vpow.pop %v1323
    %v1325 = vadd.f32 %v1322, 1.0
    %v1326 = vadd.f32 %v1324, 1.0
    %v1327 = vrcp.pop %v1325
    %v1328 = vmul.f32 1.0, %v1327
    %v1329 = vrcp.pop %v1326
    %v1330 = vmul.f32 1.0, %v1329
    %v1331 = vtanh.pop %v1318
    %v1333 = vrot.slane %v1230, 6
    %v1335 = vmul.f32 %v1328, %v1333
    %1337 = vrot.lane.b32.xlu0 %v1331, 64
    %v1338 = vpop.permute.xlu0 %1337
    %v1340 = vmul.f32 %v1328, %v1338
    %1342 = vrot.lane.b32.xlu0 %v1340, 64
    %v1343 = vpop.permute.xlu0 %1342
    %v1345 = vadd.f32 %v1335, %v1343
    %v1346 = vtanh.pop %v1345
    %1348 = vrot.lane.b32.xlu0 %v1346, 64
    %v1349 = vpop.permute.xlu0 %1348
    %v1351 = vmul.f32 %v1330, %v1349
    %v1352 = vld [vmem:[#allocation16] sm:$0xff]
    %v1353 = vld [vmem:[#allocation16 + $0x8] sm:$0xff]
    %v1354 = vld [vmem:[#allocation16 + $0x10] sm:$0xff]
    %v1355 = vld [vmem:[#allocation16 + $0x18] sm:$0xff]
    %v1356 = vld [vmem:[#allocation16 + $0x20] sm:$0xff]
    %v1357 = vld [vmem:[#allocation16 + $0x28] sm:$0xff]
    %v1358 = vld [vmem:[#allocation16 + $0x30] sm:$0xff]
    %v1359 = vld [vmem:[#allocation16 + $0x38] sm:$0xff]
    %v1360 = vld [vmem:[#allocation16 + $0x40] sm:$0xff]
    %v1361 = vld [vmem:[#allocation16 + $0x48] sm:$0xff]
    %v1362 = vld [vmem:[#allocation16 + $0x50] sm:$0xff]
    %v1363 = vld [vmem:[#allocation16 + $0x58] sm:$0xff]
    %v1364 = vld [vmem:[#allocation16 + $0x60] sm:$0xff]
    %v1365 = vld [vmem:[#allocation16 + $0x68] sm:$0xff]
    %v1366 = vld [vmem:[#allocation16 + $0x70] sm:$0xff]
    %v1367 = vld [vmem:[#allocation16 + $0x78] sm:$0xff]
    %v1369 = vrot.slane %v1351, 2
    %v1370 = vsel %vm467, %v1369, 0
    %1372 = vmatprep.subr.mxu0 %v1353
    %1373 = vmatpush1.msra.mxu0 %v1352
    %1374 = vmatprep.subr.mxu0 %v1355
    %1375 = vmatpush1.msra.mxu0 %v1354
    %1376 = vmatprep.subr.mxu0 %v1357
    %1377 = vmatpush1.msra.mxu0 %v1356
    %1378 = vmatprep.subr.mxu0 %v1359
    %1379 = vmatpush1.msra.mxu0 %v1358
    %1380 = vmatprep.subr.mxu0 %v1361
    %1381 = vmatpush1.msra.mxu0 %v1360
    %1382 = vmatprep.subr.mxu0 %v1363
    %1383 = vmatpush1.msra.mxu0 %v1362
    %1384 = vmatprep.subr.mxu0 %v1365
    %1385 = vmatpush1.msra.mxu0 %v1364
    %1386 = vmatprep.subr.mxu0 %v1367
    %1387 = vmatpush1.msra.mxu0 %v1366
    %1388 = vmatprep.subr.mxu0 0.0
    %1389 = vmatpush1.msra.mxu0 0.0
    %1390 = vmatprep.subr.mxu0 0.0
    %1391 = vmatpush1.msra.mxu0 0.0
    %1392 = vmatprep.subr.mxu0 0.0
    %1393 = vmatpush1.msra.mxu0 0.0
    %1394 = vmatprep.subr.mxu0 0.0
    %1395 = vmatpush1.msra.mxu0 0.0
    %1396 = vmatprep.subr.mxu0 0.0
    %1397 = vmatpush1.msra.mxu0 0.0
    %1398 = vmatprep.subr.mxu0 0.0
    %1399 = vmatpush1.msra.mxu0 0.0
    %1400 = vmatprep.subr.mxu0 0.0
    %1401 = vmatpush1.msra.mxu0 0.0
    %1402 = vmatprep.subr.mxu0 0.0
    %1403 = vmatpush1.msra.mxu0 0.0
    %1404 = vmatprep.subr.mxu0 0.0
    %1405 = vmatpush1.msra.mxu0 0.0
    %1406 = vmatprep.subr.mxu0 0.0
    %1407 = vmatpush1.msra.mxu0 0.0
    %1408 = vmatprep.subr.mxu0 0.0
    %1409 = vmatpush1.msra.mxu0 0.0
    %1410 = vmatprep.subr.mxu0 0.0
    %1411 = vmatpush1.msra.mxu0 0.0
    %1412 = vmatprep.subr.mxu0 0.0
    %1413 = vmatpush1.msra.mxu0 0.0
    %1414 = vmatprep.subr.mxu0 0.0
    %1415 = vmatpush1.msra.mxu0 0.0
    %1416 = vmatprep.subr.mxu0 0.0
    %1417 = vmatpush1.msra.mxu0 0.0
    %1418 = vmatprep.subr.mxu0 0.0
    %1419 = vmatpush1.msra.mxu0 0.0
    %1420 = vmatprep.subr.mxu0 0.0
    %1421 = vmatpush1.msra.mxu0 0.0
    %1422 = vmatprep.subr.mxu0 0.0
    %1423 = vmatpush1.msra.mxu0 0.0
    %1424 = vmatprep.subr.mxu0 0.0
    %1425 = vmatpush1.msra.mxu0 0.0
    %1426 = vmatprep.subr.mxu0 0.0
    %1427 = vmatpush1.msra.mxu0 0.0
    %1428 = vmatprep.subr.mxu0 0.0
    %1429 = vmatpush1.msra.mxu0 0.0
    %1430 = vmatprep.subr.mxu0 0.0
    %1431 = vmatpush1.msra.mxu0 0.0
    %1432 = vmatprep.subr.mxu0 0.0
    %1433 = vmatpush1.msra.mxu0 0.0
    %1434 = vmatprep.subr.mxu0 0.0
    %1435 = vmatpush1.msra.mxu0 0.0
    %1436 = vmatprep.mubr.f32.mxu0 0.0
    %1437 = vmatmul.mubr.f32.gmra.mrb[0].mxu0 %v1370
    %v1438 = vpop.f32.mrb[0].mxu0
    %v1439 = vadd.f32 0.0, %v1438
    %v1440 = vpop.f32.mrb[0].mxu0
    %v1441 = vadd.f32 0.0, %v1440
    %1442 = vdwg.mxu0
    %v1443 = vadd.f32 %v648, %v1439
    %v1444 = vadd.f32 %v650, %v1441
    %v1445 = vxor.u32 %v1443, 2147483648
    %v1446 = vxor.u32 %v1444, 2147483648
    %v1447 = vmul.f32 %v1445, 1.442695
    %v1448 = vpow.pop %v1447
    %v1449 = vmul.f32 %v1446, 1.442695
    %v1450 = vpow.pop %v1449
    %v1451 = vadd.f32 %v1448, 1.0
    %v1452 = vadd.f32 %v1450, 1.0
    %v1453 = vrcp.pop %v1451
    %v1454 = vmul.f32 1.0, %v1453
    %v1455 = vrcp.pop %v1452
    %v1456 = vmul.f32 1.0, %v1455
    %v1457 = vtanh.pop %v1444
    %v1459 = vrot.slane %v1345, 2
    %v1461 = vmul.f32 %v1454, %v1459
    %1463 = vrot.lane.b32.xlu0 %v1457, 64
    %v1464 = vpop.permute.xlu0 %1463
    %v1466 = vmul.f32 %v1454, %v1464
    %1468 = vrot.lane.b32.xlu0 %v1466, 64
    %v1469 = vpop.permute.xlu0 %1468
    %v1471 = vadd.f32 %v1461, %v1469
    %v1472 = vtanh.pop %v1471
    %1474 = vrot.lane.b32.xlu0 %v1472, 64
    %v1475 = vpop.permute.xlu0 %1474
    %v1477 = vmul.f32 %v1456, %v1475
    %v1479 = vsel %vm467, %v1477, 0
    %1481 = vmatprep.subr.mxu0 %v1353
    %1482 = vmatpush1.msra.mxu0 %v1352
    %1483 = vmatprep.subr.mxu0 %v1355
    %1484 = vmatpush1.msra.mxu0 %v1354
    %1485 = vmatprep.subr.mxu0 %v1357
    %1486 = vmatpush1.msra.mxu0 %v1356
    %1487 = vmatprep.subr.mxu0 %v1359
    %1488 = vmatpush1.msra.mxu0 %v1358
    %1489 = vmatprep.subr.mxu0 %v1361
    %1490 = vmatpush1.msra.mxu0 %v1360
    %1491 = vmatprep.subr.mxu0 %v1363
    %1492 = vmatpush1.msra.mxu0 %v1362
    %1493 = vmatprep.subr.mxu0 %v1365
    %1494 = vmatpush1.msra.mxu0 %v1364
    %1495 = vmatprep.subr.mxu0 %v1367
    %1496 = vmatpush1.msra.mxu0 %v1366
    %1497 = vmatprep.subr.mxu0 0.0
    %1498 = vmatpush1.msra.mxu0 0.0
    %1499 = vmatprep.subr.mxu0 0.0
    %1500 = vmatpush1.msra.mxu0 0.0
    %1501 = vmatprep.subr.mxu0 0.0
    %1502 = vmatpush1.msra.mxu0 0.0
    %1503 = vmatprep.subr.mxu0 0.0
    %1504 = vmatpush1.msra.mxu0 0.0
    %1505 = vmatprep.subr.mxu0 0.0
    %1506 = vmatpush1.msra.mxu0 0.0
    %1507 = vmatprep.subr.mxu0 0.0
    %1508 = vmatpush1.msra.mxu0 0.0
    %1509 = vmatprep.subr.mxu0 0.0
    %1510 = vmatpush1.msra.mxu0 0.0
    %1511 = vmatprep.subr.mxu0 0.0
    %1512 = vmatpush1.msra.mxu0 0.0
    %1513 = vmatprep.subr.mxu0 0.0
    %1514 = vmatpush1.msra.mxu0 0.0
    %1515 = vmatprep.subr.mxu0 0.0
    %1516 = vmatpush1.msra.mxu0 0.0
    %1517 = vmatprep.subr.mxu0 0.0
    %1518 = vmatpush1.msra.mxu0 0.0
    %1519 = vmatprep.subr.mxu0 0.0
    %1520 = vmatpush1.msra.mxu0 0.0
    %1521 = vmatprep.subr.mxu0 0.0
    %1522 = vmatpush1.msra.mxu0 0.0
    %1523 = vmatprep.subr.mxu0 0.0
    %1524 = vmatpush1.msra.mxu0 0.0
    %1525 = vmatprep.subr.mxu0 0.0
    %1526 = vmatpush1.msra.mxu0 0.0
    %1527 = vmatprep.subr.mxu0 0.0
    %1528 = vmatpush1.msra.mxu0 0.0
    %1529 = vmatprep.subr.mxu0 0.0
    %1530 = vmatpush1.msra.mxu0 0.0
    %1531 = vmatprep.subr.mxu0 0.0
    %1532 = vmatpush1.msra.mxu0 0.0
    %1533 = vmatprep.subr.mxu0 0.0
    %1534 = vmatpush1.msra.mxu0 0.0
    %1535 = vmatprep.subr.mxu0 0.0
    %1536 = vmatpush1.msra.mxu0 0.0
    %1537 = vmatprep.subr.mxu0 0.0
    %1538 = vmatpush1.msra.mxu0 0.0
    %1539 = vmatprep.subr.mxu0 0.0
    %1540 = vmatpush1.msra.mxu0 0.0
    %1541 = vmatprep.subr.mxu0 0.0
    %1542 = vmatpush1.msra.mxu0 0.0
    %1543 = vmatprep.subr.mxu0 0.0
    %1544 = vmatpush1.msra.mxu0 0.0
    %1545 = vmatprep.mubr.f32.mxu0 0.0
    %1546 = vmatmul.mubr.f32.gmra.mrb[0].mxu0 %v1479
    %v1547 = vpop.f32.mrb[0].mxu0
    %v1548 = vadd.f32 0.0, %v1547
    %v1549 = vpop.f32.mrb[0].mxu0
    %v1550 = vadd.f32 0.0, %v1549
    %1551 = vdwg.mxu0
    %v1554 = vrot.slane %v1548, 6
    %v1555 = vrot.slane %v1550, 6
    %v1558 = vadd.f32 %v648, %v1554
    %v1559 = vadd.f32 %v650, %v1555
    %v1560 = vxor.u32 %v1558, 2147483648
    %v1561 = vxor.u32 %v1559, 2147483648
    %v1562 = vmul.f32 %v1560, 1.442695
    %v1563 = vpow.pop %v1562
    %v1564 = vmul.f32 %v1561, 1.442695
    %v1565 = vpow.pop %v1564
    %v1566 = vadd.f32 %v1563, 1.0
    %v1567 = vadd.f32 %v1565, 1.0
    %v1568 = vrcp.pop %v1566
    %v1569 = vmul.f32 1.0, %v1568
    %v1570 = vrcp.pop %v1567
    %v1571 = vmul.f32 1.0, %v1570
    %v1572 = vtanh.pop %v1559
    %v1574 = vrot.slane %v1471, 6
    %v1576 = vmul.f32 %v1569, %v1574
    %1578 = vrot.lane.b32.xlu0 %v1572, 64
    %v1579 = vpop.permute.xlu0 %1578
    %v1581 = vmul.f32 %v1569, %v1579
    %1583 = vrot.lane.b32.xlu0 %v1581, 64
    %v1584 = vpop.permute.xlu0 %1583
    %v1586 = vadd.f32 %v1576, %v1584
    %v1587 = vtanh.pop %v1586
    %1589 = vrot.lane.b32.xlu0 %v1587, 64
    %v1590 = vpop.permute.xlu0 %1589
    %v1592 = vmul.f32 %v1571, %v1590
    %v1594 = vrot.slane %v1592, 2
    %v1595 = vsel %vm467, %v1594, 0
    %1597 = vmatprep.subr.mxu0 %v1353
    %1598 = vmatpush1.msra.mxu0 %v1352
    %1599 = vmatprep.subr.mxu0 %v1355
    %1600 = vmatpush1.msra.mxu0 %v1354
    %1601 = vmatprep.subr.mxu0 %v1357
    %1602 = vmatpush1.msra.mxu0 %v1356
    %1603 = vmatprep.subr.mxu0 %v1359
    %1604 = vmatpush1.msra.mxu0 %v1358
    %1605 = vmatprep.subr.mxu0 %v1361
    %1606 = vmatpush1.msra.mxu0 %v1360
    %1607 = vmatprep.subr.mxu0 %v1363
    %1608 = vmatpush1.msra.mxu0 %v1362
    %1609 = vmatprep.subr.mxu0 %v1365
    %1610 = vmatpush1.msra.mxu0 %v1364
    %1611 = vmatprep.subr.mxu0 %v1367
    %1612 = vmatpush1.msra.mxu0 %v1366
    %1613 = vmatprep.subr.mxu0 0.0
    %1614 = vmatpush1.msra.mxu0 0.0
    %1615 = vmatprep.subr.mxu0 0.0
    %1616 = vmatpush1.msra.mxu0 0.0
    %1617 = vmatprep.subr.mxu0 0.0
    %1618 = vmatpush1.msra.mxu0 0.0
    %1619 = vmatprep.subr.mxu0 0.0
    %1620 = vmatpush1.msra.mxu0 0.0
    %1621 = vmatprep.subr.mxu0 0.0
    %1622 = vmatpush1.msra.mxu0 0.0
    %1623 = vmatprep.subr.mxu0 0.0
    %1624 = vmatpush1.msra.mxu0 0.0
    %1625 = vmatprep.subr.mxu0 0.0
    %1626 = vmatpush1.msra.mxu0 0.0
    %1627 = vmatprep.subr.mxu0 0.0
    %1628 = vmatpush1.msra.mxu0 0.0
    %1629 = vmatprep.subr.mxu0 0.0
    %1630 = vmatpush1.msra.mxu0 0.0
    %1631 = vmatprep.subr.mxu0 0.0
    %1632 = vmatpush1.msra.mxu0 0.0
    %1633 = vmatprep.subr.mxu0 0.0
    %1634 = vmatpush1.msra.mxu0 0.0
    %1635 = vmatprep.subr.mxu0 0.0
    %1636 = vmatpush1.msra.mxu0 0.0
    %1637 = vmatprep.subr.mxu0 0.0
    %1638 = vmatpush1.msra.mxu0 0.0
    %1639 = vmatprep.subr.mxu0 0.0
    %1640 = vmatpush1.msra.mxu0 0.0
    %1641 = vmatprep.subr.mxu0 0.0
    %1642 = vmatpush1.msra.mxu0 0.0
    %1643 = vmatprep.subr.mxu0 0.0
    %1644 = vmatpush1.msra.mxu0 0.0
    %1645 = vmatprep.subr.mxu0 0.0
    %1646 = vmatpush1.msra.mxu0 0.0
    %1647 = vmatprep.subr.mxu0 0.0
    %1648 = vmatpush1.msra.mxu0 0.0
    %1649 = vmatprep.subr.mxu0 0.0
    %1650 = vmatpush1.msra.mxu0 0.0
    %1651 = vmatprep.subr.mxu0 0.0
    %1652 = vmatpush1.msra.mxu0 0.0
    %1653 = vmatprep.subr.mxu0 0.0
    %1654 = vmatpush1.msra.mxu0 0.0
    %1655 = vmatprep.subr.mxu0 0.0
    %1656 = vmatpush1.msra.mxu0 0.0
    %1657 = vmatprep.subr.mxu0 0.0
    %1658 = vmatpush1.msra.mxu0 0.0
    %1659 = vmatprep.subr.mxu0 0.0
    %1660 = vmatpush1.msra.mxu0 0.0
    %1661 = vmatprep.mubr.f32.mxu0 0.0
    %1662 = vmatmul.mubr.f32.gmra.mrb[0].mxu0 %v1595
    %v1663 = vpop.f32.mrb[0].mxu0
    %v1664 = vadd.f32 0.0, %v1663
    %v1665 = vpop.f32.mrb[0].mxu0
    %v1666 = vadd.f32 0.0, %v1665
    %1667 = vdwg.mxu0
    %v1670 = vrot.slane %v1664, 4
    %v1671 = vrot.slane %v1666, 4
    %v1674 = vadd.f32 %v648, %v1670
    %v1675 = vadd.f32 %v650, %v1671
    %v1676 = vxor.u32 %v1674, 2147483648
    %v1677 = vxor.u32 %v1675, 2147483648
    %v1678 = vmul.f32 %v1676, 1.442695
    %v1679 = vpow.pop %v1678
    %v1680 = vmul.f32 %v1677, 1.442695
    %v1681 = vpow.pop %v1680
    %v1682 = vadd.f32 %v1679, 1.0
    %v1683 = vadd.f32 %v1681, 1.0
    %v1684 = vrcp.pop %v1682
    %v1685 = vmul.f32 1.0, %v1684
    %v1686 = vrcp.pop %v1683
    %v1687 = vmul.f32 1.0, %v1686
    %v1688 = vtanh.pop %v1675
    %v1690 = vrot.slane %v1586, 6
    %v1692 = vmul.f32 %v1685, %v1690
    %1694 = vrot.lane.b32.xlu0 %v1688, 64
    %v1695 = vpop.permute.xlu0 %1694
    %v1697 = vmul.f32 %v1685, %v1695
    %1699 = vrot.lane.b32.xlu0 %v1697, 64
    %v1700 = vpop.permute.xlu0 %1699
    %v1702 = vadd.f32 %v1692, %v1700
    %v1703 = vtanh.pop %v1702
    %1705 = vrot.lane.b32.xlu0 %v1703, 64
    %v1706 = vpop.permute.xlu0 %1705
    %v1708 = vmul.f32 %v1687, %v1706
    %v1710 = vrot.slane %v1708, 4
    %v1711 = vsel %vm467, %v1710, 0
    %1713 = vmatprep.subr.mxu0 %v1353
    %1714 = vmatpush1.msra.mxu0 %v1352
    %1715 = vmatprep.subr.mxu0 %v1355
    %1716 = vmatpush1.msra.mxu0 %v1354
    %1717 = vmatprep.subr.mxu0 %v1357
    %1718 = vmatpush1.msra.mxu0 %v1356
    %1719 = vmatprep.subr.mxu0 %v1359
    %1720 = vmatpush1.msra.mxu0 %v1358
    %1721 = vmatprep.subr.mxu0 %v1361
    %1722 = vmatpush1.msra.mxu0 %v1360
    %1723 = vmatprep.subr.mxu0 %v1363
    %1724 = vmatpush1.msra.mxu0 %v1362
    %1725 = vmatprep.subr.mxu0 %v1365
    %1726 = vmatpush1.msra.mxu0 %v1364
    %1727 = vmatprep.subr.mxu0 %v1367
    %1728 = vmatpush1.msra.mxu0 %v1366
    %1729 = vmatprep.subr.mxu0 0.0
    %1730 = vmatpush1.msra.mxu0 0.0
    %1731 = vmatprep.subr.mxu0 0.0
    %1732 = vmatpush1.msra.mxu0 0.0
    %1733 = vmatprep.subr.mxu0 0.0
    %1734 = vmatpush1.msra.mxu0 0.0
    %1735 = vmatprep.subr.mxu0 0.0
    %1736 = vmatpush1.msra.mxu0 0.0
    %1737 = vmatprep.subr.mxu0 0.0
    %1738 = vmatpush1.msra.mxu0 0.0
    %1739 = vmatprep.subr.mxu0 0.0
    %1740 = vmatpush1.msra.mxu0 0.0
    %1741 = vmatprep.subr.mxu0 0.0
    %1742 = vmatpush1.msra.mxu0 0.0
    %1743 = vmatprep.subr.mxu0 0.0
    %1744 = vmatpush1.msra.mxu0 0.0
    %1745 = vmatprep.subr.mxu0 0.0
    %1746 = vmatpush1.msra.mxu0 0.0
    %1747 = vmatprep.subr.mxu0 0.0
    %1748 = vmatpush1.msra.mxu0 0.0
    %1749 = vmatprep.subr.mxu0 0.0
    %1750 = vmatpush1.msra.mxu0 0.0
    %1751 = vmatprep.subr.mxu0 0.0
    %1752 = vmatpush1.msra.mxu0 0.0
    %1753 = vmatprep.subr.mxu0 0.0
    %1754 = vmatpush1.msra.mxu0 0.0
    %1755 = vmatprep.subr.mxu0 0.0
    %1756 = vmatpush1.msra.mxu0 0.0
    %1757 = vmatprep.subr.mxu0 0.0
    %1758 = vmatpush1.msra.mxu0 0.0
    %1759 = vmatprep.subr.mxu0 0.0
    %1760 = vmatpush1.msra.mxu0 0.0
    %1761 = vmatprep.subr.mxu0 0.0
    %1762 = vmatpush1.msra.mxu0 0.0
    %1763 = vmatprep.subr.mxu0 0.0
    %1764 = vmatpush1.msra.mxu0 0.0
    %1765 = vmatprep.subr.mxu0 0.0
    %1766 = vmatpush1.msra.mxu0 0.0
    %1767 = vmatprep.subr.mxu0 0.0
    %1768 = vmatpush1.msra.mxu0 0.0
    %1769 = vmatprep.subr.mxu0 0.0
    %1770 = vmatpush1.msra.mxu0 0.0
    %1771 = vmatprep.subr.mxu0 0.0
    %1772 = vmatpush1.msra.mxu0 0.0
    %1773 = vmatprep.subr.mxu0 0.0
    %1774 = vmatpush1.msra.mxu0 0.0
    %1775 = vmatprep.subr.mxu0 0.0
    %1776 = vmatpush1.msra.mxu0 0.0
    %1777 = vmatprep.mubr.f32.mxu0 0.0
    %1778 = vmatmul.mubr.f32.gmra.mrb[0].mxu0 %v1711
    %v1779 = vpop.f32.mrb[0].mxu0
    %v1780 = vadd.f32 0.0, %v1779
    %v1781 = vpop.f32.mrb[0].mxu0
    %v1782 = vadd.f32 0.0, %v1781
    %1783 = vdwg.mxu0
    %v1786 = vrot.slane %v1780, 2
    %v1787 = vrot.slane %v1782, 2
    %v1790 = vadd.f32 %v648, %v1786
    %v1791 = vadd.f32 %v650, %v1787
    %v1792 = vxor.u32 %v1790, 2147483648
    %v1793 = vxor.u32 %v1791, 2147483648
    %v1794 = vmul.f32 %v1792, 1.442695
    %v1795 = vpow.pop %v1794
    %v1796 = vmul.f32 %v1793, 1.442695
    %v1797 = vpow.pop %v1796
    %v1798 = vadd.f32 %v1795, 1.0
    %v1799 = vadd.f32 %v1797, 1.0
    %v1800 = vrcp.pop %v1798
    %v1801 = vmul.f32 1.0, %v1800
    %v1802 = vrcp.pop %v1799
    %v1803 = vmul.f32 1.0, %v1802
    %v1804 = vtanh.pop %v1791
    %v1806 = vrot.slane %v1702, 6
    %v1808 = vmul.f32 %v1801, %v1806
    %1810 = vrot.lane.b32.xlu0 %v1804, 64
    %v1811 = vpop.permute.xlu0 %1810
    %v1813 = vmul.f32 %v1801, %v1811
    %1815 = vrot.lane.b32.xlu0 %v1813, 64
    %v1816 = vpop.permute.xlu0 %1815
    %v1818 = vadd.f32 %v1808, %v1816
    %v1819 = vtanh.pop %v1818
    %1821 = vrot.lane.b32.xlu0 %v1819, 64
    %v1822 = vpop.permute.xlu0 %1821
    %v1824 = vmul.f32 %v1803, %v1822
    %v1826 = vrot.slane %v1824, 6
    %v1827 = vsel %vm467, %v1826, 0
    %1829 = vmatprep.subr.mxu0 %v1353
    %1830 = vmatpush1.msra.mxu0 %v1352
    %1831 = vmatprep.subr.mxu0 %v1355
    %1832 = vmatpush1.msra.mxu0 %v1354
    %1833 = vmatprep.subr.mxu0 %v1357
    %1834 = vmatpush1.msra.mxu0 %v1356
    %1835 = vmatprep.subr.mxu0 %v1359
    %1836 = vmatpush1.msra.mxu0 %v1358
    %1837 = vmatprep.subr.mxu0 %v1361
    %1838 = vmatpush1.msra.mxu0 %v1360
    %1839 = vmatprep.subr.mxu0 %v1363
    %1840 = vmatpush1.msra.mxu0 %v1362
    %1841 = vmatprep.subr.mxu0 %v1365
    %1842 = vmatpush1.msra.mxu0 %v1364
    %1843 = vmatprep.subr.mxu0 %v1367
    %1844 = vmatpush1.msra.mxu0 %v1366
    %1845 = vmatprep.subr.mxu0 0.0
    %1846 = vmatpush1.msra.mxu0 0.0
    %1847 = vmatprep.subr.mxu0 0.0
    %1848 = vmatpush1.msra.mxu0 0.0
    %1849 = vmatprep.subr.mxu0 0.0
    %1850 = vmatpush1.msra.mxu0 0.0
    %1851 = vmatprep.subr.mxu0 0.0
    %1852 = vmatpush1.msra.mxu0 0.0
    %1853 = vmatprep.subr.mxu0 0.0
    %1854 = vmatpush1.msra.mxu0 0.0
    %1855 = vmatprep.subr.mxu0 0.0
    %1856 = vmatpush1.msra.mxu0 0.0
    %1857 = vmatprep.subr.mxu0 0.0
    %1858 = vmatpush1.msra.mxu0 0.0
    %1859 = vmatprep.subr.mxu0 0.0
    %1860 = vmatpush1.msra.mxu0 0.0
    %1861 = vmatprep.subr.mxu0 0.0
    %1862 = vmatpush1.msra.mxu0 0.0
    %1863 = vmatprep.subr.mxu0 0.0
    %1864 = vmatpush1.msra.mxu0 0.0
    %1865 = vmatprep.subr.mxu0 0.0
    %1866 = vmatpush1.msra.mxu0 0.0
    %1867 = vmatprep.subr.mxu0 0.0
    %1868 = vmatpush1.msra.mxu0 0.0
    %1869 = vmatprep.subr.mxu0 0.0
    %1870 = vmatpush1.msra.mxu0 0.0
    %1871 = vmatprep.subr.mxu0 0.0
    %1872 = vmatpush1.msra.mxu0 0.0
    %1873 = vmatprep.subr.mxu0 0.0
    %1874 = vmatpush1.msra.mxu0 0.0
    %1875 = vmatprep.subr.mxu0 0.0
    %1876 = vmatpush1.msra.mxu0 0.0
    %1877 = vmatprep.subr.mxu0 0.0
    %1878 = vmatpush1.msra.mxu0 0.0
    %1879 = vmatprep.subr.mxu0 0.0
    %1880 = vmatpush1.msra.mxu0 0.0
    %1881 = vmatprep.subr.mxu0 0.0
    %1882 = vmatpush1.msra.mxu0 0.0
    %1883 = vmatprep.subr.mxu0 0.0
    %1884 = vmatpush1.msra.mxu0 0.0
    %1885 = vmatprep.subr.mxu0 0.0
    %1886 = vmatpush1.msra.mxu0 0.0
    %1887 = vmatprep.subr.mxu0 0.0
    %1888 = vmatpush1.msra.mxu0 0.0
    %1889 = vmatprep.subr.mxu0 0.0
    %1890 = vmatpush1.msra.mxu0 0.0
    %1891 = vmatprep.subr.mxu0 0.0
    %1892 = vmatpush1.msra.mxu0 0.0
    %1893 = vmatprep.mubr.f32.mxu0 0.0
    %1894 = vmatmul.mubr.f32.gmra.mrb[0].mxu0 %v1827
    %v1895 = vpop.f32.mrb[0].mxu0
    %v1896 = vadd.f32 0.0, %v1895
    %v1897 = vpop.f32.mrb[0].mxu0
    %v1898 = vadd.f32 0.0, %v1897
    %1899 = vdwg.mxu0
    %v1900 = vadd.f32 %v654, %v1896
    %v1901 = vadd.f32 %v656, %v1898
    %v1902 = vxor.u32 %v1900, 2147483648
    %v1903 = vxor.u32 %v1901, 2147483648
    %v1904 = vmul.f32 %v1902, 1.442695
    %v1905 = vpow.pop %v1904
    %v1906 = vmul.f32 %v1903, 1.442695
    %v1907 = vpow.pop %v1906
    %v1908 = vadd.f32 %v1905, 1.0
    %v1909 = vadd.f32 %v1907, 1.0
    %v1910 = vrcp.pop %v1908
    %v1911 = vmul.f32 1.0, %v1910
    %v1912 = vrcp.pop %v1909
    %v1913 = vmul.f32 1.0, %v1912
    %v1914 = vtanh.pop %v1901
    %v1916 = vrot.slane %v1818, 6
    %v1918 = vmul.f32 %v1911, %v1916
    %1920 = vrot.lane.b32.xlu0 %v1914, 64
    %v1921 = vpop.permute.xlu0 %1920
    %v1923 = vmul.f32 %v1911, %v1921
    %1925 = vrot.lane.b32.xlu0 %v1923, 64
    %v1926 = vpop.permute.xlu0 %1925
    %v1928 = vadd.f32 %v1918, %v1926
    %v1929 = vtanh.pop %v1928
    %1931 = vrot.lane.b32.xlu0 %v1929, 64
    %v1932 = vpop.permute.xlu0 %1931
    %v1934 = vmul.f32 %v1913, %v1932
    %v1936 = vsel %vm467, %v1934, 0
    %1938 = vmatprep.subr.mxu0 %v1353
    %1939 = vmatpush1.msra.mxu0 %v1352
    %1940 = vmatprep.subr.mxu0 %v1355
    %1941 = vmatpush1.msra.mxu0 %v1354
    %1942 = vmatprep.subr.mxu0 %v1357
    %1943 = vmatpush1.msra.mxu0 %v1356
    %1944 = vmatprep.subr.mxu0 %v1359
    %1945 = vmatpush1.msra.mxu0 %v1358
    %1946 = vmatprep.subr.mxu0 %v1361
    %1947 = vmatpush1.msra.mxu0 %v1360
    %1948 = vmatprep.subr.mxu0 %v1363
    %1949 = vmatpush1.msra.mxu0 %v1362
    %1950 = vmatprep.subr.mxu0 %v1365
    %1951 = vmatpush1.msra.mxu0 %v1364
    %1952 = vmatprep.subr.mxu0 %v1367
    %1953 = vmatpush1.msra.mxu0 %v1366
    %1954 = vmatprep.subr.mxu0 0.0
    %1955 = vmatpush1.msra.mxu0 0.0
    %1956 = vmatprep.subr.mxu0 0.0
    %1957 = vmatpush1.msra.mxu0 0.0
    %1958 = vmatprep.subr.mxu0 0.0
    %1959 = vmatpush1.msra.mxu0 0.0
    %1960 = vmatprep.subr.mxu0 0.0
    %1961 = vmatpush1.msra.mxu0 0.0
    %1962 = vmatprep.subr.mxu0 0.0
    %1963 = vmatpush1.msra.mxu0 0.0
    %1964 = vmatprep.subr.mxu0 0.0
    %1965 = vmatpush1.msra.mxu0 0.0
    %1966 = vmatprep.subr.mxu0 0.0
    %1967 = vmatpush1.msra.mxu0 0.0
    %1968 = vmatprep.subr.mxu0 0.0
    %1969 = vmatpush1.msra.mxu0 0.0
    %1970 = vmatprep.subr.mxu0 0.0
    %1971 = vmatpush1.msra.mxu0 0.0
    %1972 = vmatprep.subr.mxu0 0.0
    %1973 = vmatpush1.msra.mxu0 0.0
    %1974 = vmatprep.subr.mxu0 0.0
    %1975 = vmatpush1.msra.mxu0 0.0
    %1976 = vmatprep.subr.mxu0 0.0
    %1977 = vmatpush1.msra.mxu0 0.0
    %1978 = vmatprep.subr.mxu0 0.0
    %1979 = vmatpush1.msra.mxu0 0.0
    %1980 = vmatprep.subr.mxu0 0.0
    %1981 = vmatpush1.msra.mxu0 0.0
    %1982 = vmatprep.subr.mxu0 0.0
    %1983 = vmatpush1.msra.mxu0 0.0
    %1984 = vmatprep.subr.mxu0 0.0
    %1985 = vmatpush1.msra.mxu0 0.0
    %1986 = vmatprep.subr.mxu0 0.0
    %1987 = vmatpush1.msra.mxu0 0.0
    %1988 = vmatprep.subr.mxu0 0.0
    %1989 = vmatpush1.msra.mxu0 0.0
    %1990 = vmatprep.subr.mxu0 0.0
    %1991 = vmatpush1.msra.mxu0 0.0
    %1992 = vmatprep.subr.mxu0 0.0
    %1993 = vmatpush1.msra.mxu0 0.0
    %1994 = vmatprep.subr.mxu0 0.0
    %1995 = vmatpush1.msra.mxu0 0.0
    %1996 = vmatprep.subr.mxu0 0.0
    %1997 = vmatpush1.msra.mxu0 0.0
    %1998 = vmatprep.subr.mxu0 0.0
    %1999 = vmatpush1.msra.mxu0 0.0
    %2000 = vmatprep.subr.mxu0 0.0
    %2001 = vmatpush1.msra.mxu0 0.0
    %2002 = vmatprep.mubr.f32.mxu0 0.0
    %2003 = vmatmul.mubr.f32.gmra.mrb[0].mxu0 %v1936
    %v2004 = vpop.f32.mrb[0].mxu0
    %v2005 = vadd.f32 0.0, %v2004
    %v2006 = vpop.f32.mrb[0].mxu0
    %v2007 = vadd.f32 0.0, %v2006
    %2008 = vdwg.mxu0
    %v2011 = vrot.slane %v2005, 6
    %v2012 = vrot.slane %v2007, 6
    %v2015 = vadd.f32 %v654, %v2011
    %v2016 = vadd.f32 %v656, %v2012
    %v2017 = vxor.u32 %v2015, 2147483648
    %v2018 = vxor.u32 %v2016, 2147483648
    %v2019 = vmul.f32 %v2017, 1.442695
    %v2020 = vpow.pop %v2019
    %v2021 = vmul.f32 %v2018, 1.442695
    %v2022 = vpow.pop %v2021
    %v2023 = vadd.f32 %v2020, 1.0
    %v2024 = vadd.f32 %v2022, 1.0
    %v2025 = vrcp.pop %v2023
    %v2026 = vmul.f32 1.0, %v2025
    %v2027 = vrcp.pop %v2024
    %v2028 = vmul.f32 1.0, %v2027
    %v2029 = vtanh.pop %v2016
    %v2031 = vrot.slane %v1928, 6
    %v2033 = vmul.f32 %v2026, %v2031
    %2035 = vrot.lane.b32.xlu0 %v2029, 64
    %v2036 = vpop.permute.xlu0 %2035
    %v2038 = vmul.f32 %v2026, %v2036
    %2040 = vrot.lane.b32.xlu0 %v2038, 64
    %v2041 = vpop.permute.xlu0 %2040
    %v2043 = vadd.f32 %v2033, %v2041
    %v2044 = vtanh.pop %v2043
    %2046 = vrot.lane.b32.xlu0 %v2044, 64
    %v2047 = vpop.permute.xlu0 %2046
    %v2049 = vmul.f32 %v2028, %v2047
    %v2051 = vrot.slane %v2049, 2
    %v2052 = vsel %vm467, %v2051, 0
    %2054 = vmatprep.subr.mxu0 %v1353
    %2055 = vmatpush1.msra.mxu0 %v1352
    %2056 = vmatprep.subr.mxu0 %v1355
    %2057 = vmatpush1.msra.mxu0 %v1354
    %2058 = vmatprep.subr.mxu0 %v1357
    %2059 = vmatpush1.msra.mxu0 %v1356
    %2060 = vmatprep.subr.mxu0 %v1359
    %2061 = vmatpush1.msra.mxu0 %v1358
    %2062 = vmatprep.subr.mxu0 %v1361
    %2063 = vmatpush1.msra.mxu0 %v1360
    %2064 = vmatprep.subr.mxu0 %v1363
    %2065 = vmatpush1.msra.mxu0 %v1362
    %2066 = vmatprep.subr.mxu0 %v1365
    %2067 = vmatpush1.msra.mxu0 %v1364
    %2068 = vmatprep.subr.mxu0 %v1367
    %2069 = vmatpush1.msra.mxu0 %v1366
    %2070 = vmatprep.subr.mxu0 0.0
    %2071 = vmatpush1.msra.mxu0 0.0
    %2072 = vmatprep.subr.mxu0 0.0
    %2073 = vmatpush1.msra.mxu0 0.0
    %2074 = vmatprep.subr.mxu0 0.0
    %2075 = vmatpush1.msra.mxu0 0.0
    %2076 = vmatprep.subr.mxu0 0.0
    %2077 = vmatpush1.msra.mxu0 0.0
    %2078 = vmatprep.subr.mxu0 0.0
    %2079 = vmatpush1.msra.mxu0 0.0
    %2080 = vmatprep.subr.mxu0 0.0
    %2081 = vmatpush1.msra.mxu0 0.0
    %2082 = vmatprep.subr.mxu0 0.0
    %2083 = vmatpush1.msra.mxu0 0.0
    %2084 = vmatprep.subr.mxu0 0.0
    %2085 = vmatpush1.msra.mxu0 0.0
    %2086 = vmatprep.subr.mxu0 0.0
    %2087 = vmatpush1.msra.mxu0 0.0
    %2088 = vmatprep.subr.mxu0 0.0
    %2089 = vmatpush1.msra.mxu0 0.0
    %2090 = vmatprep.subr.mxu0 0.0
    %2091 = vmatpush1.msra.mxu0 0.0
    %2092 = vmatprep.subr.mxu0 0.0
    %2093 = vmatpush1.msra.mxu0 0.0
    %2094 = vmatprep.subr.mxu0 0.0
    %2095 = vmatpush1.msra.mxu0 0.0
    %2096 = vmatprep.subr.mxu0 0.0
    %2097 = vmatpush1.msra.mxu0 0.0
    %2098 = vmatprep.subr.mxu0 0.0
    %2099 = vmatpush1.msra.mxu0 0.0
    %2100 = vmatprep.subr.mxu0 0.0
    %2101 = vmatpush1.msra.mxu0 0.0
    %2102 = vmatprep.subr.mxu0 0.0
    %2103 = vmatpush1.msra.mxu0 0.0
    %2104 = vmatprep.subr.mxu0 0.0
    %2105 = vmatpush1.msra.mxu0 0.0
    %2106 = vmatprep.subr.mxu0 0.0
    %2107 = vmatpush1.msra.mxu0 0.0
    %2108 = vmatprep.subr.mxu0 0.0
    %2109 = vmatpush1.msra.mxu0 0.0
    %2110 = vmatprep.subr.mxu0 0.0
    %2111 = vmatpush1.msra.mxu0 0.0
    %2112 = vmatprep.subr.mxu0 0.0
    %2113 = vmatpush1.msra.mxu0 0.0
    %2114 = vmatprep.subr.mxu0 0.0
    %2115 = vmatpush1.msra.mxu0 0.0
    %2116 = vmatprep.subr.mxu0 0.0
    %2117 = vmatpush1.msra.mxu0 0.0
    %2118 = vmatprep.mubr.f32.mxu0 0.0
    %2119 = vmatmul.mubr.f32.gmra.mrb[0].mxu0 %v2052
    %v2120 = vpop.f32.mrb[0].mxu0
    %v2121 = vadd.f32 0.0, %v2120
    %v2122 = vpop.f32.mrb[0].mxu0
    %v2123 = vadd.f32 0.0, %v2122
    %2124 = vdwg.mxu0
    %v2127 = vrot.slane %v2121, 4
    %v2128 = vrot.slane %v2123, 4
    %v2131 = vadd.f32 %v654, %v2127
    %v2132 = vadd.f32 %v656, %v2128
    %v2133 = vxor.u32 %v2131, 2147483648
    %v2134 = vxor.u32 %v2132, 2147483648
    %v2135 = vmul.f32 %v2133, 1.442695
    %v2136 = vpow.pop %v2135
    %v2137 = vmul.f32 %v2134, 1.442695
    %v2138 = vpow.pop %v2137
    %v2139 = vadd.f32 %v2136, 1.0
    %v2140 = vadd.f32 %v2138, 1.0
    %v2141 = vrcp.pop %v2139
    %v2142 = vmul.f32 1.0, %v2141
    %v2143 = vrcp.pop %v2140
    %v2144 = vmul.f32 1.0, %v2143
    %v2145 = vtanh.pop %v2132
    %v2147 = vrot.slane %v2043, 6
    %v2149 = vmul.f32 %v2142, %v2147
    %2151 = vrot.lane.b32.xlu0 %v2145, 64
    %v2152 = vpop.permute.xlu0 %2151
    %v2154 = vmul.f32 %v2142, %v2152
    %2156 = vrot.lane.b32.xlu0 %v2154, 64
    %v2157 = vpop.permute.xlu0 %2156
    %v2159 = vadd.f32 %v2149, %v2157
    %v2160 = vtanh.pop %v2159
    %2162 = vrot.lane.b32.xlu0 %v2160, 64
    %v2163 = vpop.permute.xlu0 %2162
    %v2165 = vmul.f32 %v2144, %v2163
    %vm2166 = vcmask 1041408
    %v2167 = vsel %vm2166, %v1477, %v1592
    %vm2168 = vcmask 1043456
    %v2169 = vsel %vm2168, %v2167, %v1708
    %vm2170 = vcmask 1045504
    %v2171 = vsel %vm2170, %v2169, %v1824
    %v2172 = vsel %vm2166, %v1934, %v2049
    %v2173 = vsel %vm2168, %v2172, %v2165
    %v2174 = vld [vmem:[#allocation19] sm:$0xff]
    %v2175 = vld [vmem:[#allocation19 + $0x8] sm:$0xff]
    %v2176 = vld [vmem:[#allocation19 + $0x10] sm:$0xff]
    %v2177 = vld [vmem:[#allocation19 + $0x18] sm:$0xff]
    %v2178 = vld [vmem:[#allocation19 + $0x20] sm:$0xff]
    %v2179 = vld [vmem:[#allocation19 + $0x28] sm:$0xff]
    %v2180 = vld [vmem:[#allocation19 + $0x30] sm:$0xff]
    %v2181 = vld [vmem:[#allocation19 + $0x38] sm:$0xff]
    %v2182 = vld [vmem:[#allocation21] sm:$0x1]
    %v2184 = vlaneseq
    %v2185 = vshrl.u32 %v2184, 7
    %v2186 = vsub.s32 0, %v2185
    %v2187 = vrot.slane %v2182, %v2186
    %v2190 = vsel %vm467, %v2171, 0
    %v2193 = vsel %vm467, %v2173, 0
    %2195 = vmatprep.subr.mxu0 0.0
    %2196 = vmatpush1.msra.mxu0 %v2174
    %2197 = vmatprep.subr.mxu0 0.0
    %2198 = vmatpush1.msra.mxu0 %v2175
    %2199 = vmatprep.subr.mxu0 0.0
    %2200 = vmatpush1.msra.mxu0 %v2176
    %2201 = vmatprep.subr.mxu0 0.0
    %2202 = vmatpush1.msra.mxu0 %v2177
    %2203 = vmatprep.subr.mxu0 0.0
    %2204 = vmatpush1.msra.mxu0 %v2178
    %2205 = vmatprep.subr.mxu0 0.0
    %2206 = vmatpush1.msra.mxu0 %v2179
    %2207 = vmatprep.subr.mxu0 0.0
    %2208 = vmatpush1.msra.mxu0 %v2180
    %2209 = vmatprep.subr.mxu0 0.0
    %2210 = vmatpush1.msra.mxu0 %v2181
    %2211 = vmatprep.subr.mxu0 0.0
    %2212 = vmatpush1.msra.mxu0 0.0
    %2213 = vmatprep.subr.mxu0 0.0
    %2214 = vmatpush1.msra.mxu0 0.0
    %2215 = vmatprep.subr.mxu0 0.0
    %2216 = vmatpush1.msra.mxu0 0.0
    %2217 = vmatprep.subr.mxu0 0.0
    %2218 = vmatpush1.msra.mxu0 0.0
    %2219 = vmatprep.subr.mxu0 0.0
    %2220 = vmatpush1.msra.mxu0 0.0
    %2221 = vmatprep.subr.mxu0 0.0
    %2222 = vmatpush1.msra.mxu0 0.0
    %2223 = vmatprep.subr.mxu0 0.0
    %2224 = vmatpush1.msra.mxu0 0.0
    %2225 = vmatprep.subr.mxu0 0.0
    %2226 = vmatpush1.msra.mxu0 0.0
    %2227 = vmatprep.subr.mxu0 0.0
    %2228 = vmatpush1.msra.mxu0 0.0
    %2229 = vmatprep.subr.mxu0 0.0
    %2230 = vmatpush1.msra.mxu0 0.0
    %2231 = vmatprep.subr.mxu0 0.0
    %2232 = vmatpush1.msra.mxu0 0.0
    %2233 = vmatprep.subr.mxu0 0.0
    %2234 = vmatpush1.msra.mxu0 0.0
    %2235 = vmatprep.subr.mxu0 0.0
    %2236 = vmatpush1.msra.mxu0 0.0
    %2237 = vmatprep.subr.mxu0 0.0
    %2238 = vmatpush1.msra.mxu0 0.0
    %2239 = vmatprep.subr.mxu0 0.0
    %2240 = vmatpush1.msra.mxu0 0.0
    %2241 = vmatprep.subr.mxu0 0.0
    %2242 = vmatpush1.msra.mxu0 0.0
    %2243 = vmatprep.subr.mxu0 0.0
    %2244 = vmatpush1.msra.mxu0 0.0
    %2245 = vmatprep.subr.mxu0 0.0
    %2246 = vmatpush1.msra.mxu0 0.0
    %2247 = vmatprep.subr.mxu0 0.0
    %2248 = vmatpush1.msra.mxu0 0.0
    %2249 = vmatprep.subr.mxu0 0.0
    %2250 = vmatpush1.msra.mxu0 0.0
    %2251 = vmatprep.subr.mxu0 0.0
    %2252 = vmatpush1.msra.mxu0 0.0
    %2253 = vmatprep.subr.mxu0 0.0
    %2254 = vmatpush1.msra.mxu0 0.0
    %2255 = vmatprep.subr.mxu0 0.0
    %2256 = vmatpush1.msra.mxu0 0.0
    %2257 = vmatprep.subr.mxu0 0.0
    %2258 = vmatpush1.msra.mxu0 0.0
    %2259 = vmatprep.mubr.f32.mxu0 0.0
    %2260 = vmatmul.mubr.f32.gmra.mrb[0].mxu0 %v2190
    %v2261 = vpop.f32.mrb[0].mxu0
    %v2262 = vadd.f32 %v2187, %v2261
    %v2263 = vpop.f32.mrb[0].mxu0
    %2264 = vmatprep.mubr.f32.mxu0 0.0
    %2265 = vmatmul.mubr.f32.gmra.mrb[0].mxu0 %v2193
    %v2266 = vpop.f32.mrb[0].mxu0
    %v2267 = vadd.f32 %v2187, %v2266
    %v2268 = vpop.f32.mrb[0].mxu0
    %2269 = vdwg.mxu0
    %s2270 = scalar_lea.vmem %s12, 2
    %2271 = vst [vmem:[%s2270] sm:$0x3] %v2262
    %s2272 = scalar_lea.vmem %s12, 4
    %2273 = vst [vmem:[%s2272 - $0x2] sm:$0xc] %v2262
    %s2274 = scalar_lea.vmem %s12, 6
    %2275 = vst [vmem:[%s2274 - $0x4] sm:$0x30] %v2262
    %s2276 = scalar_lea.vmem %s12, 8
    %2277 = vst [vmem:[%s2276 - $0x6] sm:$0xc0] %v2262
    %s2278 = scalar_lea.vmem %s12, 10
    %2279 = vst [vmem:[%s2278] sm:$0x3] %v2267
    %s2280 = scalar_lea.vmem %s12, 12
    %2281 = vst [vmem:[%s2280 - $0x2] sm:$0xc] %v2267
    %s2282 = scalar_lea.vmem %s12, 14
    %2283 = vst [vmem:[%s2282 - $0x4] sm:$0x30] %v2267
    // Predicated region
    $region94: #{seq2seq_forward.1} parent=1 // pred_check
      _
    $region95: #{seq2seq_forward.1} parent=1 // pred_check_branch
      %2285 = sbr.rel (0) target = $region97
    $region96: #{seq2seq_forward.1} parent=1 // pred_region
      _
    $region97: #{seq2seq_forward.1} parent=1 // pred_fallthru
      _
    // Predicated region
    $region98: #{seq2seq_forward.1} parent=1 // pred_check
      _
    $region99: #{seq2seq_forward.1} parent=1 // pred_check_branch
      %2287 = sbr.rel (0) target = $region101
    $region100: #{seq2seq_forward.1} parent=1 // pred_region
      _
    $region101: #{seq2seq_forward.1} parent=1 // pred_fallthru
      _
    %2288 = vsyncpa [#allocation5], 1
    %2289 = vsyncpa [#allocation11], 1
    %2290 = vsyncpa [#allocation14], 1
    %2291 = vsyncpa [#allocation17], 1
    %2292 = vsyncpa [#allocation20], 1
    %2293 = vsyncpa [#allocation6], 1
    %2294 = vsyncpa [#allocation7], 1

</llo_original>
